<compile_context>
chip_gen: v5e
topology: v5e:2x2
jax: 0.10.0
libtpu: 0.0.40
codegen_flags: <defaults>
</compile_context>

<pallas_src>
import functools

import jax
import jax.numpy as jnp
from jax.experimental import pallas as pl
from jax.experimental.pallas import tpu as pltpu


def _round_up(x: int, m: int) -> int:
    return ((x + m - 1) // m) * m


# ----------------------------------------------------------------------------
# Pallas kernel
# ----------------------------------------------------------------------------
def _make_rnn_kernel(n_layer: int, h_pad: int, t_chunk: int):
    Hp = h_pad

    def kernel(x_ref, *refs):
        # refs layout:
        #   per layer l: w_ih_T (in_l, 4Hp) bf16, w_hh_T (Hp, 4Hp) bf16,
        #                bias (1, 4Hp) f32
        #   then: w_cls_T (Hp, Np) bf16, b_cls (1, Np) f32
        #   then: out_ref (Bp, Np)
        #   scratch: h_scr (n_layer, Bp, Hp), c_scr (n_layer, Bp, Hp),
        #            seq_scr (t_chunk, Bp, Hp)   (all f32)
        n_w = 3 * n_layer + 2
        w_refs = refs[:n_w]
        out_ref = refs[n_w]
        h_scr = refs[n_w + 1]
        c_scr = refs[n_w + 2]
        seq_scr = refs[n_w + 3]

        chunk = pl.program_id(0)

        @pl.when(chunk == 0)
        def _init():
            h_scr[...] = jnp.zeros_like(h_scr)
            c_scr[...] = jnp.zeros_like(c_scr)

        for l in range(n_layer):
            w_ih = w_refs[3 * l][...]        # (in_l, 4Hp) bf16
            w_hh = w_refs[3 * l + 1][...]    # (Hp, 4Hp)  bf16
            bias = w_refs[3 * l + 2][...]    # (1, 4Hp)   f32

            if l == 0:
                inp_seq = x_ref[...]         # (t_chunk, Bp, in_dim)
            else:
                inp_seq = seq_scr[...]       # (t_chunk, Bp, Hp) from layer l-1

            tc, bp, in_l = inp_seq.shape
            flat = inp_seq.reshape(tc * bp, in_l).astype(jnp.bfloat16)

            # One big MXU matmul for the whole chunk's input projections
            # (off the serialized recurrence critical path). Bias folded in
            # once per chunk per layer.
            xproj = (
                jnp.dot(flat, w_ih, preferred_element_type=jnp.float32) + bias
            ).reshape(tc, bp, 4 * Hp)

            h = h_scr[l]                     # (Bp, Hp) f32
            c = c_scr[l]                     # (Bp, Hp) f32

            # Serialized time recurrence: one small MXU matmul + gate math per
            # step. Static (unrolled) loop -- t_chunk is small and static,
            # giving the LLO scheduler full visibility.
            for t in range(t_chunk):
                gates = xproj[t] + jnp.dot(
                    h.astype(jnp.bfloat16), w_hh,
                    preferred_element_type=jnp.float32)      # (Bp, 4Hp) f32

                # PyTorch gate order i, f, g, o; slices are 128-lane aligned
                # because Hp is a multiple of 128.
                i_g = jax.nn.sigmoid(gates[:, 0 * Hp:1 * Hp])
                f_g = jax.nn.sigmoid(gates[:, 1 * Hp:2 * Hp])
                g_g = jnp.tanh(gates[:, 2 * Hp:3 * Hp])
                o_g = jax.nn.sigmoid(gates[:, 3 * Hp:4 * Hp])

                c = f_g * c + i_g * g_g
                h = o_g * jnp.tanh(c)
                if l < n_layer - 1:
                    seq_scr[t] = h           # staged input for layer l+1

            h_scr[l] = h
            c_scr[l] = c

        # Fused classifier on the final hidden state of the top layer.
        # Written only on the last chunk; constant out index_map means the
        # block is resident across chunks and written back to HBM once.
        @pl.when(chunk == pl.num_programs(0) - 1)
        def _finalize():
            w_cls = w_refs[3 * n_layer][...]      # (Hp, Np) bf16
            b_cls = w_refs[3 * n_layer + 1][...]  # (1, Np)  f32
            logits = (
                jnp.dot(h_scr[n_layer - 1].astype(jnp.bfloat16), w_cls,
                        preferred_element_type=jnp.float32)
                + b_cls
            )
            out_ref[...] = logits.astype(out_ref.dtype)

    return kernel


# ----------------------------------------------------------------------------
# Wrapper: takes PyTorch-layout params, does padding / packing / bf16 cast.
# ----------------------------------------------------------------------------
def rnn_forward_pallas(x, params, *, n_layer, hidden_dim, n_class,
                       t_chunk=None, weight_dtype=jnp.bfloat16):
    """x: (B, T, in_dim) float32.  Returns (B, n_class) float32."""
    B, T, in_dim = x.shape
    H = hidden_dim
    Hp = _round_up(H, 128)           # lane-aligned gate blocks
    Bp = _round_up(max(B, 8), 8)     # sublane-aligned batch
    Np = _round_up(n_class, 128)     # lane-dense classifier output

    if t_chunk is None:
        # Largest divisor of T that is <= 64 (amortize per-grid-step overhead
        # while keeping the unrolled inner loop modest).
        t_chunk = 1
        for cand in range(1, min(T, 64) + 1):
            if T % cand == 0:
                t_chunk = cand
    assert T % t_chunk == 0

    # Pad batch with zero rows and go time-major: (T, Bp, in_dim).
    x_p = jnp.zeros((Bp, T, in_dim), x.dtype).at[:B].set(x)
    x_tm = jnp.transpose(x_p, (1, 0, 2))

    def pad_gate_w(w, rows_in, rows_pad):
        # w: (4H, rows_in) torch layout -> (rows_pad, 4*Hp) transposed layout
        # with each gate's H block zero-padded to Hp (lane-aligned slices).
        w4 = w.reshape(4, H, rows_in)
        w4 = jnp.pad(w4, ((0, 0), (0, Hp - H), (0, rows_pad - rows_in)))
        return jnp.transpose(w4, (2, 0, 1)).reshape(rows_pad, 4 * Hp)

    flat_weights = []
    for l in range(n_layer):
        in_l = in_dim if l == 0 else H
        in_l_pad = in_dim if l == 0 else Hp
        w_ih_p = pad_gate_w(params[f"w_ih_{l}"], in_l, in_l_pad)
        w_hh_p = pad_gate_w(params[f"w_hh_{l}"], H, Hp)
        b = params[f"b_ih_{l}"] + params[f"b_hh_{l}"]          # (4H,)
        b_p = jnp.pad(b.reshape(4, H), ((0, 0), (0, Hp - H))
                      ).reshape(1, 4 * Hp).astype(jnp.float32)
        flat_weights += [w_ih_p.astype(weight_dtype),
                         w_hh_p.astype(weight_dtype), b_p]

    w_cls_p = jnp.pad(params["w_cls"].T, ((0, Hp - H), (0, Np - n_class)))
    b_cls_p = jnp.pad(params["b_cls"], ((0, Np - n_class),)
                      ).reshape(1, Np).astype(jnp.float32)
    flat_weights += [w_cls_p.astype(weight_dtype), b_cls_p]

    def full_spec(arr):
        nd = arr.ndim
        return pl.BlockSpec(arr.shape, lambda c, _nd=nd: (0,) * _nd)

    in_specs = [pl.BlockSpec((t_chunk, Bp, in_dim), lambda c: (c, 0, 0))]
    in_specs += [full_spec(w) for w in flat_weights]

    grid_spec = pltpu.PrefetchScalarGridSpec(
        num_scalar_prefetch=0,
        grid=(T // t_chunk,),
        in_specs=in_specs,
        out_specs=pl.BlockSpec((Bp, Np), lambda c: (0, 0)),
        scratch_shapes=[
            pltpu.VMEM((n_layer, Bp, Hp), jnp.float32),   # h state (persists)
            pltpu.VMEM((n_layer, Bp, Hp), jnp.float32),   # c state (persists)
            pltpu.VMEM((t_chunk, Bp, Hp), jnp.float32),   # per-layer chunk seq
        ],
    )

    out = pl.pallas_call(
        _make_rnn_kernel(n_layer, Hp, t_chunk),
        out_shape=jax.ShapeDtypeStruct((Bp, Np), jnp.float32),
        grid_spec=grid_spec,
        compiler_params=pltpu.CompilerParams(
            dimension_semantics=("arbitrary",),       # recurrence: sequential
            vmem_limit_bytes=32 * 1024 * 1024,        # safe on v5e/v6e/v7x
        ),
    )(x_tm, *flat_weights)
    return out[:B, :n_class]


# ----------------------------------------------------------------------------
# Pure-JAX f32 reference (mirrors torch.nn.LSTM + nn.Linear semantics)
# ----------------------------------------------------------------------------
def rnn_forward_ref(x, params, *, n_layer, hidden_dim, n_class):
    B, T, _ = x.shape
    H = hidden_dim
    h = [jnp.zeros((B, H), jnp.float32) for _ in range(n_layer)]
    c = [jnp.zeros((B, H), jnp.float32) for _ in range(n_layer)]
    for t in range(T):
        inp = x[:, t, :]
        for l in range(n_layer):
            gates = (inp @ params[f"w_ih_{l}"].T
                     + h[l] @ params[f"w_hh_{l}"].T
                     + params[f"b_ih_{l}"] + params[f"b_hh_{l}"])
            i_g = jax.nn.sigmoid(gates[:, 0 * H:1 * H])
            f_g = jax.nn.sigmoid(gates[:, 1 * H:2 * H])
            g_g = jnp.tanh(gates[:, 2 * H:3 * H])
            o_g = jax.nn.sigmoid(gates[:, 3 * H:4 * H])
            c[l] = f_g * c[l] + i_g * g_g
            h[l] = o_g * jnp.tanh(c[l])
            inp = h[l]
    return h[-1] @ params["w_cls"].T + params["b_cls"]


# ----------------------------------------------------------------------------
# Deterministic PyTorch-style parameter construction
# ----------------------------------------------------------------------------
def init_params(key, in_dim, hidden_dim, n_layer, n_class):
    H = hidden_dim
    k = 1.0 / jnp.sqrt(H)
    params = {}
    for l in range(n_layer):
        layer_in = in_dim if l == 0 else H
        key, k1, k2, k3, k4 = jax.random.split(key, 5)
        params[f"w_ih_{l}"] = jax.random.uniform(k1, (4 * H, layer_in),
                                                 jnp.float32, -k, k)
        params[f"w_hh_{l}"] = jax.random.uniform(k2, (4 * H, H),
                                                 jnp.float32, -k, k)
        params[f"b_ih_{l}"] = jax.random.uniform(k3, (4 * H,),
                                                 jnp.float32, -k, k)
        params[f"b_hh_{l}"] = jax.random.uniform(k4, (4 * H,),
                                                 jnp.float32, -k, k)
    key, k1, k2 = jax.random.split(key, 3)
    params["w_cls"] = jax.random.uniform(k1, (n_class, H), jnp.float32, -k, k)
    params["b_cls"] = jax.random.uniform(k2, (n_class,), jnp.float32, -k, k)
    return params


if __name__ == "__main__":
    B, T = 2, 8
    in_dim, hidden_dim, n_layer, n_class = 16, 32, 2, 10

    key = jax.random.PRNGKey(0)
    key, kx = jax.random.split(key)
    x = jax.random.normal(kx, (B, T, in_dim), jnp.float32)
    params = init_params(key, in_dim, hidden_dim, n_layer, n_class)

    fwd = functools.partial(rnn_forward_pallas, n_layer=n_layer,
                            hidden_dim=hidden_dim, n_class=n_class)
    out = jax.block_until_ready(fwd(x, params))

    ref = rnn_forward_ref(x, params, n_layer=n_layer,
                          hidden_dim=hidden_dim, n_class=n_class)
    assert out.shape == (B, n_class)
    # bf16 MXU weights (f32 accumulation, f32 gate math) vs pure-f32 reference
    # -> relaxed tolerance.
    assert jnp.allclose(out, ref, atol=5e-2, rtol=5e-2), (
        f"mismatch: max abs err {jnp.max(jnp.abs(out - ref))}")

    print("KERNEL_OK")
</pallas_src>

<mosaic_0001>
module attributes {stable_mosaic.version = 11 : i64} {
  func.func @kernel(%arg0: i32, %arg1: memref<8x8x16xf32, #tpu.memory_space<vmem>>, %arg2: memref<16x512xbf16, #tpu.memory_space<vmem>>, %arg3: memref<128x512xbf16, #tpu.memory_space<vmem>>, %arg4: memref<1x512xf32, #tpu.memory_space<vmem>>, %arg5: memref<128x512xbf16, #tpu.memory_space<vmem>>, %arg6: memref<128x512xbf16, #tpu.memory_space<vmem>>, %arg7: memref<1x512xf32, #tpu.memory_space<vmem>>, %arg8: memref<128x128xbf16, #tpu.memory_space<vmem>>, %arg9: memref<1x128xf32, #tpu.memory_space<vmem>>, %arg10: memref<8x128xf32, #tpu.memory_space<vmem>>, %arg11: memref<2x8x128xf32, #tpu.memory_space<vmem>>, %arg12: memref<2x8x128xf32, #tpu.memory_space<vmem>>, %arg13: memref<8x8x128xf32, #tpu.memory_space<vmem>>) attributes {dimension_semantics = [#tpu.dimension_semantics<arbitrary>], iteration_bounds = array<i64: 1>, scalar_prefetch = 0 : i64, scratch_operands = 3 : i64, tpu.core_type = #tpu.core_type<tc>, window_params = [{transform_indices = @transform_0, window_bounds = array<i64: 8, 8, 16>}, {pipeline_mode = #tpu.pipeline_mode<synchronous>, transform_indices = @transform_1, window_bounds = array<i64: 16, 512>}, {pipeline_mode = #tpu.pipeline_mode<synchronous>, transform_indices = @transform_2, window_bounds = array<i64: 128, 512>}, {pipeline_mode = #tpu.pipeline_mode<synchronous>, transform_indices = @transform_3, window_bounds = array<i64: 1, 512>}, {pipeline_mode = #tpu.pipeline_mode<synchronous>, transform_indices = @transform_4, window_bounds = array<i64: 128, 512>}, {pipeline_mode = #tpu.pipeline_mode<synchronous>, transform_indices = @transform_5, window_bounds = array<i64: 128, 512>}, {pipeline_mode = #tpu.pipeline_mode<synchronous>, transform_indices = @transform_6, window_bounds = array<i64: 1, 512>}, {pipeline_mode = #tpu.pipeline_mode<synchronous>, transform_indices = @transform_7, window_bounds = array<i64: 128, 128>}, {pipeline_mode = #tpu.pipeline_mode<synchronous>, transform_indices = @transform_8, window_bounds = array<i64: 1, 128>}, {pipeline_mode = #tpu.pipeline_mode<synchronous>, transform_indices = @transform_9, window_bounds = array<i64: 8, 128>}]} {
    %c0_i32 = arith.constant 0 : i32
    %0 = arith.cmpi eq, %arg0, %c0_i32 : i32
    %1 = arith.extui %0 : i1 to i32
    %c0_i32_0 = arith.constant 0 : i32
    %2 = arith.cmpi ne, %1, %c0_i32_0 : i32
    scf.if %2 {
      %cst_126 = arith.constant 0.000000e+00 : f32
      %550 = vector.broadcast %cst_126 : f32 to vector<2x8x128xf32>
      %c0_127 = arith.constant 0 : index
      %c0_128 = arith.constant 0 : index
      %c0_129 = arith.constant 0 : index
      %551 = vector.load %arg11[%c0_127, %c0_128, %c0_129] : memref<2x8x128xf32, #tpu.memory_space<vmem>>, vector<2x8x128xf32>
      tpu.vector_store %arg11[%c0_127, %c0_128, %c0_129], %550 {strides = array<i32>} : memref<2x8x128xf32, #tpu.memory_space<vmem>>, vector<2x8x128xf32>,
      %cst_130 = arith.constant 0.000000e+00 : f32
      %552 = vector.broadcast %cst_130 : f32 to vector<2x8x128xf32>
      %c0_131 = arith.constant 0 : index
      %c0_132 = arith.constant 0 : index
      %c0_133 = arith.constant 0 : index
      %553 = vector.load %arg12[%c0_131, %c0_132, %c0_133] : memref<2x8x128xf32, #tpu.memory_space<vmem>>, vector<2x8x128xf32>
      tpu.vector_store %arg12[%c0_131, %c0_132, %c0_133], %552 {strides = array<i32>} : memref<2x8x128xf32, #tpu.memory_space<vmem>>, vector<2x8x128xf32>,
    } else {
    }
    %c0 = arith.constant 0 : index
    %c0_1 = arith.constant 0 : index
    %3 = vector.load %arg2[%c0, %c0_1] : memref<16x512xbf16, #tpu.memory_space<vmem>>, vector<16x512xbf16>
    %c0_2 = arith.constant 0 : index
    %c0_3 = arith.constant 0 : index
    %4 = vector.load %arg3[%c0_2, %c0_3] : memref<128x512xbf16, #tpu.memory_space<vmem>>, vector<128x512xbf16>
    %c0_4 = arith.constant 0 : index
    %c0_5 = arith.constant 0 : index
    %5 = vector.load %arg4[%c0_4, %c0_5] : memref<1x512xf32, #tpu.memory_space<vmem>>, vector<1x512xf32>
    %c0_6 = arith.constant 0 : index
    %c0_7 = arith.constant 0 : index
    %c0_8 = arith.constant 0 : index
    %6 = vector.load %arg1[%c0_6, %c0_7, %c0_8] : memref<8x8x16xf32, #tpu.memory_space<vmem>>, vector<8x8x16xf32>
    %7 = vector.shape_cast %6 : vector<8x8x16xf32> to vector<64x16xf32>
    %8 = arith.truncf %7 : vector<64x16xf32> to vector<64x16xbf16>
    %cst = arith.constant dense<0.000000e+00> : vector<64x512xf32>
    %9 = tpu.matmul %8, %3, %cst {dimension_numbers = #tpu.dot_dimension_numbers<[1], [0], [0], [1], [0, 0, 1, 1], [], []>} : vector<64x16xbf16>, vector<16x512xbf16>, vector<64x512xf32> -> vector<64x512xf32>
    %10 = vector.broadcast %5 : vector<1x512xf32> to vector<64x512xf32>
    %11 = arith.addf %9, %10 : vector<64x512xf32>
    %12 = vector.shape_cast %11 : vector<64x512xf32> to vector<8x8x512xf32>
    %c0_9 = arith.constant 0 : index
    %c0_10 = arith.constant 0 : index
    %c0_11 = arith.constant 0 : index
    %13 = vector.load %arg11[%c0_9, %c0_10, %c0_11] : memref<2x8x128xf32, #tpu.memory_space<vmem>>, vector<1x8x128xf32>
    %14 = vector.shape_cast %13 : vector<1x8x128xf32> to vector<8x128xf32>
    %c0_12 = arith.constant 0 : index
    %c0_13 = arith.constant 0 : index
    %c0_14 = arith.constant 0 : index
    %15 = vector.load %arg12[%c0_12, %c0_13, %c0_14] : memref<2x8x128xf32, #tpu.memory_space<vmem>>, vector<1x8x128xf32>
    %16 = vector.shape_cast %15 : vector<1x8x128xf32> to vector<8x128xf32>
    %17 = vector.extract_strided_slice %12 {offsets = [0, 0, 0], sizes = [1, 8, 512], strides = [1, 1, 1]} : vector<8x8x512xf32> to vector<1x8x512xf32>
    %18 = vector.shape_cast %17 : vector<1x8x512xf32> to vector<8x512xf32>
    %19 = arith.truncf %14 : vector<8x128xf32> to vector<8x128xbf16>
    %cst_15 = arith.constant dense<0.000000e+00> : vector<8x512xf32>
    %20 = tpu.matmul %19, %4, %cst_15 {dimension_numbers = #tpu.dot_dimension_numbers<[1], [0], [0], [1], [0, 0, 1, 1], [], []>} : vector<8x128xbf16>, vector<128x512xbf16>, vector<8x512xf32> -> vector<8x512xf32>
    %21 = arith.addf %18, %20 : vector<8x512xf32>
    %22 = vector.extract_strided_slice %21 {offsets = [0, 0], sizes = [8, 128], strides = [1, 1]} : vector<8x512xf32> to vector<8x128xf32>
    %23 = arith.negf %22 : vector<8x128xf32>
    %24 = math.exp %23 : vector<8x128xf32>
    %cst_16 = arith.constant 1.000000e+00 : f32
    %25 = vector.broadcast %cst_16 : f32 to vector<8x128xf32>
    %26 = arith.addf %25, %24 : vector<8x128xf32>
    %27 = arith.divf %25, %26 : vector<8x128xf32>
    %28 = vector.extract_strided_slice %21 {offsets = [0, 128], sizes = [8, 128], strides = [1, 1]} : vector<8x512xf32> to vector<8x128xf32>
    %29 = arith.negf %28 : vector<8x128xf32>
    %30 = math.exp %29 : vector<8x128xf32>
    %cst_17 = arith.constant 1.000000e+00 : f32
    %31 = vector.broadcast %cst_17 : f32 to vector<8x128xf32>
    %32 = arith.addf %31, %30 : vector<8x128xf32>
    %33 = arith.divf %31, %32 : vector<8x128xf32>
    %34 = vector.extract_strided_slice %21 {offsets = [0, 256], sizes = [8, 128], strides = [1, 1]} : vector<8x512xf32> to vector<8x128xf32>
    %35 = math.tanh %34 : vector<8x128xf32>
    %36 = vector.extract_strided_slice %21 {offsets = [0, 384], sizes = [8, 128], strides = [1, 1]} : vector<8x512xf32> to vector<8x128xf32>
    %37 = arith.negf %36 : vector<8x128xf32>
    %38 = math.exp %37 : vector<8x128xf32>
    %cst_18 = arith.constant 1.000000e+00 : f32
    %39 = vector.broadcast %cst_18 : f32 to vector<8x128xf32>
    %40 = arith.addf %39, %38 : vector<8x128xf32>
    %41 = arith.divf %39, %40 : vector<8x128xf32>
    %42 = arith.mulf %33, %16 : vector<8x128xf32>
    %43 = arith.mulf %27, %35 : vector<8x128xf32>
    %44 = arith.addf %42, %43 : vector<8x128xf32>
    %45 = math.tanh %44 : vector<8x128xf32>
    %46 = arith.mulf %41, %45 : vector<8x128xf32>
    %c0_19 = arith.constant 0 : index
    %c0_20 = arith.constant 0 : index
    %c0_21 = arith.constant 0 : index
    %47 = vector.load %arg13[%c0_19, %c0_20, %c0_21] : memref<8x8x128xf32, #tpu.memory_space<vmem>>, vector<1x8x128xf32>
    %48 = vector.shape_cast %47 : vector<1x8x128xf32> to vector<8x128xf32>
    %49 = vector.shape_cast %46 : vector<8x128xf32> to vector<1x8x128xf32>
    tpu.vector_store %arg13[%c0_19, %c0_20, %c0_21], %49 {strides = array<i32>} : memref<8x8x128xf32, #tpu.memory_space<vmem>>, vector<1x8x128xf32>,
    %50 = vector.extract_strided_slice %12 {offsets = [1, 0, 0], sizes = [1, 8, 512], strides = [1, 1, 1]} : vector<8x8x512xf32> to vector<1x8x512xf32>
    %51 = vector.shape_cast %50 : vector<1x8x512xf32> to vector<8x512xf32>
    %52 = arith.truncf %46 : vector<8x128xf32> to vector<8x128xbf16>
    %cst_22 = arith.constant dense<0.000000e+00> : vector<8x512xf32>
    %53 = tpu.matmul %52, %4, %cst_22 {dimension_numbers = #tpu.dot_dimension_numbers<[1], [0], [0], [1], [0, 0, 1, 1], [], []>} : vector<8x128xbf16>, vector<128x512xbf16>, vector<8x512xf32> -> vector<8x512xf32>
    %54 = arith.addf %51, %53 : vector<8x512xf32>
    %55 = vector.extract_strided_slice %54 {offsets = [0, 0], sizes = [8, 128], strides = [1, 1]} : vector<8x512xf32> to vector<8x128xf32>
    %56 = arith.negf %55 : vector<8x128xf32>
    %57 = math.exp %56 : vector<8x128xf32>
    %cst_23 = arith.constant 1.000000e+00 : f32
    %58 = vector.broadcast %cst_23 : f32 to vector<8x128xf32>
    %59 = arith.addf %58, %57 : vector<8x128xf32>
    %60 = arith.divf %58, %59 : vector<8x128xf32>
    %61 = vector.extract_strided_slice %54 {offsets = [0, 128], sizes = [8, 128], strides = [1, 1]} : vector<8x512xf32> to vector<8x128xf32>
    %62 = arith.negf %61 : vector<8x128xf32>
    %63 = math.exp %62 : vector<8x128xf32>
    %cst_24 = arith.constant 1.000000e+00 : f32
    %64 = vector.broadcast %cst_24 : f32 to vector<8x128xf32>
    %65 = arith.addf %64, %63 : vector<8x128xf32>
    %66 = arith.divf %64, %65 : vector<8x128xf32>
    %67 = vector.extract_strided_slice %54 {offsets = [0, 256], sizes = [8, 128], strides = [1, 1]} : vector<8x512xf32> to vector<8x128xf32>
    %68 = math.tanh %67 : vector<8x128xf32>
    %69 = vector.extract_strided_slice %54 {offsets = [0, 384], sizes = [8, 128], strides = [1, 1]} : vector<8x512xf32> to vector<8x128xf32>
    %70 = arith.negf %69 : vector<8x128xf32>
    %71 = math.exp %70 : vector<8x128xf32>
    %cst_25 = arith.constant 1.000000e+00 : f32
    %72 = vector.broadcast %cst_25 : f32 to vector<8x128xf32>
    %73 = arith.addf %72, %71 : vector<8x128xf32>
    %74 = arith.divf %72, %73 : vector<8x128xf32>
    %75 = arith.mulf %66, %44 : vector<8x128xf32>
    %76 = arith.mulf %60, %68 : vector<8x128xf32>
    %77 = arith.addf %75, %76 : vector<8x128xf32>
    %78 = math.tanh %77 : vector<8x128xf32>
    %79 = arith.mulf %74, %78 : vector<8x128xf32>
    %c1 = arith.constant 1 : index
    %c0_26 = arith.constant 0 : index
    %c0_27 = arith.constant 0 : index
    %80 = vector.load %arg13[%c1, %c0_26, %c0_27] : memref<8x8x128xf32, #tpu.memory_space<vmem>>, vector<1x8x128xf32>
    %81 = vector.shape_cast %80 : vector<1x8x128xf32> to vector<8x128xf32>
    %82 = vector.shape_cast %79 : vector<8x128xf32> to vector<1x8x128xf32>
    tpu.vector_store %arg13[%c1, %c0_26, %c0_27], %82 {strides = array<i32>} : memref<8x8x128xf32, #tpu.memory_space<vmem>>, vector<1x8x128xf32>,
    %83 = vector.extract_strided_slice %12 {offsets = [2, 0, 0], sizes = [1, 8, 512], strides = [1, 1, 1]} : vector<8x8x512xf32> to vector<1x8x512xf32>
    %84 = vector.shape_cast %83 : vector<1x8x512xf32> to vector<8x512xf32>
    %85 = arith.truncf %79 : vector<8x128xf32> to vector<8x128xbf16>
    %cst_28 = arith.constant dense<0.000000e+00> : vector<8x512xf32>
    %86 = tpu.matmul %85, %4, %cst_28 {dimension_numbers = #tpu.dot_dimension_numbers<[1], [0], [0], [1], [0, 0, 1, 1], [], []>} : vector<8x128xbf16>, vector<128x512xbf16>, vector<8x512xf32> -> vector<8x512xf32>
    %87 = arith.addf %84, %86 : vector<8x512xf32>
    %88 = vector.extract_strided_slice %87 {offsets = [0, 0], sizes = [8, 128], strides = [1, 1]} : vector<8x512xf32> to vector<8x128xf32>
    %89 = arith.negf %88 : vector<8x128xf32>
    %90 = math.exp %89 : vector<8x128xf32>
    %cst_29 = arith.constant 1.000000e+00 : f32
    %91 = vector.broadcast %cst_29 : f32 to vector<8x128xf32>
    %92 = arith.addf %91, %90 : vector<8x128xf32>
    %93 = arith.divf %91, %92 : vector<8x128xf32>
    %94 = vector.extract_strided_slice %87 {offsets = [0, 128], sizes = [8, 128], strides = [1, 1]} : vector<8x512xf32> to vector<8x128xf32>
    %95 = arith.negf %94 : vector<8x128xf32>
    %96 = math.exp %95 : vector<8x128xf32>
    %cst_30 = arith.constant 1.000000e+00 : f32
    %97 = vector.broadcast %cst_30 : f32 to vector<8x128xf32>
    %98 = arith.addf %97, %96 : vector<8x128xf32>
    %99 = arith.divf %97, %98 : vector<8x128xf32>
    %100 = vector.extract_strided_slice %87 {offsets = [0, 256], sizes = [8, 128], strides = [1, 1]} : vector<8x512xf32> to vector<8x128xf32>
    %101 = math.tanh %100 : vector<8x128xf32>
    %102 = vector.extract_strided_slice %87 {offsets = [0, 384], sizes = [8, 128], strides = [1, 1]} : vector<8x512xf32> to vector<8x128xf32>
    %103 = arith.negf %102 : vector<8x128xf32>
    %104 = math.exp %103 : vector<8x128xf32>
    %cst_31 = arith.constant 1.000000e+00 : f32
    %105 = vector.broadcast %cst_31 : f32 to vector<8x128xf32>
    %106 = arith.addf %105, %104 : vector<8x128xf32>
    %107 = arith.divf %105, %106 : vector<8x128xf32>
    %108 = arith.mulf %99, %77 : vector<8x128xf32>
    %109 = arith.mulf %93, %101 : vector<8x128xf32>
    %110 = arith.addf %108, %109 : vector<8x128xf32>
    %111 = math.tanh %110 : vector<8x128xf32>
    %112 = arith.mulf %107, %111 : vector<8x128xf32>
    %c2 = arith.constant 2 : index
    %c0_32 = arith.constant 0 : index
    %c0_33 = arith.constant 0 : index
    %113 = vector.load %arg13[%c2, %c0_32, %c0_33] : memref<8x8x128xf32, #tpu.memory_space<vmem>>, vector<1x8x128xf32>
    %114 = vector.shape_cast %113 : vector<1x8x128xf32> to vector<8x128xf32>
    %115 = vector.shape_cast %112 : vector<8x128xf32> to vector<1x8x128xf32>
    tpu.vector_store %arg13[%c2, %c0_32, %c0_33], %115 {strides = array<i32>} : memref<8x8x128xf32, #tpu.memory_space<vmem>>, vector<1x8x128xf32>,
    %116 = vector.extract_strided_slice %12 {offsets = [3, 0, 0], sizes = [1, 8, 512], strides = [1, 1, 1]} : vector<8x8x512xf32> to vector<1x8x512xf32>
    %117 = vector.shape_cast %116 : vector<1x8x512xf32> to vector<8x512xf32>
    %118 = arith.truncf %112 : vector<8x128xf32> to vector<8x128xbf16>
    %cst_34 = arith.constant dense<0.000000e+00> : vector<8x512xf32>
    %119 = tpu.matmul %118, %4, %cst_34 {dimension_numbers = #tpu.dot_dimension_numbers<[1], [0], [0], [1], [0, 0, 1, 1], [], []>} : vector<8x128xbf16>, vector<128x512xbf16>, vector<8x512xf32> -> vector<8x512xf32>
    %120 = arith.addf %117, %119 : vector<8x512xf32>
    %121 = vector.extract_strided_slice %120 {offsets = [0, 0], sizes = [8, 128], strides = [1, 1]} : vector<8x512xf32> to vector<8x128xf32>
    %122 = arith.negf %121 : vector<8x128xf32>
    %123 = math.exp %122 : vector<8x128xf32>
    %cst_35 = arith.constant 1.000000e+00 : f32
    %124 = vector.broadcast %cst_35 : f32 to vector<8x128xf32>
    %125 = arith.addf %124, %123 : vector<8x128xf32>
    %126 = arith.divf %124, %125 : vector<8x128xf32>
    %127 = vector.extract_strided_slice %120 {offsets = [0, 128], sizes = [8, 128], strides = [1, 1]} : vector<8x512xf32> to vector<8x128xf32>
    %128 = arith.negf %127 : vector<8x128xf32>
    %129 = math.exp %128 : vector<8x128xf32>
    %cst_36 = arith.constant 1.000000e+00 : f32
    %130 = vector.broadcast %cst_36 : f32 to vector<8x128xf32>
    %131 = arith.addf %130, %129 : vector<8x128xf32>
    %132 = arith.divf %130, %131 : vector<8x128xf32>
    %133 = vector.extract_strided_slice %120 {offsets = [0, 256], sizes = [8, 128], strides = [1, 1]} : vector<8x512xf32> to vector<8x128xf32>
    %134 = math.tanh %133 : vector<8x128xf32>
    %135 = vector.extract_strided_slice %120 {offsets = [0, 384], sizes = [8, 128], strides = [1, 1]} : vector<8x512xf32> to vector<8x128xf32>
    %136 = arith.negf %135 : vector<8x128xf32>
    %137 = math.exp %136 : vector<8x128xf32>
    %cst_37 = arith.constant 1.000000e+00 : f32
    %138 = vector.broadcast %cst_37 : f32 to vector<8x128xf32>
    %139 = arith.addf %138, %137 : vector<8x128xf32>
    %140 = arith.divf %138, %139 : vector<8x128xf32>
    %141 = arith.mulf %132, %110 : vector<8x128xf32>
    %142 = arith.mulf %126, %134 : vector<8x128xf32>
    %143 = arith.addf %141, %142 : vector<8x128xf32>
    %144 = math.tanh %143 : vector<8x128xf32>
    %145 = arith.mulf %140, %144 : vector<8x128xf32>
    %c3 = arith.constant 3 : index
    %c0_38 = arith.constant 0 : index
    %c0_39 = arith.constant 0 : index
    %146 = vector.load %arg13[%c3, %c0_38, %c0_39] : memref<8x8x128xf32, #tpu.memory_space<vmem>>, vector<1x8x128xf32>
    %147 = vector.shape_cast %146 : vector<1x8x128xf32> to vector<8x128xf32>
    %148 = vector.shape_cast %145 : vector<8x128xf32> to vector<1x8x128xf32>
    tpu.vector_store %arg13[%c3, %c0_38, %c0_39], %148 {strides = array<i32>} : memref<8x8x128xf32, #tpu.memory_space<vmem>>, vector<1x8x128xf32>,
    %149 = vector.extract_strided_slice %12 {offsets = [4, 0, 0], sizes = [1, 8, 512], strides = [1, 1, 1]} : vector<8x8x512xf32> to vector<1x8x512xf32>
    %150 = vector.shape_cast %149 : vector<1x8x512xf32> to vector<8x512xf32>
    %151 = arith.truncf %145 : vector<8x128xf32> to vector<8x128xbf16>
    %cst_40 = arith.constant dense<0.000000e+00> : vector<8x512xf32>
    %152 = tpu.matmul %151, %4, %cst_40 {dimension_numbers = #tpu.dot_dimension_numbers<[1], [0], [0], [1], [0, 0, 1, 1], [], []>} : vector<8x128xbf16>, vector<128x512xbf16>, vector<8x512xf32> -> vector<8x512xf32>
    %153 = arith.addf %150, %152 : vector<8x512xf32>
    %154 = vector.extract_strided_slice %153 {offsets = [0, 0], sizes = [8, 128], strides = [1, 1]} : vector<8x512xf32> to vector<8x128xf32>
    %155 = arith.negf %154 : vector<8x128xf32>
    %156 = math.exp %155 : vector<8x128xf32>
    %cst_41 = arith.constant 1.000000e+00 : f32
    %157 = vector.broadcast %cst_41 : f32 to vector<8x128xf32>
    %158 = arith.addf %157, %156 : vector<8x128xf32>
    %159 = arith.divf %157, %158 : vector<8x128xf32>
    %160 = vector.extract_strided_slice %153 {offsets = [0, 128], sizes = [8, 128], strides = [1, 1]} : vector<8x512xf32> to vector<8x128xf32>
    %161 = arith.negf %160 : vector<8x128xf32>
    %162 = math.exp %161 : vector<8x128xf32>
    %cst_42 = arith.constant 1.000000e+00 : f32
    %163 = vector.broadcast %cst_42 : f32 to vector<8x128xf32>
    %164 = arith.addf %163, %162 : vector<8x128xf32>
    %165 = arith.divf %163, %164 : vector<8x128xf32>
    %166 = vector.extract_strided_slice %153 {offsets = [0, 256], sizes = [8, 128], strides = [1, 1]} : vector<8x512xf32> to vector<8x128xf32>
    %167 = math.tanh %166 : vector<8x128xf32>
    %168 = vector.extract_strided_slice %153 {offsets = [0, 384], sizes = [8, 128], strides = [1, 1]} : vector<8x512xf32> to vector<8x128xf32>
    %169 = arith.negf %168 : vector<8x128xf32>
    %170 = math.exp %169 : vector<8x128xf32>
    %cst_43 = arith.constant 1.000000e+00 : f32
    %171 = vector.broadcast %cst_43 : f32 to vector<8x128xf32>
    %172 = arith.addf %171, %170 : vector<8x128xf32>
    %173 = arith.divf %171, %172 : vector<8x128xf32>
    %174 = arith.mulf %165, %143 : vector<8x128xf32>
    %175 = arith.mulf %159, %167 : vector<8x128xf32>
    %176 = arith.addf %174, %175 : vector<8x128xf32>
    %177 = math.tanh %176 : vector<8x128xf32>
    %178 = arith.mulf %173, %177 : vector<8x128xf32>
    %c4 = arith.constant 4 : index
    %c0_44 = arith.constant 0 : index
    %c0_45 = arith.constant 0 : index
    %179 = vector.load %arg13[%c4, %c0_44, %c0_45] : memref<8x8x128xf32, #tpu.memory_space<vmem>>, vector<1x8x128xf32>
    %180 = vector.shape_cast %179 : vector<1x8x128xf32> to vector<8x128xf32>
    %181 = vector.shape_cast %178 : vector<8x128xf32> to vector<1x8x128xf32>
    tpu.vector_store %arg13[%c4, %c0_44, %c0_45], %181 {strides = array<i32>} : memref<8x8x128xf32, #tpu.memory_space<vmem>>, vector<1x8x128xf32>,
    %182 = vector.extract_strided_slice %12 {offsets = [5, 0, 0], sizes = [1, 8, 512], strides = [1, 1, 1]} : vector<8x8x512xf32> to vector<1x8x512xf32>
    %183 = vector.shape_cast %182 : vector<1x8x512xf32> to vector<8x512xf32>
    %184 = arith.truncf %178 : vector<8x128xf32> to vector<8x128xbf16>
    %cst_46 = arith.constant dense<0.000000e+00> : vector<8x512xf32>
    %185 = tpu.matmul %184, %4, %cst_46 {dimension_numbers = #tpu.dot_dimension_numbers<[1], [0], [0], [1], [0, 0, 1, 1], [], []>} : vector<8x128xbf16>, vector<128x512xbf16>, vector<8x512xf32> -> vector<8x512xf32>
    %186 = arith.addf %183, %185 : vector<8x512xf32>
    %187 = vector.extract_strided_slice %186 {offsets = [0, 0], sizes = [8, 128], strides = [1, 1]} : vector<8x512xf32> to vector<8x128xf32>
    %188 = arith.negf %187 : vector<8x128xf32>
    %189 = math.exp %188 : vector<8x128xf32>
    %cst_47 = arith.constant 1.000000e+00 : f32
    %190 = vector.broadcast %cst_47 : f32 to vector<8x128xf32>
    %191 = arith.addf %190, %189 : vector<8x128xf32>
    %192 = arith.divf %190, %191 : vector<8x128xf32>
    %193 = vector.extract_strided_slice %186 {offsets = [0, 128], sizes = [8, 128], strides = [1, 1]} : vector<8x512xf32> to vector<8x128xf32>
    %194 = arith.negf %193 : vector<8x128xf32>
    %195 = math.exp %194 : vector<8x128xf32>
    %cst_48 = arith.constant 1.000000e+00 : f32
    %196 = vector.broadcast %cst_48 : f32 to vector<8x128xf32>
    %197 = arith.addf %196, %195 : vector<8x128xf32>
    %198 = arith.divf %196, %197 : vector<8x128xf32>
    %199 = vector.extract_strided_slice %186 {offsets = [0, 256], sizes = [8, 128], strides = [1, 1]} : vector<8x512xf32> to vector<8x128xf32>
    %200 = math.tanh %199 : vector<8x128xf32>
    %201 = vector.extract_strided_slice %186 {offsets = [0, 384], sizes = [8, 128], strides = [1, 1]} : vector<8x512xf32> to vector<8x128xf32>
    %202 = arith.negf %201 : vector<8x128xf32>
    %203 = math.exp %202 : vector<8x128xf32>
    %cst_49 = arith.constant 1.000000e+00 : f32
    %204 = vector.broadcast %cst_49 : f32 to vector<8x128xf32>
    %205 = arith.addf %204, %203 : vector<8x128xf32>
    %206 = arith.divf %204, %205 : vector<8x128xf32>
    %207 = arith.mulf %198, %176 : vector<8x128xf32>
    %208 = arith.mulf %192, %200 : vector<8x128xf32>
    %209 = arith.addf %207, %208 : vector<8x128xf32>
    %210 = math.tanh %209 : vector<8x128xf32>
    %211 = arith.mulf %206, %210 : vector<8x128xf32>
    %c5 = arith.constant 5 : index
    %c0_50 = arith.constant 0 : index
    %c0_51 = arith.constant 0 : index
    %212 = vector.load %arg13[%c5, %c0_50, %c0_51] : memref<8x8x128xf32, #tpu.memory_space<vmem>>, vector<1x8x128xf32>
    %213 = vector.shape_cast %212 : vector<1x8x128xf32> to vector<8x128xf32>
    %214 = vector.shape_cast %211 : vector<8x128xf32> to vector<1x8x128xf32>
    tpu.vector_store %arg13[%c5, %c0_50, %c0_51], %214 {strides = array<i32>} : memref<8x8x128xf32, #tpu.memory_space<vmem>>, vector<1x8x128xf32>,
    %215 = vector.extract_strided_slice %12 {offsets = [6, 0, 0], sizes = [1, 8, 512], strides = [1, 1, 1]} : vector<8x8x512xf32> to vector<1x8x512xf32>
    %216 = vector.shape_cast %215 : vector<1x8x512xf32> to vector<8x512xf32>
    %217 = arith.truncf %211 : vector<8x128xf32> to vector<8x128xbf16>
    %cst_52 = arith.constant dense<0.000000e+00> : vector<8x512xf32>
    %218 = tpu.matmul %217, %4, %cst_52 {dimension_numbers = #tpu.dot_dimension_numbers<[1], [0], [0], [1], [0, 0, 1, 1], [], []>} : vector<8x128xbf16>, vector<128x512xbf16>, vector<8x512xf32> -> vector<8x512xf32>
    %219 = arith.addf %216, %218 : vector<8x512xf32>
    %220 = vector.extract_strided_slice %219 {offsets = [0, 0], sizes = [8, 128], strides = [1, 1]} : vector<8x512xf32> to vector<8x128xf32>
    %221 = arith.negf %220 : vector<8x128xf32>
    %222 = math.exp %221 : vector<8x128xf32>
    %cst_53 = arith.constant 1.000000e+00 : f32
    %223 = vector.broadcast %cst_53 : f32 to vector<8x128xf32>
    %224 = arith.addf %223, %222 : vector<8x128xf32>
    %225 = arith.divf %223, %224 : vector<8x128xf32>
    %226 = vector.extract_strided_slice %219 {offsets = [0, 128], sizes = [8, 128], strides = [1, 1]} : vector<8x512xf32> to vector<8x128xf32>
    %227 = arith.negf %226 : vector<8x128xf32>
    %228 = math.exp %227 : vector<8x128xf32>
    %cst_54 = arith.constant 1.000000e+00 : f32
    %229 = vector.broadcast %cst_54 : f32 to vector<8x128xf32>
    %230 = arith.addf %229, %228 : vector<8x128xf32>
    %231 = arith.divf %229, %230 : vector<8x128xf32>
    %232 = vector.extract_strided_slice %219 {offsets = [0, 256], sizes = [8, 128], strides = [1, 1]} : vector<8x512xf32> to vector<8x128xf32>
    %233 = math.tanh %232 : vector<8x128xf32>
    %234 = vector.extract_strided_slice %219 {offsets = [0, 384], sizes = [8, 128], strides = [1, 1]} : vector<8x512xf32> to vector<8x128xf32>
    %235 = arith.negf %234 : vector<8x128xf32>
    %236 = math.exp %235 : vector<8x128xf32>
    %cst_55 = arith.constant 1.000000e+00 : f32
    %237 = vector.broadcast %cst_55 : f32 to vector<8x128xf32>
    %238 = arith.addf %237, %236 : vector<8x128xf32>
    %239 = arith.divf %237, %238 : vector<8x128xf32>
    %240 = arith.mulf %231, %209 : vector<8x128xf32>
    %241 = arith.mulf %225, %233 : vector<8x128xf32>
    %242 = arith.addf %240, %241 : vector<8x128xf32>
    %243 = math.tanh %242 : vector<8x128xf32>
    %244 = arith.mulf %239, %243 : vector<8x128xf32>
    %c6 = arith.constant 6 : index
    %c0_56 = arith.constant 0 : index
    %c0_57 = arith.constant 0 : index
    %245 = vector.load %arg13[%c6, %c0_56, %c0_57] : memref<8x8x128xf32, #tpu.memory_space<vmem>>, vector<1x8x128xf32>
    %246 = vector.shape_cast %245 : vector<1x8x128xf32> to vector<8x128xf32>
    %247 = vector.shape_cast %244 : vector<8x128xf32> to vector<1x8x128xf32>
    tpu.vector_store %arg13[%c6, %c0_56, %c0_57], %247 {strides = array<i32>} : memref<8x8x128xf32, #tpu.memory_space<vmem>>, vector<1x8x128xf32>,
    %248 = vector.extract_strided_slice %12 {offsets = [7, 0, 0], sizes = [1, 8, 512], strides = [1, 1, 1]} : vector<8x8x512xf32> to vector<1x8x512xf32>
    %249 = vector.shape_cast %248 : vector<1x8x512xf32> to vector<8x512xf32>
    %250 = arith.truncf %244 : vector<8x128xf32> to vector<8x128xbf16>
    %cst_58 = arith.constant dense<0.000000e+00> : vector<8x512xf32>
    %251 = tpu.matmul %250, %4, %cst_58 {dimension_numbers = #tpu.dot_dimension_numbers<[1], [0], [0], [1], [0, 0, 1, 1], [], []>} : vector<8x128xbf16>, vector<128x512xbf16>, vector<8x512xf32> -> vector<8x512xf32>
    %252 = arith.addf %249, %251 : vector<8x512xf32>
    %253 = vector.extract_strided_slice %252 {offsets = [0, 0], sizes = [8, 128], strides = [1, 1]} : vector<8x512xf32> to vector<8x128xf32>
    %254 = arith.negf %253 : vector<8x128xf32>
    %255 = math.exp %254 : vector<8x128xf32>
    %cst_59 = arith.constant 1.000000e+00 : f32
    %256 = vector.broadcast %cst_59 : f32 to vector<8x128xf32>
    %257 = arith.addf %256, %255 : vector<8x128xf32>
    %258 = arith.divf %256, %257 : vector<8x128xf32>
    %259 = vector.extract_strided_slice %252 {offsets = [0, 128], sizes = [8, 128], strides = [1, 1]} : vector<8x512xf32> to vector<8x128xf32>
    %260 = arith.negf %259 : vector<8x128xf32>
    %261 = math.exp %260 : vector<8x128xf32>
    %cst_60 = arith.constant 1.000000e+00 : f32
    %262 = vector.broadcast %cst_60 : f32 to vector<8x128xf32>
    %263 = arith.addf %262, %261 : vector<8x128xf32>
    %264 = arith.divf %262, %263 : vector<8x128xf32>
    %265 = vector.extract_strided_slice %252 {offsets = [0, 256], sizes = [8, 128], strides = [1, 1]} : vector<8x512xf32> to vector<8x128xf32>
    %266 = math.tanh %265 : vector<8x128xf32>
    %267 = vector.extract_strided_slice %252 {offsets = [0, 384], sizes = [8, 128], strides = [1, 1]} : vector<8x512xf32> to vector<8x128xf32>
    %268 = arith.negf %267 : vector<8x128xf32>
    %269 = math.exp %268 : vector<8x128xf32>
    %cst_61 = arith.constant 1.000000e+00 : f32
    %270 = vector.broadcast %cst_61 : f32 to vector<8x128xf32>
    %271 = arith.addf %270, %269 : vector<8x128xf32>
    %272 = arith.divf %270, %271 : vector<8x128xf32>
    %273 = arith.mulf %264, %242 : vector<8x128xf32>
    %274 = arith.mulf %258, %266 : vector<8x128xf32>
    %275 = arith.addf %273, %274 : vector<8x128xf32>
    %276 = math.tanh %275 : vector<8x128xf32>
    %277 = arith.mulf %272, %276 : vector<8x128xf32>
    %c7 = arith.constant 7 : index
    %c0_62 = arith.constant 0 : index
    %c0_63 = arith.constant 0 : index
    %278 = vector.load %arg13[%c7, %c0_62, %c0_63] : memref<8x8x128xf32, #tpu.memory_space<vmem>>, vector<1x8x128xf32>
    %279 = vector.shape_cast %278 : vector<1x8x128xf32> to vector<8x128xf32>
    %280 = vector.shape_cast %277 : vector<8x128xf32> to vector<1x8x128xf32>
    tpu.vector_store %arg13[%c7, %c0_62, %c0_63], %280 {strides = array<i32>} : memref<8x8x128xf32, #tpu.memory_space<vmem>>, vector<1x8x128xf32>,
    %c0_64 = arith.constant 0 : index
    %c0_65 = arith.constant 0 : index
    %c0_66 = arith.constant 0 : index
    %281 = vector.load %arg11[%c0_64, %c0_65, %c0_66] : memref<2x8x128xf32, #tpu.memory_space<vmem>>, vector<1x8x128xf32>
    %282 = vector.shape_cast %281 : vector<1x8x128xf32> to vector<8x128xf32>
    %283 = vector.shape_cast %277 : vector<8x128xf32> to vector<1x8x128xf32>
    tpu.vector_store %arg11[%c0_64, %c0_65, %c0_66], %283 {strides = array<i32>} : memref<2x8x128xf32, #tpu.memory_space<vmem>>, vector<1x8x128xf32>,
    %c0_67 = arith.constant 0 : index
    %c0_68 = arith.constant 0 : index
    %c0_69 = arith.constant 0 : index
    %284 = vector.load %arg12[%c0_67, %c0_68, %c0_69] : memref<2x8x128xf32, #tpu.memory_space<vmem>>, vector<1x8x128xf32>
    %285 = vector.shape_cast %284 : vector<1x8x128xf32> to vector<8x128xf32>
    %286 = vector.shape_cast %275 : vector<8x128xf32> to vector<1x8x128xf32>
    tpu.vector_store %arg12[%c0_67, %c0_68, %c0_69], %286 {strides = array<i32>} : memref<2x8x128xf32, #tpu.memory_space<vmem>>, vector<1x8x128xf32>,
    %c0_70 = arith.constant 0 : index
    %c0_71 = arith.constant 0 : index
    %287 = vector.load %arg5[%c0_70, %c0_71] : memref<128x512xbf16, #tpu.memory_space<vmem>>, vector<128x512xbf16>
    %c0_72 = arith.constant 0 : index
    %c0_73 = arith.constant 0 : index
    %288 = vector.load %arg6[%c0_72, %c0_73] : memref<128x512xbf16, #tpu.memory_space<vmem>>, vector<128x512xbf16>
    %c0_74 = arith.constant 0 : index
    %c0_75 = arith.constant 0 : index
    %289 = vector.load %arg7[%c0_74, %c0_75] : memref<1x512xf32, #tpu.memory_space<vmem>>, vector<1x512xf32>
    %c0_76 = arith.constant 0 : index
    %c0_77 = arith.constant 0 : index
    %c0_78 = arith.constant 0 : index
    %290 = vector.load %arg13[%c0_76, %c0_77, %c0_78] : memref<8x8x128xf32, #tpu.memory_space<vmem>>, vector<8x8x128xf32>
    %291 = vector.shape_cast %290 : vector<8x8x128xf32> to vector<64x128xf32>
    %292 = arith.truncf %291 : vector<64x128xf32> to vector<64x128xbf16>
    %cst_79 = arith.constant dense<0.000000e+00> : vector<64x512xf32>
    %293 = tpu.matmul %292, %287, %cst_79 {dimension_numbers = #tpu.dot_dimension_numbers<[1], [0], [0], [1], [0, 0, 1, 1], [], []>} : vector<64x128xbf16>, vector<128x512xbf16>, vector<64x512xf32> -> vector<64x512xf32>
    %294 = vector.broadcast %289 : vector<1x512xf32> to vector<64x512xf32>
    %295 = arith.addf %293, %294 : vector<64x512xf32>
    %296 = vector.shape_cast %295 : vector<64x512xf32> to vector<8x8x512xf32>
    %c1_80 = arith.constant 1 : index
    %c0_81 = arith.constant 0 : index
    %c0_82 = arith.constant 0 : index
    %297 = vector.load %arg11[%c1_80, %c0_81, %c0_82] : memref<2x8x128xf32, #tpu.memory_space<vmem>>, vector<1x8x128xf32>
    %298 = vector.shape_cast %297 : vector<1x8x128xf32> to vector<8x128xf32>
    %c1_83 = arith.constant 1 : index
    %c0_84 = arith.constant 0 : index
    %c0_85 = arith.constant 0 : index
    %299 = vector.load %arg12[%c1_83, %c0_84, %c0_85] : memref<2x8x128xf32, #tpu.memory_space<vmem>>, vector<1x8x128xf32>
    %300 = vector.shape_cast %299 : vector<1x8x128xf32> to vector<8x128xf32>
    %301 = vector.extract_strided_slice %296 {offsets = [0, 0, 0], sizes = [1, 8, 512], strides = [1, 1, 1]} : vector<8x8x512xf32> to vector<1x8x512xf32>
    %302 = vector.shape_cast %301 : vector<1x8x512xf32> to vector<8x512xf32>
    %303 = arith.truncf %298 : vector<8x128xf32> to vector<8x128xbf16>
    %cst_86 = arith.constant dense<0.000000e+00> : vector<8x512xf32>
    %304 = tpu.matmul %303, %288, %cst_86 {dimension_numbers = #tpu.dot_dimension_numbers<[1], [0], [0], [1], [0, 0, 1, 1], [], []>} : vector<8x128xbf16>, vector<128x512xbf16>, vector<8x512xf32> -> vector<8x512xf32>
    %305 = arith.addf %302, %304 : vector<8x512xf32>
    %306 = vector.extract_strided_slice %305 {offsets = [0, 0], sizes = [8, 128], strides = [1, 1]} : vector<8x512xf32> to vector<8x128xf32>
    %307 = arith.negf %306 : vector<8x128xf32>
    %308 = math.exp %307 : vector<8x128xf32>
    %cst_87 = arith.constant 1.000000e+00 : f32
    %309 = vector.broadcast %cst_87 : f32 to vector<8x128xf32>
    %310 = arith.addf %309, %308 : vector<8x128xf32>
    %311 = arith.divf %309, %310 : vector<8x128xf32>
    %312 = vector.extract_strided_slice %305 {offsets = [0, 128], sizes = [8, 128], strides = [1, 1]} : vector<8x512xf32> to vector<8x128xf32>
    %313 = arith.negf %312 : vector<8x128xf32>
    %314 = math.exp %313 : vector<8x128xf32>
    %cst_88 = arith.constant 1.000000e+00 : f32
    %315 = vector.broadcast %cst_88 : f32 to vector<8x128xf32>
    %316 = arith.addf %315, %314 : vector<8x128xf32>
    %317 = arith.divf %315, %316 : vector<8x128xf32>
    %318 = vector.extract_strided_slice %305 {offsets = [0, 256], sizes = [8, 128], strides = [1, 1]} : vector<8x512xf32> to vector<8x128xf32>
    %319 = math.tanh %318 : vector<8x128xf32>
    %320 = vector.extract_strided_slice %305 {offsets = [0, 384], sizes = [8, 128], strides = [1, 1]} : vector<8x512xf32> to vector<8x128xf32>
    %321 = arith.negf %320 : vector<8x128xf32>
    %322 = math.exp %321 : vector<8x128xf32>
    %cst_89 = arith.constant 1.000000e+00 : f32
    %323 = vector.broadcast %cst_89 : f32 to vector<8x128xf32>
    %324 = arith.addf %323, %322 : vector<8x128xf32>
    %325 = arith.divf %323, %324 : vector<8x128xf32>
    %326 = arith.mulf %317, %300 : vector<8x128xf32>
    %327 = arith.mulf %311, %319 : vector<8x128xf32>
    %328 = arith.addf %326, %327 : vector<8x128xf32>
    %329 = math.tanh %328 : vector<8x128xf32>
    %330 = arith.mulf %325, %329 : vector<8x128xf32>
    %331 = vector.extract_strided_slice %296 {offsets = [1, 0, 0], sizes = [1, 8, 512], strides = [1, 1, 1]} : vector<8x8x512xf32> to vector<1x8x512xf32>
    %332 = vector.shape_cast %331 : vector<1x8x512xf32> to vector<8x512xf32>
    %333 = arith.truncf %330 : vector<8x128xf32> to vector<8x128xbf16>
    %cst_90 = arith.constant dense<0.000000e+00> : vector<8x512xf32>
    %334 = tpu.matmul %333, %288, %cst_90 {dimension_numbers = #tpu.dot_dimension_numbers<[1], [0], [0], [1], [0, 0, 1, 1], [], []>} : vector<8x128xbf16>, vector<128x512xbf16>, vector<8x512xf32> -> vector<8x512xf32>
    %335 = arith.addf %332, %334 : vector<8x512xf32>
    %336 = vector.extract_strided_slice %335 {offsets = [0, 0], sizes = [8, 128], strides = [1, 1]} : vector<8x512xf32> to vector<8x128xf32>
    %337 = arith.negf %336 : vector<8x128xf32>
    %338 = math.exp %337 : vector<8x128xf32>
    %cst_91 = arith.constant 1.000000e+00 : f32
    %339 = vector.broadcast %cst_91 : f32 to vector<8x128xf32>
    %340 = arith.addf %339, %338 : vector<8x128xf32>
    %341 = arith.divf %339, %340 : vector<8x128xf32>
    %342 = vector.extract_strided_slice %335 {offsets = [0, 128], sizes = [8, 128], strides = [1, 1]} : vector<8x512xf32> to vector<8x128xf32>
    %343 = arith.negf %342 : vector<8x128xf32>
    %344 = math.exp %343 : vector<8x128xf32>
    %cst_92 = arith.constant 1.000000e+00 : f32
    %345 = vector.broadcast %cst_92 : f32 to vector<8x128xf32>
    %346 = arith.addf %345, %344 : vector<8x128xf32>
    %347 = arith.divf %345, %346 : vector<8x128xf32>
    %348 = vector.extract_strided_slice %335 {offsets = [0, 256], sizes = [8, 128], strides = [1, 1]} : vector<8x512xf32> to vector<8x128xf32>
    %349 = math.tanh %348 : vector<8x128xf32>
    %350 = vector.extract_strided_slice %335 {offsets = [0, 384], sizes = [8, 128], strides = [1, 1]} : vector<8x512xf32> to vector<8x128xf32>
    %351 = arith.negf %350 : vector<8x128xf32>
    %352 = math.exp %351 : vector<8x128xf32>
    %cst_93 = arith.constant 1.000000e+00 : f32
    %353 = vector.broadcast %cst_93 : f32 to vector<8x128xf32>
    %354 = arith.addf %353, %352 : vector<8x128xf32>
    %355 = arith.divf %353, %354 : vector<8x128xf32>
    %356 = arith.mulf %347, %328 : vector<8x128xf32>
    %357 = arith.mulf %341, %349 : vector<8x128xf32>
    %358 = arith.addf %356, %357 : vector<8x128xf32>
    %359 = math.tanh %358 : vector<8x128xf32>
    %360 = arith.mulf %355, %359 : vector<8x128xf32>
    %361 = vector.extract_strided_slice %296 {offsets = [2, 0, 0], sizes = [1, 8, 512], strides = [1, 1, 1]} : vector<8x8x512xf32> to vector<1x8x512xf32>
    %362 = vector.shape_cast %361 : vector<1x8x512xf32> to vector<8x512xf32>
    %363 = arith.truncf %360 : vector<8x128xf32> to vector<8x128xbf16>
    %cst_94 = arith.constant dense<0.000000e+00> : vector<8x512xf32>
    %364 = tpu.matmul %363, %288, %cst_94 {dimension_numbers = #tpu.dot_dimension_numbers<[1], [0], [0], [1], [0, 0, 1, 1], [], []>} : vector<8x128xbf16>, vector<128x512xbf16>, vector<8x512xf32> -> vector<8x512xf32>
    %365 = arith.addf %362, %364 : vector<8x512xf32>
    %366 = vector.extract_strided_slice %365 {offsets = [0, 0], sizes = [8, 128], strides = [1, 1]} : vector<8x512xf32> to vector<8x128xf32>
    %367 = arith.negf %366 : vector<8x128xf32>
    %368 = math.exp %367 : vector<8x128xf32>
    %cst_95 = arith.constant 1.000000e+00 : f32
    %369 = vector.broadcast %cst_95 : f32 to vector<8x128xf32>
    %370 = arith.addf %369, %368 : vector<8x128xf32>
    %371 = arith.divf %369, %370 : vector<8x128xf32>
    %372 = vector.extract_strided_slice %365 {offsets = [0, 128], sizes = [8, 128], strides = [1, 1]} : vector<8x512xf32> to vector<8x128xf32>
    %373 = arith.negf %372 : vector<8x128xf32>
    %374 = math.exp %373 : vector<8x128xf32>
    %cst_96 = arith.constant 1.000000e+00 : f32
    %375 = vector.broadcast %cst_96 : f32 to vector<8x128xf32>
    %376 = arith.addf %375, %374 : vector<8x128xf32>
    %377 = arith.divf %375, %376 : vector<8x128xf32>
    %378 = vector.extract_strided_slice %365 {offsets = [0, 256], sizes = [8, 128], strides = [1, 1]} : vector<8x512xf32> to vector<8x128xf32>
    %379 = math.tanh %378 : vector<8x128xf32>
    %380 = vector.extract_strided_slice %365 {offsets = [0, 384], sizes = [8, 128], strides = [1, 1]} : vector<8x512xf32> to vector<8x128xf32>
    %381 = arith.negf %380 : vector<8x128xf32>
    %382 = math.exp %381 : vector<8x128xf32>
    %cst_97 = arith.constant 1.000000e+00 : f32
    %383 = vector.broadcast %cst_97 : f32 to vector<8x128xf32>
    %384 = arith.addf %383, %382 : vector<8x128xf32>
    %385 = arith.divf %383, %384 : vector<8x128xf32>
    %386 = arith.mulf %377, %358 : vector<8x128xf32>
    %387 = arith.mulf %371, %379 : vector<8x128xf32>
    %388 = arith.addf %386, %387 : vector<8x128xf32>
    %389 = math.tanh %388 : vector<8x128xf32>
    %390 = arith.mulf %385, %389 : vector<8x128xf32>
    %391 = vector.extract_strided_slice %296 {offsets = [3, 0, 0], sizes = [1, 8, 512], strides = [1, 1, 1]} : vector<8x8x512xf32> to vector<1x8x512xf32>
    %392 = vector.shape_cast %391 : vector<1x8x512xf32> to vector<8x512xf32>
    %393 = arith.truncf %390 : vector<8x128xf32> to vector<8x128xbf16>
    %cst_98 = arith.constant dense<0.000000e+00> : vector<8x512xf32>
    %394 = tpu.matmul %393, %288, %cst_98 {dimension_numbers = #tpu.dot_dimension_numbers<[1], [0], [0], [1], [0, 0, 1, 1], [], []>} : vector<8x128xbf16>, vector<128x512xbf16>, vector<8x512xf32> -> vector<8x512xf32>
    %395 = arith.addf %392, %394 : vector<8x512xf32>
    %396 = vector.extract_strided_slice %395 {offsets = [0, 0], sizes = [8, 128], strides = [1, 1]} : vector<8x512xf32> to vector<8x128xf32>
    %397 = arith.negf %396 : vector<8x128xf32>
    %398 = math.exp %397 : vector<8x128xf32>
    %cst_99 = arith.constant 1.000000e+00 : f32
    %399 = vector.broadcast %cst_99 : f32 to vector<8x128xf32>
    %400 = arith.addf %399, %398 : vector<8x128xf32>
    %401 = arith.divf %399, %400 : vector<8x128xf32>
    %402 = vector.extract_strided_slice %395 {offsets = [0, 128], sizes = [8, 128], strides = [1, 1]} : vector<8x512xf32> to vector<8x128xf32>
    %403 = arith.negf %402 : vector<8x128xf32>
    %404 = math.exp %403 : vector<8x128xf32>
    %cst_100 = arith.constant 1.000000e+00 : f32
    %405 = vector.broadcast %cst_100 : f32 to vector<8x128xf32>
    %406 = arith.addf %405, %404 : vector<8x128xf32>
    %407 = arith.divf %405, %406 : vector<8x128xf32>
    %408 = vector.extract_strided_slice %395 {offsets = [0, 256], sizes = [8, 128], strides = [1, 1]} : vector<8x512xf32> to vector<8x128xf32>
    %409 = math.tanh %408 : vector<8x128xf32>
    %410 = vector.extract_strided_slice %395 {offsets = [0, 384], sizes = [8, 128], strides = [1, 1]} : vector<8x512xf32> to vector<8x128xf32>
    %411 = arith.negf %410 : vector<8x128xf32>
    %412 = math.exp %411 : vector<8x128xf32>
    %cst_101 = arith.constant 1.000000e+00 : f32
    %413 = vector.broadcast %cst_101 : f32 to vector<8x128xf32>
    %414 = arith.addf %413, %412 : vector<8x128xf32>
    %415 = arith.divf %413, %414 : vector<8x128xf32>
    %416 = arith.mulf %407, %388 : vector<8x128xf32>
    %417 = arith.mulf %401, %409 : vector<8x128xf32>
    %418 = arith.addf %416, %417 : vector<8x128xf32>
    %419 = math.tanh %418 : vector<8x128xf32>
    %420 = arith.mulf %415, %419 : vector<8x128xf32>
    %421 = vector.extract_strided_slice %296 {offsets = [4, 0, 0], sizes = [1, 8, 512], strides = [1, 1, 1]} : vector<8x8x512xf32> to vector<1x8x512xf32>
    %422 = vector.shape_cast %421 : vector<1x8x512xf32> to vector<8x512xf32>
    %423 = arith.truncf %420 : vector<8x128xf32> to vector<8x128xbf16>
    %cst_102 = arith.constant dense<0.000000e+00> : vector<8x512xf32>
    %424 = tpu.matmul %423, %288, %cst_102 {dimension_numbers = #tpu.dot_dimension_numbers<[1], [0], [0], [1], [0, 0, 1, 1], [], []>} : vector<8x128xbf16>, vector<128x512xbf16>, vector<8x512xf32> -> vector<8x512xf32>
    %425 = arith.addf %422, %424 : vector<8x512xf32>
    %426 = vector.extract_strided_slice %425 {offsets = [0, 0], sizes = [8, 128], strides = [1, 1]} : vector<8x512xf32> to vector<8x128xf32>
    %427 = arith.negf %426 : vector<8x128xf32>
    %428 = math.exp %427 : vector<8x128xf32>
    %cst_103 = arith.constant 1.000000e+00 : f32
    %429 = vector.broadcast %cst_103 : f32 to vector<8x128xf32>
    %430 = arith.addf %429, %428 : vector<8x128xf32>
    %431 = arith.divf %429, %430 : vector<8x128xf32>
    %432 = vector.extract_strided_slice %425 {offsets = [0, 128], sizes = [8, 128], strides = [1, 1]} : vector<8x512xf32> to vector<8x128xf32>
    %433 = arith.negf %432 : vector<8x128xf32>
    %434 = math.exp %433 : vector<8x128xf32>
    %cst_104 = arith.constant 1.000000e+00 : f32
    %435 = vector.broadcast %cst_104 : f32 to vector<8x128xf32>
    %436 = arith.addf %435, %434 : vector<8x128xf32>
    %437 = arith.divf %435, %436 : vector<8x128xf32>
    %438 = vector.extract_strided_slice %425 {offsets = [0, 256], sizes = [8, 128], strides = [1, 1]} : vector<8x512xf32> to vector<8x128xf32>
    %439 = math.tanh %438 : vector<8x128xf32>
    %440 = vector.extract_strided_slice %425 {offsets = [0, 384], sizes = [8, 128], strides = [1, 1]} : vector<8x512xf32> to vector<8x128xf32>
    %441 = arith.negf %440 : vector<8x128xf32>
    %442 = math.exp %441 : vector<8x128xf32>
    %cst_105 = arith.constant 1.000000e+00 : f32
    %443 = vector.broadcast %cst_105 : f32 to vector<8x128xf32>
    %444 = arith.addf %443, %442 : vector<8x128xf32>
    %445 = arith.divf %443, %444 : vector<8x128xf32>
    %446 = arith.mulf %437, %418 : vector<8x128xf32>
    %447 = arith.mulf %431, %439 : vector<8x128xf32>
    %448 = arith.addf %446, %447 : vector<8x128xf32>
    %449 = math.tanh %448 : vector<8x128xf32>
    %450 = arith.mulf %445, %449 : vector<8x128xf32>
    %451 = vector.extract_strided_slice %296 {offsets = [5, 0, 0], sizes = [1, 8, 512], strides = [1, 1, 1]} : vector<8x8x512xf32> to vector<1x8x512xf32>
    %452 = vector.shape_cast %451 : vector<1x8x512xf32> to vector<8x512xf32>
    %453 = arith.truncf %450 : vector<8x128xf32> to vector<8x128xbf16>
    %cst_106 = arith.constant dense<0.000000e+00> : vector<8x512xf32>
    %454 = tpu.matmul %453, %288, %cst_106 {dimension_numbers = #tpu.dot_dimension_numbers<[1], [0], [0], [1], [0, 0, 1, 1], [], []>} : vector<8x128xbf16>, vector<128x512xbf16>, vector<8x512xf32> -> vector<8x512xf32>
    %455 = arith.addf %452, %454 : vector<8x512xf32>
    %456 = vector.extract_strided_slice %455 {offsets = [0, 0], sizes = [8, 128], strides = [1, 1]} : vector<8x512xf32> to vector<8x128xf32>
    %457 = arith.negf %456 : vector<8x128xf32>
    %458 = math.exp %457 : vector<8x128xf32>
    %cst_107 = arith.constant 1.000000e+00 : f32
    %459 = vector.broadcast %cst_107 : f32 to vector<8x128xf32>
    %460 = arith.addf %459, %458 : vector<8x128xf32>
    %461 = arith.divf %459, %460 : vector<8x128xf32>
    %462 = vector.extract_strided_slice %455 {offsets = [0, 128], sizes = [8, 128], strides = [1, 1]} : vector<8x512xf32> to vector<8x128xf32>
    %463 = arith.negf %462 : vector<8x128xf32>
    %464 = math.exp %463 : vector<8x128xf32>
    %cst_108 = arith.constant 1.000000e+00 : f32
    %465 = vector.broadcast %cst_108 : f32 to vector<8x128xf32>
    %466 = arith.addf %465, %464 : vector<8x128xf32>
    %467 = arith.divf %465, %466 : vector<8x128xf32>
    %468 = vector.extract_strided_slice %455 {offsets = [0, 256], sizes = [8, 128], strides = [1, 1]} : vector<8x512xf32> to vector<8x128xf32>
    %469 = math.tanh %468 : vector<8x128xf32>
    %470 = vector.extract_strided_slice %455 {offsets = [0, 384], sizes = [8, 128], strides = [1, 1]} : vector<8x512xf32> to vector<8x128xf32>
    %471 = arith.negf %470 : vector<8x128xf32>
    %472 = math.exp %471 : vector<8x128xf32>
    %cst_109 = arith.constant 1.000000e+00 : f32
    %473 = vector.broadcast %cst_109 : f32 to vector<8x128xf32>
    %474 = arith.addf %473, %472 : vector<8x128xf32>
    %475 = arith.divf %473, %474 : vector<8x128xf32>
    %476 = arith.mulf %467, %448 : vector<8x128xf32>
    %477 = arith.mulf %461, %469 : vector<8x128xf32>
    %478 = arith.addf %476, %477 : vector<8x128xf32>
    %479 = math.tanh %478 : vector<8x128xf32>
    %480 = arith.mulf %475, %479 : vector<8x128xf32>
    %481 = vector.extract_strided_slice %296 {offsets = [6, 0, 0], sizes = [1, 8, 512], strides = [1, 1, 1]} : vector<8x8x512xf32> to vector<1x8x512xf32>
    %482 = vector.shape_cast %481 : vector<1x8x512xf32> to vector<8x512xf32>
    %483 = arith.truncf %480 : vector<8x128xf32> to vector<8x128xbf16>
    %cst_110 = arith.constant dense<0.000000e+00> : vector<8x512xf32>
    %484 = tpu.matmul %483, %288, %cst_110 {dimension_numbers = #tpu.dot_dimension_numbers<[1], [0], [0], [1], [0, 0, 1, 1], [], []>} : vector<8x128xbf16>, vector<128x512xbf16>, vector<8x512xf32> -> vector<8x512xf32>
    %485 = arith.addf %482, %484 : vector<8x512xf32>
    %486 = vector.extract_strided_slice %485 {offsets = [0, 0], sizes = [8, 128], strides = [1, 1]} : vector<8x512xf32> to vector<8x128xf32>
    %487 = arith.negf %486 : vector<8x128xf32>
    %488 = math.exp %487 : vector<8x128xf32>
    %cst_111 = arith.constant 1.000000e+00 : f32
    %489 = vector.broadcast %cst_111 : f32 to vector<8x128xf32>
    %490 = arith.addf %489, %488 : vector<8x128xf32>
    %491 = arith.divf %489, %490 : vector<8x128xf32>
    %492 = vector.extract_strided_slice %485 {offsets = [0, 128], sizes = [8, 128], strides = [1, 1]} : vector<8x512xf32> to vector<8x128xf32>
    %493 = arith.negf %492 : vector<8x128xf32>
    %494 = math.exp %493 : vector<8x128xf32>
    %cst_112 = arith.constant 1.000000e+00 : f32
    %495 = vector.broadcast %cst_112 : f32 to vector<8x128xf32>
    %496 = arith.addf %495, %494 : vector<8x128xf32>
    %497 = arith.divf %495, %496 : vector<8x128xf32>
    %498 = vector.extract_strided_slice %485 {offsets = [0, 256], sizes = [8, 128], strides = [1, 1]} : vector<8x512xf32> to vector<8x128xf32>
    %499 = math.tanh %498 : vector<8x128xf32>
    %500 = vector.extract_strided_slice %485 {offsets = [0, 384], sizes = [8, 128], strides = [1, 1]} : vector<8x512xf32> to vector<8x128xf32>
    %501 = arith.negf %500 : vector<8x128xf32>
    %502 = math.exp %501 : vector<8x128xf32>
    %cst_113 = arith.constant 1.000000e+00 : f32
    %503 = vector.broadcast %cst_113 : f32 to vector<8x128xf32>
    %504 = arith.addf %503, %502 : vector<8x128xf32>
    %505 = arith.divf %503, %504 : vector<8x128xf32>
    %506 = arith.mulf %497, %478 : vector<8x128xf32>
    %507 = arith.mulf %491, %499 : vector<8x128xf32>
    %508 = arith.addf %506, %507 : vector<8x128xf32>
    %509 = math.tanh %508 : vector<8x128xf32>
    %510 = arith.mulf %505, %509 : vector<8x128xf32>
    %511 = vector.extract_strided_slice %296 {offsets = [7, 0, 0], sizes = [1, 8, 512], strides = [1, 1, 1]} : vector<8x8x512xf32> to vector<1x8x512xf32>
    %512 = vector.shape_cast %511 : vector<1x8x512xf32> to vector<8x512xf32>
    %513 = arith.truncf %510 : vector<8x128xf32> to vector<8x128xbf16>
    %cst_114 = arith.constant dense<0.000000e+00> : vector<8x512xf32>
    %514 = tpu.matmul %513, %288, %cst_114 {dimension_numbers = #tpu.dot_dimension_numbers<[1], [0], [0], [1], [0, 0, 1, 1], [], []>} : vector<8x128xbf16>, vector<128x512xbf16>, vector<8x512xf32> -> vector<8x512xf32>
    %515 = arith.addf %512, %514 : vector<8x512xf32>
    %516 = vector.extract_strided_slice %515 {offsets = [0, 0], sizes = [8, 128], strides = [1, 1]} : vector<8x512xf32> to vector<8x128xf32>
    %517 = arith.negf %516 : vector<8x128xf32>
    %518 = math.exp %517 : vector<8x128xf32>
    %cst_115 = arith.constant 1.000000e+00 : f32
    %519 = vector.broadcast %cst_115 : f32 to vector<8x128xf32>
    %520 = arith.addf %519, %518 : vector<8x128xf32>
    %521 = arith.divf %519, %520 : vector<8x128xf32>
    %522 = vector.extract_strided_slice %515 {offsets = [0, 128], sizes = [8, 128], strides = [1, 1]} : vector<8x512xf32> to vector<8x128xf32>
    %523 = arith.negf %522 : vector<8x128xf32>
    %524 = math.exp %523 : vector<8x128xf32>
    %cst_116 = arith.constant 1.000000e+00 : f32
    %525 = vector.broadcast %cst_116 : f32 to vector<8x128xf32>
    %526 = arith.addf %525, %524 : vector<8x128xf32>
    %527 = arith.divf %525, %526 : vector<8x128xf32>
    %528 = vector.extract_strided_slice %515 {offsets = [0, 256], sizes = [8, 128], strides = [1, 1]} : vector<8x512xf32> to vector<8x128xf32>
    %529 = math.tanh %528 : vector<8x128xf32>
    %530 = vector.extract_strided_slice %515 {offsets = [0, 384], sizes = [8, 128], strides = [1, 1]} : vector<8x512xf32> to vector<8x128xf32>
    %531 = arith.negf %530 : vector<8x128xf32>
    %532 = math.exp %531 : vector<8x128xf32>
    %cst_117 = arith.constant 1.000000e+00 : f32
    %533 = vector.broadcast %cst_117 : f32 to vector<8x128xf32>
    %534 = arith.addf %533, %532 : vector<8x128xf32>
    %535 = arith.divf %533, %534 : vector<8x128xf32>
    %536 = arith.mulf %527, %508 : vector<8x128xf32>
    %537 = arith.mulf %521, %529 : vector<8x128xf32>
    %538 = arith.addf %536, %537 : vector<8x128xf32>
    %539 = math.tanh %538 : vector<8x128xf32>
    %540 = arith.mulf %535, %539 : vector<8x128xf32>
    %c1_118 = arith.constant 1 : index
    %c0_119 = arith.constant 0 : index
    %c0_120 = arith.constant 0 : index
    %541 = vector.load %arg11[%c1_118, %c0_119, %c0_120] : memref<2x8x128xf32, #tpu.memory_space<vmem>>, vector<1x8x128xf32>
    %542 = vector.shape_cast %541 : vector<1x8x128xf32> to vector<8x128xf32>
    %543 = vector.shape_cast %540 : vector<8x128xf32> to vector<1x8x128xf32>
    tpu.vector_store %arg11[%c1_118, %c0_119, %c0_120], %543 {strides = array<i32>} : memref<2x8x128xf32, #tpu.memory_space<vmem>>, vector<1x8x128xf32>,
    %c1_121 = arith.constant 1 : index
    %c0_122 = arith.constant 0 : index
    %c0_123 = arith.constant 0 : index
    %544 = vector.load %arg12[%c1_121, %c0_122, %c0_123] : memref<2x8x128xf32, #tpu.memory_space<vmem>>, vector<1x8x128xf32>
    %545 = vector.shape_cast %544 : vector<1x8x128xf32> to vector<8x128xf32>
    %546 = vector.shape_cast %538 : vector<8x128xf32> to vector<1x8x128xf32>
    tpu.vector_store %arg12[%c1_121, %c0_122, %c0_123], %546 {strides = array<i32>} : memref<2x8x128xf32, #tpu.memory_space<vmem>>, vector<1x8x128xf32>,
    %c0_i32_124 = arith.constant 0 : i32
    %547 = arith.cmpi eq, %arg0, %c0_i32_124 : i32
    %548 = arith.extui %547 : i1 to i32
    %c0_i32_125 = arith.constant 0 : i32
    %549 = arith.cmpi ne, %548, %c0_i32_125 : i32
    scf.if %549 {
      %c0_126 = arith.constant 0 : index
      %c0_127 = arith.constant 0 : index
      %550 = vector.load %arg8[%c0_126, %c0_127] : memref<128x128xbf16, #tpu.memory_space<vmem>>, vector<128x128xbf16>
      %c0_128 = arith.constant 0 : index
      %c0_129 = arith.constant 0 : index
      %551 = vector.load %arg9[%c0_128, %c0_129] : memref<1x128xf32, #tpu.memory_space<vmem>>, vector<1x128xf32>
      %c1_130 = arith.constant 1 : index
      %c0_131 = arith.constant 0 : index
      %c0_132 = arith.constant 0 : index
      %552 = vector.load %arg11[%c1_130, %c0_131, %c0_132] : memref<2x8x128xf32, #tpu.memory_space<vmem>>, vector<1x8x128xf32>
      %553 = vector.shape_cast %552 : vector<1x8x128xf32> to vector<8x128xf32>
      %554 = arith.truncf %553 : vector<8x128xf32> to vector<8x128xbf16>
      %cst_133 = arith.constant dense<0.000000e+00> : vector<8x128xf32>
      %555 = tpu.matmul %554, %550, %cst_133 {dimension_numbers = #tpu.dot_dimension_numbers<[1], [0], [0], [1], [0, 0, 1, 1], [], []>} : vector<8x128xbf16>, vector<128x128xbf16>, vector<8x128xf32> -> vector<8x128xf32>
      %556 = vector.broadcast %551 : vector<1x128xf32> to vector<8x128xf32>
      %557 = arith.addf %555, %556 : vector<8x128xf32>
      %c0_134 = arith.constant 0 : index
      %c0_135 = arith.constant 0 : index
      %558 = vector.load %arg10[%c0_134, %c0_135] : memref<8x128xf32, #tpu.memory_space<vmem>>, vector<8x128xf32>
      tpu.vector_store %arg10[%c0_134, %c0_135], %557 {strides = array<i32>} : memref<8x128xf32, #tpu.memory_space<vmem>>, vector<8x128xf32>,
    } else {
    }
    return
  }
  func.func @transform_0(%arg0: i32) -> (i32, i32, i32) {
    %c0_i32 = arith.constant 0 : i32
    %c0_i32_0 = arith.constant 0 : i32
    %c0_i32_1 = arith.constant 0 : i32
    return %arg0, %c0_i32, %c0_i32_0 : i32, i32, i32
  }
  func.func @transform_1(%arg0: i32) -> (i32, i32) {
    %c0_i32 = arith.constant 0 : i32
    %c0_i32_0 = arith.constant 0 : i32
    %c0_i32_1 = arith.constant 0 : i32
    return %c0_i32, %c0_i32_0 : i32, i32
  }
  func.func @transform_2(%arg0: i32) -> (i32, i32) {
    %c0_i32 = arith.constant 0 : i32
    %c0_i32_0 = arith.constant 0 : i32
    %c0_i32_1 = arith.constant 0 : i32
    return %c0_i32, %c0_i32_0 : i32, i32
  }
  func.func @transform_3(%arg0: i32) -> (i32, i32) {
    %c0_i32 = arith.constant 0 : i32
    %c0_i32_0 = arith.constant 0 : i32
    %c0_i32_1 = arith.constant 0 : i32
    return %c0_i32, %c0_i32_0 : i32, i32
  }
  func.func @transform_4(%arg0: i32) -> (i32, i32) {
    %c0_i32 = arith.constant 0 : i32
    %c0_i32_0 = arith.constant 0 : i32
    %c0_i32_1 = arith.constant 0 : i32
    return %c0_i32, %c0_i32_0 : i32, i32
  }
  func.func @transform_5(%arg0: i32) -> (i32, i32) {
    %c0_i32 = arith.constant 0 : i32
    %c0_i32_0 = arith.constant 0 : i32
    %c0_i32_1 = arith.constant 0 : i32
    return %c0_i32, %c0_i32_0 : i32, i32
  }
  func.func @transform_6(%arg0: i32) -> (i32, i32) {
    %c0_i32 = arith.constant 0 : i32
    %c0_i32_0 = arith.constant 0 : i32
    %c0_i32_1 = arith.constant 0 : i32
    return %c0_i32, %c0_i32_0 : i32, i32
  }
  func.func @transform_7(%arg0: i32) -> (i32, i32) {
    %c0_i32 = arith.constant 0 : i32
    %c0_i32_0 = arith.constant 0 : i32
    %c0_i32_1 = arith.constant 0 : i32
    return %c0_i32, %c0_i32_0 : i32, i32
  }
  func.func @transform_8(%arg0: i32) -> (i32, i32) {
    %c0_i32 = arith.constant 0 : i32
    %c0_i32_0 = arith.constant 0 : i32
    %c0_i32_1 = arith.constant 0 : i32
    return %c0_i32, %c0_i32_0 : i32, i32
  }
  func.func @transform_9(%arg0: i32) -> (i32, i32) {
    %c0_i32 = arith.constant 0 : i32
    %c0_i32_0 = arith.constant 0 : i32
    %c0_i32_1 = arith.constant 0 : i32
    return %c0_i32, %c0_i32_0 : i32, i32
  }
}

</mosaic_0001>

<llo_original>
// kernel: tpu_custom_call.1
$region0: #{tpu_custom_call.1}
  #allocation0 [shape = 'u32[]', space=smem, size = 0x4, offset = 0x4, fixed_abs, tag = 'smem constant byte address 0x4 - core index']
  #allocation1 [shape = 'u32[72,128]{1,0:T(1,128)}', space=vmem, size = 0x9000, scoped, tag = 'internal scratch']
  #allocation2 [shape = 'f32[2,8,128]{2,1,0:T(8,128)}', space=vmem, size = 0x2000, scoped, tag = 'scratch operand']
  #allocation3 [shape = 'f32[2,8,128]{2,1,0:T(8,128)}', space=vmem, size = 0x2000, scoped, tag = 'scratch operand']
  #allocation4 [shape = 'f32[8,8,128]{2,1,0:T(8,128)}', space=vmem, size = 0x8000, scoped, tag = 'scratch operand']
  %s0 = inlined_call_operand.hbm [shape: f32[8,8,16], index: 0, kind: input, shape index: {}]
  %s1 = inlined_call_operand.hbm [shape: bf16[16,512], index: 1, kind: input, shape index: {}]
  %s2 = inlined_call_operand.hbm [shape: bf16[128,512], index: 2, kind: input, shape index: {}]
  %s3 = inlined_call_operand.hbm [shape: f32[1,512], index: 3, kind: input, shape index: {}]
  %s4 = inlined_call_operand.hbm [shape: bf16[128,512], index: 4, kind: input, shape index: {}]
  %s5 = inlined_call_operand.hbm [shape: bf16[128,512], index: 5, kind: input, shape index: {}]
  %s6 = inlined_call_operand.vmem [shape: f32[1,512], index: 6, kind: input, shape index: {}]
  %s7 = inlined_call_operand.hbm [shape: bf16[128,128], index: 7, kind: input, shape index: {}]
  %s8 = inlined_call_operand.vmem [shape: f32[1,128], index: 8, kind: input, shape index: {}]
  %s9 = inlined_call_operand.hbm [shape: f32[8,128], index: 9, kind: output, shape index: {}]
  %s10 = sld [smem:[#allocation0]]
  $region82: #{tpu_custom_call.1} parent=0
    _
  %s12 = ssub.s32 1, %s10
  %s13 = scalar_select 0, %s12, %s10
  $region1: #{tpu_custom_call.1} parent=0
    #allocation5 [shape = 'u8[32768]{0}', space=vmem, size = 0x8000, scoped, tag = 'input window, operand 0, single buffered']
    #allocation6 [shape = 's32[1]{0}', space=sflag, size = 0x4, scoped, tag = 'scoped memory for tpu_custom_call.1']
    #allocation7 [shape = 's32[1]{0}', space=sflag, size = 0x4, scoped, tag = 'scoped memory for tpu_custom_call.1']
    #allocation8 [shape = 'u8[16384]{0}', space=vmem, size = 0x4000, scoped, tag = 'input window, operand 1, single buffered']
    #allocation9 [shape = 's32[1]{0}', space=sflag, size = 0x4, scoped, tag = 'scoped memory for tpu_custom_call.1']
    #allocation10 [shape = 'u8[131072]{0}', space=vmem, size = 0x20000, scoped, tag = 'input window, operand 2, single buffered']
    #allocation11 [shape = 'u8[2048]{0}', space=vmem, size = 0x800, scoped, tag = 'input window, operand 3, single buffered']
    #allocation12 [shape = 's32[1]{0}', space=sflag, size = 0x4, scoped, tag = 'scoped memory for tpu_custom_call.1']
    #allocation13 [shape = 'u8[131072]{0}', space=vmem, size = 0x20000, scoped, tag = 'input window, operand 4, single buffered']
    #allocation14 [shape = 'u8[131072]{0}', space=vmem, size = 0x20000, scoped, tag = 'input window, operand 5, single buffered']
    #allocation15 [shape = 's32[1]{0}', space=sflag, size = 0x4, scoped, tag = 'scoped memory for tpu_custom_call.1']
    #allocation16 [shape = 'u8[32768]{0}', space=vmem, size = 0x8000, scoped, tag = 'input window, operand 7, single buffered']
    #allocation17 [shape = 'u8[4096]{0}', space=vmem, size = 0x1000, scoped, tag = 'output window, operand 0, single buffered']
    %14 = vsyncpa [#allocation6], 0
    %15 = vsyncpa [#allocation9], 0
    %16 = vsyncpa [#allocation12], 0
    %17 = vsyncpa [#allocation15], 0
    %18 = vsyncpa [#allocation7], 0
    // Predicated region
    $region2: #{tpu_custom_call.1} parent=1 // pred_check
      _
    $region3: #{tpu_custom_call.1} parent=1 // pred_check_branch
      %20 = sbr.rel (0) target = $region5
    $region4: #{tpu_custom_call.1} parent=1 // pred_region
      %22 = vsyncadd [#allocation6], 0
      %s23 = sshll.u32 %s0, 4
      %s24 = int_to_ptr.hbm [resolvable:$true] %s23
      %s25 = sshll.u32 [#allocation5], 4
      %s26 = int_to_ptr.vmem [resolvable:$true] %s25
      %31 = dma.hbm_to_vmem [thread:$0]  %s24, 1024, %s26, [#allocation6], 128, 128, 8
    $region5: #{tpu_custom_call.1} parent=1 // pred_fallthru
      _
    // Predicated region
    $region6: #{tpu_custom_call.1} parent=1 // pred_check
      _
    $region7: #{tpu_custom_call.1} parent=1 // pred_check_branch
      %33 = sbr.rel (0) target = $region9
    $region8: #{tpu_custom_call.1} parent=1 // pred_region
      %35 = vsyncadd [#allocation9], 0
      %s36 = sshll.u32 %s1, 4
      %s37 = int_to_ptr.hbm [resolvable:$true] %s36
      %s38 = sshll.u32 [#allocation8], 4
      %s39 = int_to_ptr.vmem [resolvable:$true] %s38
      %44 = dma.hbm_to_vmem [thread:$0]  %s37, 512, %s39, [#allocation9], 256, 256, 16
    $region9: #{tpu_custom_call.1} parent=1 // pred_fallthru
      _
    // Predicated region
    $region10: #{tpu_custom_call.1} parent=1 // pred_check
      _
    $region11: #{tpu_custom_call.1} parent=1 // pred_check_branch
      %46 = sbr.rel (0) target = $region13
    $region12: #{tpu_custom_call.1} parent=1 // pred_region
      %48 = vsyncadd [#allocation9], 0
      %s49 = sshll.u32 %s2, 4
      %s50 = int_to_ptr.hbm [resolvable:$true] %s49
      %s51 = sshll.u32 [#allocation10], 4
      %s52 = int_to_ptr.vmem [resolvable:$true] %s51
      %57 = dma.hbm_to_vmem [thread:$0]  %s50, 4096, %s52, [#allocation9], 256, 256, 16
    $region13: #{tpu_custom_call.1} parent=1 // pred_fallthru
      _
    // Predicated region
    $region14: #{tpu_custom_call.1} parent=1 // pred_check
      _
    $region15: #{tpu_custom_call.1} parent=1 // pred_check_branch
      %59 = sbr.rel (0) target = $region17
    $region16: #{tpu_custom_call.1} parent=1 // pred_region
      %61 = vsyncadd [#allocation12], 0
      %s63 = sshll.u32 %s3, 4
      %s64 = int_to_ptr.hbm [resolvable:$true] %s63
      %s65 = sshll.u32 [#allocation11], 4
      %s66 = int_to_ptr.vmem [resolvable:$true] %s65
      %68 = dma.hbm_to_vmem [thread:$0]  %s64, 64, %s66, [#allocation12]
    $region17: #{tpu_custom_call.1} parent=1 // pred_fallthru
      _
    // Predicated region
    $region18: #{tpu_custom_call.1} parent=1 // pred_check
      _
    $region19: #{tpu_custom_call.1} parent=1 // pred_check_branch
      %70 = sbr.rel (0) target = $region21
    $region20: #{tpu_custom_call.1} parent=1 // pred_region
      %72 = vsyncadd [#allocation12], 0
      %s73 = sshll.u32 %s4, 4
      %s74 = int_to_ptr.hbm [resolvable:$true] %s73
      %s75 = sshll.u32 [#allocation13], 4
      %s76 = int_to_ptr.vmem [resolvable:$true] %s75
      %81 = dma.hbm_to_vmem [thread:$0]  %s74, 4096, %s76, [#allocation12], 256, 256, 16
    $region21: #{tpu_custom_call.1} parent=1 // pred_fallthru
      _
    // Predicated region
    $region22: #{tpu_custom_call.1} parent=1 // pred_check
      _
    $region23: #{tpu_custom_call.1} parent=1 // pred_check_branch
      %83 = sbr.rel (0) target = $region25
    $region24: #{tpu_custom_call.1} parent=1 // pred_region
      %85 = vsyncadd [#allocation15], 0
      %s86 = sshll.u32 %s5, 4
      %s87 = int_to_ptr.hbm [resolvable:$true] %s86
      %s88 = sshll.u32 [#allocation14], 4
      %s89 = int_to_ptr.vmem [resolvable:$true] %s88
      %94 = dma.hbm_to_vmem [thread:$0]  %s87, 4096, %s89, [#allocation15], 256, 256, 16
    $region25: #{tpu_custom_call.1} parent=1 // pred_fallthru
      _
    // Predicated region
    $region26: #{tpu_custom_call.1} parent=1 // pred_check
      _
    $region27: #{tpu_custom_call.1} parent=1 // pred_check_branch
      %96 = sbr.rel (0) target = $region29
    $region28: #{tpu_custom_call.1} parent=1 // pred_region
      _
    $region29: #{tpu_custom_call.1} parent=1 // pred_fallthru
      _
    // Predicated region
    $region30: #{tpu_custom_call.1} parent=1 // pred_check
      _
    $region31: #{tpu_custom_call.1} parent=1 // pred_check_branch
      %98 = sbr.rel (0) target = $region33
    $region32: #{tpu_custom_call.1} parent=1 // pred_region
      %100 = vsyncadd [#allocation15], 0
      %s101 = sshll.u32 %s7, 4
      %s102 = int_to_ptr.hbm [resolvable:$true] %s101
      %s103 = sshll.u32 [#allocation16], 4
      %s104 = int_to_ptr.vmem [resolvable:$true] %s103
      %109 = dma.hbm_to_vmem [thread:$0]  %s102, 1024, %s104, [#allocation15], 64, 64, 4
    $region33: #{tpu_custom_call.1} parent=1 // pred_fallthru
      _
    // Predicated region
    $region34: #{tpu_custom_call.1} parent=1 // pred_check
      _
    $region35: #{tpu_custom_call.1} parent=1 // pred_check_branch
      %111 = sbr.rel (0) target = $region37
    $region36: #{tpu_custom_call.1} parent=1 // pred_region
      _
    $region37: #{tpu_custom_call.1} parent=1 // pred_fallthru
      _
    // Predicated region
    $region38: #{tpu_custom_call.1} parent=1 // pred_check
      _
    $region39: #{tpu_custom_call.1} parent=1 // pred_check_branch
      %113 = sbr.rel (0) target = $region41
    $region40: #{tpu_custom_call.1} parent=1 // pred_region
      %115 = dma.done [#allocation6], 1024
    $region41: #{tpu_custom_call.1} parent=1 // pred_fallthru
      _
    // Predicated region
    $region42: #{tpu_custom_call.1} parent=1 // pred_check
      _
    $region43: #{tpu_custom_call.1} parent=1 // pred_check_branch
      %117 = sbr.rel (0) target = $region45
    $region44: #{tpu_custom_call.1} parent=1 // pred_region
      %119 = dma.done [#allocation9], 512
    $region45: #{tpu_custom_call.1} parent=1 // pred_fallthru
      _
    // Predicated region
    $region46: #{tpu_custom_call.1} parent=1 // pred_check
      _
    $region47: #{tpu_custom_call.1} parent=1 // pred_check_branch
      %121 = sbr.rel (0) target = $region49
    $region48: #{tpu_custom_call.1} parent=1 // pred_region
      %123 = dma.done [#allocation9], 4096
    $region49: #{tpu_custom_call.1} parent=1 // pred_fallthru
      _
    // Predicated region
    $region50: #{tpu_custom_call.1} parent=1 // pred_check
      _
    $region51: #{tpu_custom_call.1} parent=1 // pred_check_branch
      %125 = sbr.rel (0) target = $region53
    $region52: #{tpu_custom_call.1} parent=1 // pred_region
      %127 = dma.done [#allocation12], 64
    $region53: #{tpu_custom_call.1} parent=1 // pred_fallthru
      _
    // Predicated region
    $region54: #{tpu_custom_call.1} parent=1 // pred_check
      _
    $region55: #{tpu_custom_call.1} parent=1 // pred_check_branch
      %129 = sbr.rel (0) target = $region57
    $region56: #{tpu_custom_call.1} parent=1 // pred_region
      %131 = dma.done [#allocation12], 4096
    $region57: #{tpu_custom_call.1} parent=1 // pred_fallthru
      _
    // Predicated region
    $region58: #{tpu_custom_call.1} parent=1 // pred_check
      _
    $region59: #{tpu_custom_call.1} parent=1 // pred_check_branch
      %133 = sbr.rel (0) target = $region61
    $region60: #{tpu_custom_call.1} parent=1 // pred_region
      %135 = dma.done [#allocation15], 4096
    $region61: #{tpu_custom_call.1} parent=1 // pred_fallthru
      _
    // Predicated region
    $region62: #{tpu_custom_call.1} parent=1 // pred_check
      _
    $region63: #{tpu_custom_call.1} parent=1 // pred_check_branch
      %137 = sbr.rel (0) target = $region65
    $region64: #{tpu_custom_call.1} parent=1 // pred_region
      %139 = dma.done [#allocation15], 1024
    $region65: #{tpu_custom_call.1} parent=1 // pred_fallthru
      _
    %p141 = scmp.eq.s32.totalorder 0, 0
    // Predicated region
    $region66: #{tpu_custom_call.1} parent=1 // pred_check
      %p142 = pneg %p141
    $region67: #{tpu_custom_call.1} parent=1 // pred_check_branch
      %144 = sbr.rel (%p142) target = $region69
    $region68: #{tpu_custom_call.1} parent=1 // pred_region
      %145 = vst [vmem:[#allocation2] sm:$0xff] 0.0
      %146 = vst [vmem:[#allocation2 + $0x8] sm:$0xff] 0.0
      %147 = vst [vmem:[#allocation3] sm:$0xff] 0.0
      %148 = vst [vmem:[#allocation3 + $0x8] sm:$0xff] 0.0
    $region69: #{tpu_custom_call.1} parent=1 // pred_fallthru
      _
    %v149 = vld [vmem:[#allocation8] sm:$0xff]
    %v150 = vld [vmem:[#allocation8 + $0x8] sm:$0xff]
    %v151 = vld [vmem:[#allocation8 + $0x10] sm:$0xff]
    %v152 = vld [vmem:[#allocation8 + $0x18] sm:$0xff]
    %v153 = vld [vmem:[#allocation10] sm:$0xff]
    %v154 = vld [vmem:[#allocation10 + $0x8] sm:$0xff]
    %v155 = vld [vmem:[#allocation10 + $0x10] sm:$0xff]
    %v156 = vld [vmem:[#allocation10 + $0x18] sm:$0xff]
    %v157 = vld [vmem:[#allocation10 + $0x20] sm:$0xff]
    %v158 = vld [vmem:[#allocation10 + $0x28] sm:$0xff]
    %v159 = vld [vmem:[#allocation10 + $0x30] sm:$0xff]
    %v160 = vld [vmem:[#allocation10 + $0x38] sm:$0xff]
    %v161 = vld [vmem:[#allocation10 + $0x40] sm:$0xff]
    %v162 = vld [vmem:[#allocation10 + $0x48] sm:$0xff]
    %v163 = vld [vmem:[#allocation10 + $0x50] sm:$0xff]
    %v164 = vld [vmem:[#allocation10 + $0x58] sm:$0xff]
    %v165 = vld [vmem:[#allocation10 + $0x60] sm:$0xff]
    %v166 = vld [vmem:[#allocation10 + $0x68] sm:$0xff]
    %v167 = vld [vmem:[#allocation10 + $0x70] sm:$0xff]
    %v168 = vld [vmem:[#allocation10 + $0x78] sm:$0xff]
    %v169 = vld [vmem:[#allocation10 + $0x80] sm:$0xff]
    %v170 = vld [vmem:[#allocation10 + $0x88] sm:$0xff]
    %v171 = vld [vmem:[#allocation10 + $0x90] sm:$0xff]
    %v172 = vld [vmem:[#allocation10 + $0x98] sm:$0xff]
    %v173 = vld [vmem:[#allocation10 + $0xa0] sm:$0xff]
    %v174 = vld [vmem:[#allocation10 + $0xa8] sm:$0xff]
    %v175 = vld [vmem:[#allocation10 + $0xb0] sm:$0xff]
    %v176 = vld [vmem:[#allocation10 + $0xb8] sm:$0xff]
    %v177 = vld [vmem:[#allocation10 + $0xc0] sm:$0xff]
    %v178 = vld [vmem:[#allocation10 + $0xc8] sm:$0xff]
    %v179 = vld [vmem:[#allocation10 + $0xd0] sm:$0xff]
    %v180 = vld [vmem:[#allocation10 + $0xd8] sm:$0xff]
    %v181 = vld [vmem:[#allocation10 + $0xe0] sm:$0xff]
    %v182 = vld [vmem:[#allocation10 + $0xe8] sm:$0xff]
    %v183 = vld [vmem:[#allocation10 + $0xf0] sm:$0xff]
    %v184 = vld [vmem:[#allocation10 + $0xf8] sm:$0xff]
    %v185 = vld [vmem:[#allocation11] sm:$0xf]
    %v186 = vld [vmem:[#allocation5] sm:$0xff]
    %v187 = vld [vmem:[#allocation5 + $0x8] sm:$0xff]
    %v188 = vld [vmem:[#allocation5 + $0x10] sm:$0xff]
    %v189 = vld [vmem:[#allocation5 + $0x18] sm:$0xff]
    %v190 = vld [vmem:[#allocation5 + $0x20] sm:$0xff]
    %v191 = vld [vmem:[#allocation5 + $0x28] sm:$0xff]
    %v192 = vld [vmem:[#allocation5 + $0x30] sm:$0xff]
    %v193 = vld [vmem:[#allocation5 + $0x38] sm:$0xff]
    %v194 = vpack.c.bf16 %v187, %v186
    %v195 = vpack.c.bf16 %v189, %v188
    %v196 = vpack.c.bf16 %v191, %v190
    %v197 = vpack.c.bf16 %v193, %v192
    %v199 = vperm.slane %v185, 0
    %v200 = vperm.slane %v185, 1
    %v201 = vperm.slane %v185, 2
    %v202 = vperm.slane %v185, 3
    %v211 = vunpack.c.l.b16 %v149
    %v212 = vunpack.c.h.b16 %v149
    %v213 = vunpack.c.l.b16 %v150
    %v214 = vunpack.c.h.b16 %v150
    %v215 = vunpack.c.l.b16 %v151
    %v216 = vunpack.c.h.b16 %v151
    %v217 = vunpack.c.l.b16 %v152
    %v218 = vunpack.c.h.b16 %v152
    %v219 = vpack.c.b16 %v215, %v211
    %v220 = vpack.c.b16 %v216, %v212
    %v221 = vpack.c.b16 %v217, %v213
    %v222 = vpack.c.b16 %v218, %v214
    %vm227 = vcmask 130048
    %v229 = vsel %vm227, %v194, 0
    %v232 = vsel %vm227, %v195, 0
    %v235 = vsel %vm227, %v196, 0
    %v238 = vsel %vm227, %v197, 0
    %240 = vmatpush.bf16.msra.mxu0 0
    %241 = vmatpush.bf16.msra.mxu0 0
    %242 = vmatpush.bf16.msra.mxu0 0
    %243 = vmatpush.bf16.msra.mxu0 0
    %244 = vmatpush.bf16.msra.mxu0 0
    %245 = vmatpush.bf16.msra.mxu0 0
    %246 = vmatpush.bf16.msra.mxu0 0
    %247 = vmatpush.bf16.msra.mxu0 %v219
    %248 = vmatmul.bf16.gmra.mxu0 %v229
    %v249 = vpop.f32.mrf.mxu0
    %v250 = vadd.f32 %v199, %v249
    %v251 = vpop.f32.mrf.mxu0
    %v252 = vadd.f32 %v199, %v251
    %253 = vmatmul.bf16.gmra.mxu0 %v232
    %v254 = vpop.f32.mrf.mxu0
    %v255 = vadd.f32 %v199, %v254
    %v256 = vpop.f32.mrf.mxu0
    %v257 = vadd.f32 %v199, %v256
    %258 = vmatmul.bf16.gmra.mxu0 %v235
    %v259 = vpop.f32.mrf.mxu0
    %v260 = vadd.f32 %v199, %v259
    %v261 = vpop.f32.mrf.mxu0
    %v262 = vadd.f32 %v199, %v261
    %263 = vmatmul.bf16.gmra.mxu0 %v238
    %v264 = vpop.f32.mrf.mxu0
    %v265 = vadd.f32 %v199, %v264
    %v266 = vpop.f32.mrf.mxu0
    %v267 = vadd.f32 %v199, %v266
    %268 = vdwg.mxu0
    %269 = vmatpush.bf16.msra.mxu0 0
    %270 = vmatpush.bf16.msra.mxu0 0
    %271 = vmatpush.bf16.msra.mxu0 0
    %272 = vmatpush.bf16.msra.mxu0 0
    %273 = vmatpush.bf16.msra.mxu0 0
    %274 = vmatpush.bf16.msra.mxu0 0
    %275 = vmatpush.bf16.msra.mxu0 0
    %276 = vmatpush.bf16.msra.mxu0 %v220
    %277 = vmatmul.bf16.gmra.mxu0 %v229
    %v278 = vpop.f32.mrf.mxu0
    %v279 = vadd.f32 %v200, %v278
    %v280 = vpop.f32.mrf.mxu0
    %v281 = vadd.f32 %v200, %v280
    %282 = vmatmul.bf16.gmra.mxu0 %v232
    %v283 = vpop.f32.mrf.mxu0
    %v284 = vadd.f32 %v200, %v283
    %v285 = vpop.f32.mrf.mxu0
    %v286 = vadd.f32 %v200, %v285
    %287 = vmatmul.bf16.gmra.mxu0 %v235
    %v288 = vpop.f32.mrf.mxu0
    %v289 = vadd.f32 %v200, %v288
    %v290 = vpop.f32.mrf.mxu0
    %v291 = vadd.f32 %v200, %v290
    %292 = vmatmul.bf16.gmra.mxu0 %v238
    %v293 = vpop.f32.mrf.mxu0
    %v294 = vadd.f32 %v200, %v293
    %v295 = vpop.f32.mrf.mxu0
    %v296 = vadd.f32 %v200, %v295
    %297 = vdwg.mxu0
    %298 = vmatpush.bf16.msra.mxu0 0
    %299 = vmatpush.bf16.msra.mxu0 0
    %300 = vmatpush.bf16.msra.mxu0 0
    %301 = vmatpush.bf16.msra.mxu0 0
    %302 = vmatpush.bf16.msra.mxu0 0
    %303 = vmatpush.bf16.msra.mxu0 0
    %304 = vmatpush.bf16.msra.mxu0 0
    %305 = vmatpush.bf16.msra.mxu0 %v221
    %306 = vmatmul.bf16.gmra.mxu0 %v229
    %v307 = vpop.f32.mrf.mxu0
    %v308 = vadd.f32 %v201, %v307
    %v309 = vpop.f32.mrf.mxu0
    %v310 = vadd.f32 %v201, %v309
    %311 = vmatmul.bf16.gmra.mxu0 %v232
    %v312 = vpop.f32.mrf.mxu0
    %v313 = vadd.f32 %v201, %v312
    %v314 = vpop.f32.mrf.mxu0
    %v315 = vadd.f32 %v201, %v314
    %316 = vmatmul.bf16.gmra.mxu0 %v235
    %v317 = vpop.f32.mrf.mxu0
    %v318 = vadd.f32 %v201, %v317
    %v319 = vpop.f32.mrf.mxu0
    %v320 = vadd.f32 %v201, %v319
    %321 = vmatmul.bf16.gmra.mxu0 %v238
    %v322 = vpop.f32.mrf.mxu0
    %v323 = vadd.f32 %v201, %v322
    %v324 = vpop.f32.mrf.mxu0
    %v325 = vadd.f32 %v201, %v324
    %326 = vdwg.mxu0
    %327 = vmatpush.bf16.msra.mxu0 0
    %328 = vmatpush.bf16.msra.mxu0 0
    %329 = vmatpush.bf16.msra.mxu0 0
    %330 = vmatpush.bf16.msra.mxu0 0
    %331 = vmatpush.bf16.msra.mxu0 0
    %332 = vmatpush.bf16.msra.mxu0 0
    %333 = vmatpush.bf16.msra.mxu0 0
    %334 = vmatpush.bf16.msra.mxu0 %v222
    %335 = vmatmul.bf16.gmra.mxu0 %v229
    %v336 = vpop.f32.mrf.mxu0
    %v337 = vadd.f32 %v202, %v336
    %v338 = vpop.f32.mrf.mxu0
    %v339 = vadd.f32 %v202, %v338
    %340 = vmatmul.bf16.gmra.mxu0 %v232
    %v341 = vpop.f32.mrf.mxu0
    %v342 = vadd.f32 %v202, %v341
    %v343 = vpop.f32.mrf.mxu0
    %v344 = vadd.f32 %v202, %v343
    %345 = vmatmul.bf16.gmra.mxu0 %v235
    %v346 = vpop.f32.mrf.mxu0
    %v347 = vadd.f32 %v202, %v346
    %v348 = vpop.f32.mrf.mxu0
    %v349 = vadd.f32 %v202, %v348
    %350 = vmatmul.bf16.gmra.mxu0 %v238
    %v351 = vpop.f32.mrf.mxu0
    %v352 = vadd.f32 %v202, %v351
    %v353 = vpop.f32.mrf.mxu0
    %v354 = vadd.f32 %v202, %v353
    %355 = vdwg.mxu0
    %v356 = vld [vmem:[#allocation2] sm:$0xff]
    %v357 = vld [vmem:[#allocation3] sm:$0xff]
    %v358 = vpack.c.bf16 %v356, %v356
    %v391 = vunpack.c.l.b16 %v153
    %v392 = vunpack.c.h.b16 %v153
    %v393 = vunpack.c.l.b16 %v154
    %v394 = vunpack.c.h.b16 %v154
    %v395 = vunpack.c.l.b16 %v155
    %v396 = vunpack.c.h.b16 %v155
    %v397 = vunpack.c.l.b16 %v156
    %v398 = vunpack.c.h.b16 %v156
    %v399 = vunpack.c.l.b16 %v157
    %v400 = vunpack.c.h.b16 %v157
    %v401 = vunpack.c.l.b16 %v158
    %v402 = vunpack.c.h.b16 %v158
    %v403 = vunpack.c.l.b16 %v159
    %v404 = vunpack.c.h.b16 %v159
    %v405 = vunpack.c.l.b16 %v160
    %v406 = vunpack.c.h.b16 %v160
    %v407 = vunpack.c.l.b16 %v161
    %v408 = vunpack.c.h.b16 %v161
    %v409 = vunpack.c.l.b16 %v162
    %v410 = vunpack.c.h.b16 %v162
    %v411 = vunpack.c.l.b16 %v163
    %v412 = vunpack.c.h.b16 %v163
    %v413 = vunpack.c.l.b16 %v164
    %v414 = vunpack.c.h.b16 %v164
    %v415 = vunpack.c.l.b16 %v165
    %v416 = vunpack.c.h.b16 %v165
    %v417 = vunpack.c.l.b16 %v166
    %v418 = vunpack.c.h.b16 %v166
    %v419 = vunpack.c.l.b16 %v167
    %v420 = vunpack.c.h.b16 %v167
    %v421 = vunpack.c.l.b16 %v168
    %v422 = vunpack.c.h.b16 %v168
    %v423 = vunpack.c.l.b16 %v169
    %v424 = vunpack.c.h.b16 %v169
    %v425 = vunpack.c.l.b16 %v170
    %v426 = vunpack.c.h.b16 %v170
    %v427 = vunpack.c.l.b16 %v171
    %v428 = vunpack.c.h.b16 %v171
    %v429 = vunpack.c.l.b16 %v172
    %v430 = vunpack.c.h.b16 %v172
    %v431 = vunpack.c.l.b16 %v173
    %v432 = vunpack.c.h.b16 %v173
    %v433 = vunpack.c.l.b16 %v174
    %v434 = vunpack.c.h.b16 %v174
    %v435 = vunpack.c.l.b16 %v175
    %v436 = vunpack.c.h.b16 %v175
    %v437 = vunpack.c.l.b16 %v176
    %v438 = vunpack.c.h.b16 %v176
    %v439 = vunpack.c.l.b16 %v177
    %v440 = vunpack.c.h.b16 %v177
    %v441 = vunpack.c.l.b16 %v178
    %v442 = vunpack.c.h.b16 %v178
    %v443 = vunpack.c.l.b16 %v179
    %v444 = vunpack.c.h.b16 %v179
    %v445 = vunpack.c.l.b16 %v180
    %v446 = vunpack.c.h.b16 %v180
    %v447 = vunpack.c.l.b16 %v181
    %v448 = vunpack.c.h.b16 %v181
    %v449 = vunpack.c.l.b16 %v182
    %v450 = vunpack.c.h.b16 %v182
    %v451 = vunpack.c.l.b16 %v183
    %v452 = vunpack.c.h.b16 %v183
    %v453 = vunpack.c.l.b16 %v184
    %v454 = vunpack.c.h.b16 %v184
    %v455 = vpack.c.b16 %v395, %v391
    %v456 = vpack.c.b16 %v396, %v392
    %v457 = vpack.c.b16 %v397, %v393
    %v458 = vpack.c.b16 %v398, %v394
    %v459 = vpack.c.b16 %v403, %v399
    %v460 = vpack.c.b16 %v404, %v400
    %v461 = vpack.c.b16 %v405, %v401
    %v462 = vpack.c.b16 %v406, %v402
    %v463 = vpack.c.b16 %v411, %v407
    %v464 = vpack.c.b16 %v412, %v408
    %v465 = vpack.c.b16 %v413, %v409
    %v466 = vpack.c.b16 %v414, %v410
    %v467 = vpack.c.b16 %v419, %v415
    %v468 = vpack.c.b16 %v420, %v416
    %v469 = vpack.c.b16 %v421, %v417
    %v470 = vpack.c.b16 %v422, %v418
    %v471 = vpack.c.b16 %v427, %v423
    %v472 = vpack.c.b16 %v428, %v424
    %v473 = vpack.c.b16 %v429, %v425
    %v474 = vpack.c.b16 %v430, %v426
    %v475 = vpack.c.b16 %v435, %v431
    %v476 = vpack.c.b16 %v436, %v432
    %v477 = vpack.c.b16 %v437, %v433
    %v478 = vpack.c.b16 %v438, %v434
    %v479 = vpack.c.b16 %v443, %v439
    %v480 = vpack.c.b16 %v444, %v440
    %v481 = vpack.c.b16 %v445, %v441
    %v482 = vpack.c.b16 %v446, %v442
    %v483 = vpack.c.b16 %v451, %v447
    %v484 = vpack.c.b16 %v452, %v448
    %v485 = vpack.c.b16 %v453, %v449
    %v486 = vpack.c.b16 %v454, %v450
    %519 = vmatpush.bf16.msra.mxu0 %v483
    %520 = vmatpush.bf16.msra.mxu0 %v479
    %521 = vmatpush.bf16.msra.mxu0 %v475
    %522 = vmatpush.bf16.msra.mxu0 %v471
    %523 = vmatpush.bf16.msra.mxu0 %v467
    %524 = vmatpush.bf16.msra.mxu0 %v463
    %525 = vmatpush.bf16.msra.mxu0 %v459
    %526 = vmatpush.bf16.msra.mxu0 %v455
    %527 = vmatmul.bf16.gmra.mxu0 %v358
    %v528 = vpop.f32.mrf.mxu0
    %v529 = vadd.f32 0.0, %v528
    %v530 = vpop.f32.mrf.mxu0
    %531 = vdwg.mxu0
    %532 = vmatpush.bf16.msra.mxu0 %v484
    %533 = vmatpush.bf16.msra.mxu0 %v480
    %534 = vmatpush.bf16.msra.mxu0 %v476
    %535 = vmatpush.bf16.msra.mxu0 %v472
    %536 = vmatpush.bf16.msra.mxu0 %v468
    %537 = vmatpush.bf16.msra.mxu0 %v464
    %538 = vmatpush.bf16.msra.mxu0 %v460
    %539 = vmatpush.bf16.msra.mxu0 %v456
    %540 = vmatmul.bf16.gmra.mxu0 %v358
    %v541 = vpop.f32.mrf.mxu0
    %v542 = vadd.f32 0.0, %v541
    %v543 = vpop.f32.mrf.mxu0
    %544 = vdwg.mxu0
    %545 = vmatpush.bf16.msra.mxu0 %v485
    %546 = vmatpush.bf16.msra.mxu0 %v481
    %547 = vmatpush.bf16.msra.mxu0 %v477
    %548 = vmatpush.bf16.msra.mxu0 %v473
    %549 = vmatpush.bf16.msra.mxu0 %v469
    %550 = vmatpush.bf16.msra.mxu0 %v465
    %551 = vmatpush.bf16.msra.mxu0 %v461
    %552 = vmatpush.bf16.msra.mxu0 %v457
    %553 = vmatmul.bf16.gmra.mxu0 %v358
    %v554 = vpop.f32.mrf.mxu0
    %v555 = vadd.f32 0.0, %v554
    %v556 = vpop.f32.mrf.mxu0
    %557 = vdwg.mxu0
    %558 = vmatpush.bf16.msra.mxu0 %v486
    %559 = vmatpush.bf16.msra.mxu0 %v482
    %560 = vmatpush.bf16.msra.mxu0 %v478
    %561 = vmatpush.bf16.msra.mxu0 %v474
    %562 = vmatpush.bf16.msra.mxu0 %v470
    %563 = vmatpush.bf16.msra.mxu0 %v466
    %564 = vmatpush.bf16.msra.mxu0 %v462
    %565 = vmatpush.bf16.msra.mxu0 %v458
    %566 = vmatmul.bf16.gmra.mxu0 %v358
    %v567 = vpop.f32.mrf.mxu0
    %v568 = vadd.f32 0.0, %v567
    %v569 = vpop.f32.mrf.mxu0
    %570 = vdwg.mxu0
    %v571 = vadd.f32 %v250, %v529
    %v572 = vadd.f32 %v279, %v542
    %v573 = vadd.f32 %v308, %v555
    %v574 = vadd.f32 %v337, %v568
    %v575 = vxor.u32 %v571, 2147483648
    %v576 = vmul.f32 %v575, 1.442695
    %v577 = vpow.pop %v576
    %v578 = vadd.f32 %v577, 1.0
    %v579 = vrcp.pop %v578
    %v580 = vmul.f32 %v578, %v579
    %v581 = vsub.f32 1.0, %v580
    %v582 = vmul.f32 %v579, %v581
    %v583 = vadd.f32 %v579, %v582
    %vm584 = vweird.f32 %v578
    %vm585 = vweird.f32 %v579
    %vm586 = vmor %vm584, %vm585
    %v587 = vsel %vm586, %v579, %v583
    %v588 = vand.u32 2147483647, %v578
    %vm589 = vcmp.eq.f32.partialorder %v588, 8.507059e+37
    %v590 = vand.u32 %v578, 2147483648
    %v591 = vor.u32 1.1754944e-38, %v590
    %v592 = vsel %vm589, %v591, %v587
    %v593 = vmul.f32 1.0, %v592
    %v594 = vxor.u32 %v572, 2147483648
    %v595 = vmul.f32 %v594, 1.442695
    %v596 = vpow.pop %v595
    %v597 = vadd.f32 %v596, 1.0
    %v598 = vrcp.pop %v597
    %v599 = vmul.f32 %v597, %v598
    %v600 = vsub.f32 1.0, %v599
    %v601 = vmul.f32 %v598, %v600
    %v602 = vadd.f32 %v598, %v601
    %vm603 = vweird.f32 %v597
    %vm604 = vweird.f32 %v598
    %vm605 = vmor %vm603, %vm604
    %v606 = vsel %vm605, %v598, %v602
    %v607 = vand.u32 2147483647, %v597
    %vm608 = vcmp.eq.f32.partialorder %v607, 8.507059e+37
    %v609 = vand.u32 %v597, 2147483648
    %v610 = vor.u32 1.1754944e-38, %v609
    %v611 = vsel %vm608, %v610, %v606
    %v612 = vmul.f32 1.0, %v611
    %v613 = vtanh.pop %v573
    %v614 = vxor.u32 %v574, 2147483648
    %v615 = vmul.f32 %v614, 1.442695
    %v616 = vpow.pop %v615
    %v617 = vadd.f32 %v616, 1.0
    %v618 = vrcp.pop %v617
    %v619 = vmul.f32 %v617, %v618
    %v620 = vsub.f32 1.0, %v619
    %v621 = vmul.f32 %v618, %v620
    %v622 = vadd.f32 %v618, %v621
    %vm623 = vweird.f32 %v617
    %vm624 = vweird.f32 %v618
    %vm625 = vmor %vm623, %vm624
    %v626 = vsel %vm625, %v618, %v622
    %v627 = vand.u32 2147483647, %v617
    %vm628 = vcmp.eq.f32.partialorder %v627, 8.507059e+37
    %v629 = vand.u32 %v617, 2147483648
    %v630 = vor.u32 1.1754944e-38, %v629
    %v631 = vsel %vm628, %v630, %v626
    %v632 = vmul.f32 1.0, %v631
    %v633 = vmul.f32 %v612, %v357
    %v634 = vmul.f32 %v593, %v613
    %v635 = vadd.f32 %v633, %v634
    %v636 = vtanh.pop %v635
    %v637 = vmul.f32 %v632, %v636
    %638 = vst [vmem:[#allocation4] sm:$0xff] %v637
    %v639 = vpack.c.bf16 %v637, %v637
    %640 = vmatpush.bf16.msra.mxu0 %v483
    %641 = vmatpush.bf16.msra.mxu0 %v479
    %642 = vmatpush.bf16.msra.mxu0 %v475
    %643 = vmatpush.bf16.msra.mxu0 %v471
    %644 = vmatpush.bf16.msra.mxu0 %v467
    %645 = vmatpush.bf16.msra.mxu0 %v463
    %646 = vmatpush.bf16.msra.mxu0 %v459
    %647 = vmatpush.bf16.msra.mxu0 %v455
    %648 = vmatmul.bf16.gmra.mxu0 %v639
    %v649 = vpop.f32.mrf.mxu0
    %v650 = vadd.f32 0.0, %v649
    %v651 = vpop.f32.mrf.mxu0
    %652 = vdwg.mxu0
    %653 = vmatpush.bf16.msra.mxu0 %v484
    %654 = vmatpush.bf16.msra.mxu0 %v480
    %655 = vmatpush.bf16.msra.mxu0 %v476
    %656 = vmatpush.bf16.msra.mxu0 %v472
    %657 = vmatpush.bf16.msra.mxu0 %v468
    %658 = vmatpush.bf16.msra.mxu0 %v464
    %659 = vmatpush.bf16.msra.mxu0 %v460
    %660 = vmatpush.bf16.msra.mxu0 %v456
    %661 = vmatmul.bf16.gmra.mxu0 %v639
    %v662 = vpop.f32.mrf.mxu0
    %v663 = vadd.f32 0.0, %v662
    %v664 = vpop.f32.mrf.mxu0
    %665 = vdwg.mxu0
    %666 = vmatpush.bf16.msra.mxu0 %v485
    %667 = vmatpush.bf16.msra.mxu0 %v481
    %668 = vmatpush.bf16.msra.mxu0 %v477
    %669 = vmatpush.bf16.msra.mxu0 %v473
    %670 = vmatpush.bf16.msra.mxu0 %v469
    %671 = vmatpush.bf16.msra.mxu0 %v465
    %672 = vmatpush.bf16.msra.mxu0 %v461
    %673 = vmatpush.bf16.msra.mxu0 %v457
    %674 = vmatmul.bf16.gmra.mxu0 %v639
    %v675 = vpop.f32.mrf.mxu0
    %v676 = vadd.f32 0.0, %v675
    %v677 = vpop.f32.mrf.mxu0
    %678 = vdwg.mxu0
    %679 = vmatpush.bf16.msra.mxu0 %v486
    %680 = vmatpush.bf16.msra.mxu0 %v482
    %681 = vmatpush.bf16.msra.mxu0 %v478
    %682 = vmatpush.bf16.msra.mxu0 %v474
    %683 = vmatpush.bf16.msra.mxu0 %v470
    %684 = vmatpush.bf16.msra.mxu0 %v466
    %685 = vmatpush.bf16.msra.mxu0 %v462
    %686 = vmatpush.bf16.msra.mxu0 %v458
    %687 = vmatmul.bf16.gmra.mxu0 %v639
    %v688 = vpop.f32.mrf.mxu0
    %v689 = vadd.f32 0.0, %v688
    %v690 = vpop.f32.mrf.mxu0
    %691 = vdwg.mxu0
    %v692 = vadd.f32 %v252, %v650
    %v693 = vadd.f32 %v281, %v663
    %v694 = vadd.f32 %v310, %v676
    %v695 = vadd.f32 %v339, %v689
    %v696 = vxor.u32 %v692, 2147483648
    %v697 = vmul.f32 %v696, 1.442695
    %v698 = vpow.pop %v697
    %v699 = vadd.f32 %v698, 1.0
    %v700 = vrcp.pop %v699
    %v701 = vmul.f32 %v699, %v700
    %v702 = vsub.f32 1.0, %v701
    %v703 = vmul.f32 %v700, %v702
    %v704 = vadd.f32 %v700, %v703
    %vm705 = vweird.f32 %v699
    %vm706 = vweird.f32 %v700
    %vm707 = vmor %vm705, %vm706
    %v708 = vsel %vm707, %v700, %v704
    %v709 = vand.u32 2147483647, %v699
    %vm710 = vcmp.eq.f32.partialorder %v709, 8.507059e+37
    %v711 = vand.u32 %v699, 2147483648
    %v712 = vor.u32 1.1754944e-38, %v711
    %v713 = vsel %vm710, %v712, %v708
    %v714 = vmul.f32 1.0, %v713
    %v715 = vxor.u32 %v693, 2147483648
    %v716 = vmul.f32 %v715, 1.442695
    %v717 = vpow.pop %v716
    %v718 = vadd.f32 %v717, 1.0
    %v719 = vrcp.pop %v718
    %v720 = vmul.f32 %v718, %v719
    %v721 = vsub.f32 1.0, %v720
    %v722 = vmul.f32 %v719, %v721
    %v723 = vadd.f32 %v719, %v722
    %vm724 = vweird.f32 %v718
    %vm725 = vweird.f32 %v719
    %vm726 = vmor %vm724, %vm725
    %v727 = vsel %vm726, %v719, %v723
    %v728 = vand.u32 2147483647, %v718
    %vm729 = vcmp.eq.f32.partialorder %v728, 8.507059e+37
    %v730 = vand.u32 %v718, 2147483648
    %v731 = vor.u32 1.1754944e-38, %v730
    %v732 = vsel %vm729, %v731, %v727
    %v733 = vmul.f32 1.0, %v732
    %v734 = vtanh.pop %v694
    %v735 = vxor.u32 %v695, 2147483648
    %v736 = vmul.f32 %v735, 1.442695
    %v737 = vpow.pop %v736
    %v738 = vadd.f32 %v737, 1.0
    %v739 = vrcp.pop %v738
    %v740 = vmul.f32 %v738, %v739
    %v741 = vsub.f32 1.0, %v740
    %v742 = vmul.f32 %v739, %v741
    %v743 = vadd.f32 %v739, %v742
    %vm744 = vweird.f32 %v738
    %vm745 = vweird.f32 %v739
    %vm746 = vmor %vm744, %vm745
    %v747 = vsel %vm746, %v739, %v743
    %v748 = vand.u32 2147483647, %v738
    %vm749 = vcmp.eq.f32.partialorder %v748, 8.507059e+37
    %v750 = vand.u32 %v738, 2147483648
    %v751 = vor.u32 1.1754944e-38, %v750
    %v752 = vsel %vm749, %v751, %v747
    %v753 = vmul.f32 1.0, %v752
    %v754 = vmul.f32 %v733, %v635
    %v755 = vmul.f32 %v714, %v734
    %v756 = vadd.f32 %v754, %v755
    %v757 = vtanh.pop %v756
    %v758 = vmul.f32 %v753, %v757
    %s759 = scalar_lea.vmem [#allocation4], 8
    %760 = vst [vmem:[%s759] sm:$0xff] %v758
    %v761 = vpack.c.bf16 %v758, %v758
    %762 = vmatpush.bf16.msra.mxu0 %v483
    %763 = vmatpush.bf16.msra.mxu0 %v479
    %764 = vmatpush.bf16.msra.mxu0 %v475
    %765 = vmatpush.bf16.msra.mxu0 %v471
    %766 = vmatpush.bf16.msra.mxu0 %v467
    %767 = vmatpush.bf16.msra.mxu0 %v463
    %768 = vmatpush.bf16.msra.mxu0 %v459
    %769 = vmatpush.bf16.msra.mxu0 %v455
    %770 = vmatmul.bf16.gmra.mxu0 %v761
    %v771 = vpop.f32.mrf.mxu0
    %v772 = vadd.f32 0.0, %v771
    %v773 = vpop.f32.mrf.mxu0
    %774 = vdwg.mxu0
    %775 = vmatpush.bf16.msra.mxu0 %v484
    %776 = vmatpush.bf16.msra.mxu0 %v480
    %777 = vmatpush.bf16.msra.mxu0 %v476
    %778 = vmatpush.bf16.msra.mxu0 %v472
    %779 = vmatpush.bf16.msra.mxu0 %v468
    %780 = vmatpush.bf16.msra.mxu0 %v464
    %781 = vmatpush.bf16.msra.mxu0 %v460
    %782 = vmatpush.bf16.msra.mxu0 %v456
    %783 = vmatmul.bf16.gmra.mxu0 %v761
    %v784 = vpop.f32.mrf.mxu0
    %v785 = vadd.f32 0.0, %v784
    %v786 = vpop.f32.mrf.mxu0
    %787 = vdwg.mxu0
    %788 = vmatpush.bf16.msra.mxu0 %v485
    %789 = vmatpush.bf16.msra.mxu0 %v481
    %790 = vmatpush.bf16.msra.mxu0 %v477
    %791 = vmatpush.bf16.msra.mxu0 %v473
    %792 = vmatpush.bf16.msra.mxu0 %v469
    %793 = vmatpush.bf16.msra.mxu0 %v465
    %794 = vmatpush.bf16.msra.mxu0 %v461
    %795 = vmatpush.bf16.msra.mxu0 %v457
    %796 = vmatmul.bf16.gmra.mxu0 %v761
    %v797 = vpop.f32.mrf.mxu0
    %v798 = vadd.f32 0.0, %v797
    %v799 = vpop.f32.mrf.mxu0
    %800 = vdwg.mxu0
    %801 = vmatpush.bf16.msra.mxu0 %v486
    %802 = vmatpush.bf16.msra.mxu0 %v482
    %803 = vmatpush.bf16.msra.mxu0 %v478
    %804 = vmatpush.bf16.msra.mxu0 %v474
    %805 = vmatpush.bf16.msra.mxu0 %v470
    %806 = vmatpush.bf16.msra.mxu0 %v466
    %807 = vmatpush.bf16.msra.mxu0 %v462
    %808 = vmatpush.bf16.msra.mxu0 %v458
    %809 = vmatmul.bf16.gmra.mxu0 %v761
    %v810 = vpop.f32.mrf.mxu0
    %v811 = vadd.f32 0.0, %v810
    %v812 = vpop.f32.mrf.mxu0
    %813 = vdwg.mxu0
    %v814 = vadd.f32 %v255, %v772
    %v815 = vadd.f32 %v284, %v785
    %v816 = vadd.f32 %v313, %v798
    %v817 = vadd.f32 %v342, %v811
    %v818 = vxor.u32 %v814, 2147483648
    %v819 = vmul.f32 %v818, 1.442695
    %v820 = vpow.pop %v819
    %v821 = vadd.f32 %v820, 1.0
    %v822 = vrcp.pop %v821
    %v823 = vmul.f32 %v821, %v822
    %v824 = vsub.f32 1.0, %v823
    %v825 = vmul.f32 %v822, %v824
    %v826 = vadd.f32 %v822, %v825
    %vm827 = vweird.f32 %v821
    %vm828 = vweird.f32 %v822
    %vm829 = vmor %vm827, %vm828
    %v830 = vsel %vm829, %v822, %v826
    %v831 = vand.u32 2147483647, %v821
    %vm832 = vcmp.eq.f32.partialorder %v831, 8.507059e+37
    %v833 = vand.u32 %v821, 2147483648
    %v834 = vor.u32 1.1754944e-38, %v833
    %v835 = vsel %vm832, %v834, %v830
    %v836 = vmul.f32 1.0, %v835
    %v837 = vxor.u32 %v815, 2147483648
    %v838 = vmul.f32 %v837, 1.442695
    %v839 = vpow.pop %v838
    %v840 = vadd.f32 %v839, 1.0
    %v841 = vrcp.pop %v840
    %v842 = vmul.f32 %v840, %v841
    %v843 = vsub.f32 1.0, %v842
    %v844 = vmul.f32 %v841, %v843
    %v845 = vadd.f32 %v841, %v844
    %vm846 = vweird.f32 %v840
    %vm847 = vweird.f32 %v841
    %vm848 = vmor %vm846, %vm847
    %v849 = vsel %vm848, %v841, %v845
    %v850 = vand.u32 2147483647, %v840
    %vm851 = vcmp.eq.f32.partialorder %v850, 8.507059e+37
    %v852 = vand.u32 %v840, 2147483648
    %v853 = vor.u32 1.1754944e-38, %v852
    %v854 = vsel %vm851, %v853, %v849
    %v855 = vmul.f32 1.0, %v854
    %v856 = vtanh.pop %v816
    %v857 = vxor.u32 %v817, 2147483648
    %v858 = vmul.f32 %v857, 1.442695
    %v859 = vpow.pop %v858
    %v860 = vadd.f32 %v859, 1.0
    %v861 = vrcp.pop %v860
    %v862 = vmul.f32 %v860, %v861
    %v863 = vsub.f32 1.0, %v862
    %v864 = vmul.f32 %v861, %v863
    %v865 = vadd.f32 %v861, %v864
    %vm866 = vweird.f32 %v860
    %vm867 = vweird.f32 %v861
    %vm868 = vmor %vm866, %vm867
    %v869 = vsel %vm868, %v861, %v865
    %v870 = vand.u32 2147483647, %v860
    %vm871 = vcmp.eq.f32.partialorder %v870, 8.507059e+37
    %v872 = vand.u32 %v860, 2147483648
    %v873 = vor.u32 1.1754944e-38, %v872
    %v874 = vsel %vm871, %v873, %v869
    %v875 = vmul.f32 1.0, %v874
    %v876 = vmul.f32 %v855, %v756
    %v877 = vmul.f32 %v836, %v856
    %v878 = vadd.f32 %v876, %v877
    %v879 = vtanh.pop %v878
    %v880 = vmul.f32 %v875, %v879
    %s881 = scalar_lea.vmem [#allocation4], 16
    %882 = vst [vmem:[%s881] sm:$0xff] %v880
    %v883 = vpack.c.bf16 %v880, %v880
    %884 = vmatpush.bf16.msra.mxu0 %v483
    %885 = vmatpush.bf16.msra.mxu0 %v479
    %886 = vmatpush.bf16.msra.mxu0 %v475
    %887 = vmatpush.bf16.msra.mxu0 %v471
    %888 = vmatpush.bf16.msra.mxu0 %v467
    %889 = vmatpush.bf16.msra.mxu0 %v463
    %890 = vmatpush.bf16.msra.mxu0 %v459
    %891 = vmatpush.bf16.msra.mxu0 %v455
    %892 = vmatmul.bf16.gmra.mxu0 %v883
    %v893 = vpop.f32.mrf.mxu0
    %v894 = vadd.f32 0.0, %v893
    %v895 = vpop.f32.mrf.mxu0
    %896 = vdwg.mxu0
    %897 = vmatpush.bf16.msra.mxu0 %v484
    %898 = vmatpush.bf16.msra.mxu0 %v480
    %899 = vmatpush.bf16.msra.mxu0 %v476
    %900 = vmatpush.bf16.msra.mxu0 %v472
    %901 = vmatpush.bf16.msra.mxu0 %v468
    %902 = vmatpush.bf16.msra.mxu0 %v464
    %903 = vmatpush.bf16.msra.mxu0 %v460
    %904 = vmatpush.bf16.msra.mxu0 %v456
    %905 = vmatmul.bf16.gmra.mxu0 %v883
    %v906 = vpop.f32.mrf.mxu0
    %v907 = vadd.f32 0.0, %v906
    %v908 = vpop.f32.mrf.mxu0
    %909 = vdwg.mxu0
    %910 = vmatpush.bf16.msra.mxu0 %v485
    %911 = vmatpush.bf16.msra.mxu0 %v481
    %912 = vmatpush.bf16.msra.mxu0 %v477
    %913 = vmatpush.bf16.msra.mxu0 %v473
    %914 = vmatpush.bf16.msra.mxu0 %v469
    %915 = vmatpush.bf16.msra.mxu0 %v465
    %916 = vmatpush.bf16.msra.mxu0 %v461
    %917 = vmatpush.bf16.msra.mxu0 %v457
    %918 = vmatmul.bf16.gmra.mxu0 %v883
    %v919 = vpop.f32.mrf.mxu0
    %v920 = vadd.f32 0.0, %v919
    %v921 = vpop.f32.mrf.mxu0
    %922 = vdwg.mxu0
    %923 = vmatpush.bf16.msra.mxu0 %v486
    %924 = vmatpush.bf16.msra.mxu0 %v482
    %925 = vmatpush.bf16.msra.mxu0 %v478
    %926 = vmatpush.bf16.msra.mxu0 %v474
    %927 = vmatpush.bf16.msra.mxu0 %v470
    %928 = vmatpush.bf16.msra.mxu0 %v466
    %929 = vmatpush.bf16.msra.mxu0 %v462
    %930 = vmatpush.bf16.msra.mxu0 %v458
    %931 = vmatmul.bf16.gmra.mxu0 %v883
    %v932 = vpop.f32.mrf.mxu0
    %v933 = vadd.f32 0.0, %v932
    %v934 = vpop.f32.mrf.mxu0
    %935 = vdwg.mxu0
    %v936 = vadd.f32 %v257, %v894
    %v937 = vadd.f32 %v286, %v907
    %v938 = vadd.f32 %v315, %v920
    %v939 = vadd.f32 %v344, %v933
    %v940 = vxor.u32 %v936, 2147483648
    %v941 = vmul.f32 %v940, 1.442695
    %v942 = vpow.pop %v941
    %v943 = vadd.f32 %v942, 1.0
    %v944 = vrcp.pop %v943
    %v945 = vmul.f32 %v943, %v944
    %v946 = vsub.f32 1.0, %v945
    %v947 = vmul.f32 %v944, %v946
    %v948 = vadd.f32 %v944, %v947
    %vm949 = vweird.f32 %v943
    %vm950 = vweird.f32 %v944
    %vm951 = vmor %vm949, %vm950
    %v952 = vsel %vm951, %v944, %v948
    %v953 = vand.u32 2147483647, %v943
    %vm954 = vcmp.eq.f32.partialorder %v953, 8.507059e+37
    %v955 = vand.u32 %v943, 2147483648
    %v956 = vor.u32 1.1754944e-38, %v955
    %v957 = vsel %vm954, %v956, %v952
    %v958 = vmul.f32 1.0, %v957
    %v959 = vxor.u32 %v937, 2147483648
    %v960 = vmul.f32 %v959, 1.442695
    %v961 = vpow.pop %v960
    %v962 = vadd.f32 %v961, 1.0
    %v963 = vrcp.pop %v962
    %v964 = vmul.f32 %v962, %v963
    %v965 = vsub.f32 1.0, %v964
    %v966 = vmul.f32 %v963, %v965
    %v967 = vadd.f32 %v963, %v966
    %vm968 = vweird.f32 %v962
    %vm969 = vweird.f32 %v963
    %vm970 = vmor %vm968, %vm969
    %v971 = vsel %vm970, %v963, %v967
    %v972 = vand.u32 2147483647, %v962
    %vm973 = vcmp.eq.f32.partialorder %v972, 8.507059e+37
    %v974 = vand.u32 %v962, 2147483648
    %v975 = vor.u32 1.1754944e-38, %v974
    %v976 = vsel %vm973, %v975, %v971
    %v977 = vmul.f32 1.0, %v976
    %v978 = vtanh.pop %v938
    %v979 = vxor.u32 %v939, 2147483648
    %v980 = vmul.f32 %v979, 1.442695
    %v981 = vpow.pop %v980
    %v982 = vadd.f32 %v981, 1.0
    %v983 = vrcp.pop %v982
    %v984 = vmul.f32 %v982, %v983
    %v985 = vsub.f32 1.0, %v984
    %v986 = vmul.f32 %v983, %v985
    %v987 = vadd.f32 %v983, %v986
    %vm988 = vweird.f32 %v982
    %vm989 = vweird.f32 %v983
    %vm990 = vmor %vm988, %vm989
    %v991 = vsel %vm990, %v983, %v987
    %v992 = vand.u32 2147483647, %v982
    %vm993 = vcmp.eq.f32.partialorder %v992, 8.507059e+37
    %v994 = vand.u32 %v982, 2147483648
    %v995 = vor.u32 1.1754944e-38, %v994
    %v996 = vsel %vm993, %v995, %v991
    %v997 = vmul.f32 1.0, %v996
    %v998 = vmul.f32 %v977, %v878
    %v999 = vmul.f32 %v958, %v978
    %v1000 = vadd.f32 %v998, %v999
    %v1001 = vtanh.pop %v1000
    %v1002 = vmul.f32 %v997, %v1001
    %s1003 = scalar_lea.vmem [#allocation4], 24
    %1004 = vst [vmem:[%s1003] sm:$0xff] %v1002
    %v1005 = vpack.c.bf16 %v1002, %v1002
    %1006 = vmatpush.bf16.msra.mxu0 %v483
    %1007 = vmatpush.bf16.msra.mxu0 %v479
    %1008 = vmatpush.bf16.msra.mxu0 %v475
    %1009 = vmatpush.bf16.msra.mxu0 %v471
    %1010 = vmatpush.bf16.msra.mxu0 %v467
    %1011 = vmatpush.bf16.msra.mxu0 %v463
    %1012 = vmatpush.bf16.msra.mxu0 %v459
    %1013 = vmatpush.bf16.msra.mxu0 %v455
    %1014 = vmatmul.bf16.gmra.mxu0 %v1005
    %v1015 = vpop.f32.mrf.mxu0
    %v1016 = vadd.f32 0.0, %v1015
    %v1017 = vpop.f32.mrf.mxu0
    %1018 = vdwg.mxu0
    %1019 = vmatpush.bf16.msra.mxu0 %v484
    %1020 = vmatpush.bf16.msra.mxu0 %v480
    %1021 = vmatpush.bf16.msra.mxu0 %v476
    %1022 = vmatpush.bf16.msra.mxu0 %v472
    %1023 = vmatpush.bf16.msra.mxu0 %v468
    %1024 = vmatpush.bf16.msra.mxu0 %v464
    %1025 = vmatpush.bf16.msra.mxu0 %v460
    %1026 = vmatpush.bf16.msra.mxu0 %v456
    %1027 = vmatmul.bf16.gmra.mxu0 %v1005
    %v1028 = vpop.f32.mrf.mxu0
    %v1029 = vadd.f32 0.0, %v1028
    %v1030 = vpop.f32.mrf.mxu0
    %1031 = vdwg.mxu0
    %1032 = vmatpush.bf16.msra.mxu0 %v485
    %1033 = vmatpush.bf16.msra.mxu0 %v481
    %1034 = vmatpush.bf16.msra.mxu0 %v477
    %1035 = vmatpush.bf16.msra.mxu0 %v473
    %1036 = vmatpush.bf16.msra.mxu0 %v469
    %1037 = vmatpush.bf16.msra.mxu0 %v465
    %1038 = vmatpush.bf16.msra.mxu0 %v461
    %1039 = vmatpush.bf16.msra.mxu0 %v457
    %1040 = vmatmul.bf16.gmra.mxu0 %v1005
    %v1041 = vpop.f32.mrf.mxu0
    %v1042 = vadd.f32 0.0, %v1041
    %v1043 = vpop.f32.mrf.mxu0
    %1044 = vdwg.mxu0
    %1045 = vmatpush.bf16.msra.mxu0 %v486
    %1046 = vmatpush.bf16.msra.mxu0 %v482
    %1047 = vmatpush.bf16.msra.mxu0 %v478
    %1048 = vmatpush.bf16.msra.mxu0 %v474
    %1049 = vmatpush.bf16.msra.mxu0 %v470
    %1050 = vmatpush.bf16.msra.mxu0 %v466
    %1051 = vmatpush.bf16.msra.mxu0 %v462
    %1052 = vmatpush.bf16.msra.mxu0 %v458
    %1053 = vmatmul.bf16.gmra.mxu0 %v1005
    %v1054 = vpop.f32.mrf.mxu0
    %v1055 = vadd.f32 0.0, %v1054
    %v1056 = vpop.f32.mrf.mxu0
    %1057 = vdwg.mxu0
    %v1058 = vadd.f32 %v260, %v1016
    %v1059 = vadd.f32 %v289, %v1029
    %v1060 = vadd.f32 %v318, %v1042
    %v1061 = vadd.f32 %v347, %v1055
    %v1062 = vxor.u32 %v1058, 2147483648
    %v1063 = vmul.f32 %v1062, 1.442695
    %v1064 = vpow.pop %v1063
    %v1065 = vadd.f32 %v1064, 1.0
    %v1066 = vrcp.pop %v1065
    %v1067 = vmul.f32 %v1065, %v1066
    %v1068 = vsub.f32 1.0, %v1067
    %v1069 = vmul.f32 %v1066, %v1068
    %v1070 = vadd.f32 %v1066, %v1069
    %vm1071 = vweird.f32 %v1065
    %vm1072 = vweird.f32 %v1066
    %vm1073 = vmor %vm1071, %vm1072
    %v1074 = vsel %vm1073, %v1066, %v1070
    %v1075 = vand.u32 2147483647, %v1065
    %vm1076 = vcmp.eq.f32.partialorder %v1075, 8.507059e+37
    %v1077 = vand.u32 %v1065, 2147483648
    %v1078 = vor.u32 1.1754944e-38, %v1077
    %v1079 = vsel %vm1076, %v1078, %v1074
    %v1080 = vmul.f32 1.0, %v1079
    %v1081 = vxor.u32 %v1059, 2147483648
    %v1082 = vmul.f32 %v1081, 1.442695
    %v1083 = vpow.pop %v1082
    %v1084 = vadd.f32 %v1083, 1.0
    %v1085 = vrcp.pop %v1084
    %v1086 = vmul.f32 %v1084, %v1085
    %v1087 = vsub.f32 1.0, %v1086
    %v1088 = vmul.f32 %v1085, %v1087
    %v1089 = vadd.f32 %v1085, %v1088
    %vm1090 = vweird.f32 %v1084
    %vm1091 = vweird.f32 %v1085
    %vm1092 = vmor %vm1090, %vm1091
    %v1093 = vsel %vm1092, %v1085, %v1089
    %v1094 = vand.u32 2147483647, %v1084
    %vm1095 = vcmp.eq.f32.partialorder %v1094, 8.507059e+37
    %v1096 = vand.u32 %v1084, 2147483648
    %v1097 = vor.u32 1.1754944e-38, %v1096
    %v1098 = vsel %vm1095, %v1097, %v1093
    %v1099 = vmul.f32 1.0, %v1098
    %v1100 = vtanh.pop %v1060
    %v1101 = vxor.u32 %v1061, 2147483648
    %v1102 = vmul.f32 %v1101, 1.442695
    %v1103 = vpow.pop %v1102
    %v1104 = vadd.f32 %v1103, 1.0
    %v1105 = vrcp.pop %v1104
    %v1106 = vmul.f32 %v1104, %v1105
    %v1107 = vsub.f32 1.0, %v1106
    %v1108 = vmul.f32 %v1105, %v1107
    %v1109 = vadd.f32 %v1105, %v1108
    %vm1110 = vweird.f32 %v1104
    %vm1111 = vweird.f32 %v1105
    %vm1112 = vmor %vm1110, %vm1111
    %v1113 = vsel %vm1112, %v1105, %v1109
    %v1114 = vand.u32 2147483647, %v1104
    %vm1115 = vcmp.eq.f32.partialorder %v1114, 8.507059e+37
    %v1116 = vand.u32 %v1104, 2147483648
    %v1117 = vor.u32 1.1754944e-38, %v1116
    %v1118 = vsel %vm1115, %v1117, %v1113
    %v1119 = vmul.f32 1.0, %v1118
    %v1120 = vmul.f32 %v1099, %v1000
    %v1121 = vmul.f32 %v1080, %v1100
    %v1122 = vadd.f32 %v1120, %v1121
    %v1123 = vtanh.pop %v1122
    %v1124 = vmul.f32 %v1119, %v1123
    %s1125 = scalar_lea.vmem [#allocation4], 32
    %1126 = vst [vmem:[%s1125] sm:$0xff] %v1124
    %v1127 = vpack.c.bf16 %v1124, %v1124
    %1128 = vmatpush.bf16.msra.mxu0 %v483
    %1129 = vmatpush.bf16.msra.mxu0 %v479
    %1130 = vmatpush.bf16.msra.mxu0 %v475
    %1131 = vmatpush.bf16.msra.mxu0 %v471
    %1132 = vmatpush.bf16.msra.mxu0 %v467
    %1133 = vmatpush.bf16.msra.mxu0 %v463
    %1134 = vmatpush.bf16.msra.mxu0 %v459
    %1135 = vmatpush.bf16.msra.mxu0 %v455
    %1136 = vmatmul.bf16.gmra.mxu0 %v1127
    %v1137 = vpop.f32.mrf.mxu0
    %v1138 = vadd.f32 0.0, %v1137
    %v1139 = vpop.f32.mrf.mxu0
    %1140 = vdwg.mxu0
    %1141 = vmatpush.bf16.msra.mxu0 %v484
    %1142 = vmatpush.bf16.msra.mxu0 %v480
    %1143 = vmatpush.bf16.msra.mxu0 %v476
    %1144 = vmatpush.bf16.msra.mxu0 %v472
    %1145 = vmatpush.bf16.msra.mxu0 %v468
    %1146 = vmatpush.bf16.msra.mxu0 %v464
    %1147 = vmatpush.bf16.msra.mxu0 %v460
    %1148 = vmatpush.bf16.msra.mxu0 %v456
    %1149 = vmatmul.bf16.gmra.mxu0 %v1127
    %v1150 = vpop.f32.mrf.mxu0
    %v1151 = vadd.f32 0.0, %v1150
    %v1152 = vpop.f32.mrf.mxu0
    %1153 = vdwg.mxu0
    %1154 = vmatpush.bf16.msra.mxu0 %v485
    %1155 = vmatpush.bf16.msra.mxu0 %v481
    %1156 = vmatpush.bf16.msra.mxu0 %v477
    %1157 = vmatpush.bf16.msra.mxu0 %v473
    %1158 = vmatpush.bf16.msra.mxu0 %v469
    %1159 = vmatpush.bf16.msra.mxu0 %v465
    %1160 = vmatpush.bf16.msra.mxu0 %v461
    %1161 = vmatpush.bf16.msra.mxu0 %v457
    %1162 = vmatmul.bf16.gmra.mxu0 %v1127
    %v1163 = vpop.f32.mrf.mxu0
    %v1164 = vadd.f32 0.0, %v1163
    %v1165 = vpop.f32.mrf.mxu0
    %1166 = vdwg.mxu0
    %1167 = vmatpush.bf16.msra.mxu0 %v486
    %1168 = vmatpush.bf16.msra.mxu0 %v482
    %1169 = vmatpush.bf16.msra.mxu0 %v478
    %1170 = vmatpush.bf16.msra.mxu0 %v474
    %1171 = vmatpush.bf16.msra.mxu0 %v470
    %1172 = vmatpush.bf16.msra.mxu0 %v466
    %1173 = vmatpush.bf16.msra.mxu0 %v462
    %1174 = vmatpush.bf16.msra.mxu0 %v458
    %1175 = vmatmul.bf16.gmra.mxu0 %v1127
    %v1176 = vpop.f32.mrf.mxu0
    %v1177 = vadd.f32 0.0, %v1176
    %v1178 = vpop.f32.mrf.mxu0
    %1179 = vdwg.mxu0
    %v1180 = vadd.f32 %v262, %v1138
    %v1181 = vadd.f32 %v291, %v1151
    %v1182 = vadd.f32 %v320, %v1164
    %v1183 = vadd.f32 %v349, %v1177
    %v1184 = vxor.u32 %v1180, 2147483648
    %v1185 = vmul.f32 %v1184, 1.442695
    %v1186 = vpow.pop %v1185
    %v1187 = vadd.f32 %v1186, 1.0
    %v1188 = vrcp.pop %v1187
    %v1189 = vmul.f32 %v1187, %v1188
    %v1190 = vsub.f32 1.0, %v1189
    %v1191 = vmul.f32 %v1188, %v1190
    %v1192 = vadd.f32 %v1188, %v1191
    %vm1193 = vweird.f32 %v1187
    %vm1194 = vweird.f32 %v1188
    %vm1195 = vmor %vm1193, %vm1194
    %v1196 = vsel %vm1195, %v1188, %v1192
    %v1197 = vand.u32 2147483647, %v1187
    %vm1198 = vcmp.eq.f32.partialorder %v1197, 8.507059e+37
    %v1199 = vand.u32 %v1187, 2147483648
    %v1200 = vor.u32 1.1754944e-38, %v1199
    %v1201 = vsel %vm1198, %v1200, %v1196
    %v1202 = vmul.f32 1.0, %v1201
    %v1203 = vxor.u32 %v1181, 2147483648
    %v1204 = vmul.f32 %v1203, 1.442695
    %v1205 = vpow.pop %v1204
    %v1206 = vadd.f32 %v1205, 1.0
    %v1207 = vrcp.pop %v1206
    %v1208 = vmul.f32 %v1206, %v1207
    %v1209 = vsub.f32 1.0, %v1208
    %v1210 = vmul.f32 %v1207, %v1209
    %v1211 = vadd.f32 %v1207, %v1210
    %vm1212 = vweird.f32 %v1206
    %vm1213 = vweird.f32 %v1207
    %vm1214 = vmor %vm1212, %vm1213
    %v1215 = vsel %vm1214, %v1207, %v1211
    %v1216 = vand.u32 2147483647, %v1206
    %vm1217 = vcmp.eq.f32.partialorder %v1216, 8.507059e+37
    %v1218 = vand.u32 %v1206, 2147483648
    %v1219 = vor.u32 1.1754944e-38, %v1218
    %v1220 = vsel %vm1217, %v1219, %v1215
    %v1221 = vmul.f32 1.0, %v1220
    %v1222 = vtanh.pop %v1182
    %v1223 = vxor.u32 %v1183, 2147483648
    %v1224 = vmul.f32 %v1223, 1.442695
    %v1225 = vpow.pop %v1224
    %v1226 = vadd.f32 %v1225, 1.0
    %v1227 = vrcp.pop %v1226
    %v1228 = vmul.f32 %v1226, %v1227
    %v1229 = vsub.f32 1.0, %v1228
    %v1230 = vmul.f32 %v1227, %v1229
    %v1231 = vadd.f32 %v1227, %v1230
    %vm1232 = vweird.f32 %v1226
    %vm1233 = vweird.f32 %v1227
    %vm1234 = vmor %vm1232, %vm1233
    %v1235 = vsel %vm1234, %v1227, %v1231
    %v1236 = vand.u32 2147483647, %v1226
    %vm1237 = vcmp.eq.f32.partialorder %v1236, 8.507059e+37
    %v1238 = vand.u32 %v1226, 2147483648
    %v1239 = vor.u32 1.1754944e-38, %v1238
    %v1240 = vsel %vm1237, %v1239, %v1235
    %v1241 = vmul.f32 1.0, %v1240
    %v1242 = vmul.f32 %v1221, %v1122
    %v1243 = vmul.f32 %v1202, %v1222
    %v1244 = vadd.f32 %v1242, %v1243
    %v1245 = vtanh.pop %v1244
    %v1246 = vmul.f32 %v1241, %v1245
    %s1247 = scalar_lea.vmem [#allocation4], 40
    %1248 = vst [vmem:[%s1247] sm:$0xff] %v1246
    %v1249 = vpack.c.bf16 %v1246, %v1246
    %1250 = vmatpush.bf16.msra.mxu0 %v483
    %1251 = vmatpush.bf16.msra.mxu0 %v479
    %1252 = vmatpush.bf16.msra.mxu0 %v475
    %1253 = vmatpush.bf16.msra.mxu0 %v471
    %1254 = vmatpush.bf16.msra.mxu0 %v467
    %1255 = vmatpush.bf16.msra.mxu0 %v463
    %1256 = vmatpush.bf16.msra.mxu0 %v459
    %1257 = vmatpush.bf16.msra.mxu0 %v455
    %1258 = vmatmul.bf16.gmra.mxu0 %v1249
    %v1259 = vpop.f32.mrf.mxu0
    %v1260 = vadd.f32 0.0, %v1259
    %v1261 = vpop.f32.mrf.mxu0
    %1262 = vdwg.mxu0
    %1263 = vmatpush.bf16.msra.mxu0 %v484
    %1264 = vmatpush.bf16.msra.mxu0 %v480
    %1265 = vmatpush.bf16.msra.mxu0 %v476
    %1266 = vmatpush.bf16.msra.mxu0 %v472
    %1267 = vmatpush.bf16.msra.mxu0 %v468
    %1268 = vmatpush.bf16.msra.mxu0 %v464
    %1269 = vmatpush.bf16.msra.mxu0 %v460
    %1270 = vmatpush.bf16.msra.mxu0 %v456
    %1271 = vmatmul.bf16.gmra.mxu0 %v1249
    %v1272 = vpop.f32.mrf.mxu0
    %v1273 = vadd.f32 0.0, %v1272
    %v1274 = vpop.f32.mrf.mxu0
    %1275 = vdwg.mxu0
    %1276 = vmatpush.bf16.msra.mxu0 %v485
    %1277 = vmatpush.bf16.msra.mxu0 %v481
    %1278 = vmatpush.bf16.msra.mxu0 %v477
    %1279 = vmatpush.bf16.msra.mxu0 %v473
    %1280 = vmatpush.bf16.msra.mxu0 %v469
    %1281 = vmatpush.bf16.msra.mxu0 %v465
    %1282 = vmatpush.bf16.msra.mxu0 %v461
    %1283 = vmatpush.bf16.msra.mxu0 %v457
    %1284 = vmatmul.bf16.gmra.mxu0 %v1249
    %v1285 = vpop.f32.mrf.mxu0
    %v1286 = vadd.f32 0.0, %v1285
    %v1287 = vpop.f32.mrf.mxu0
    %1288 = vdwg.mxu0
    %1289 = vmatpush.bf16.msra.mxu0 %v486
    %1290 = vmatpush.bf16.msra.mxu0 %v482
    %1291 = vmatpush.bf16.msra.mxu0 %v478
    %1292 = vmatpush.bf16.msra.mxu0 %v474
    %1293 = vmatpush.bf16.msra.mxu0 %v470
    %1294 = vmatpush.bf16.msra.mxu0 %v466
    %1295 = vmatpush.bf16.msra.mxu0 %v462
    %1296 = vmatpush.bf16.msra.mxu0 %v458
    %1297 = vmatmul.bf16.gmra.mxu0 %v1249
    %v1298 = vpop.f32.mrf.mxu0
    %v1299 = vadd.f32 0.0, %v1298
    %v1300 = vpop.f32.mrf.mxu0
    %1301 = vdwg.mxu0
    %v1302 = vadd.f32 %v265, %v1260
    %v1303 = vadd.f32 %v294, %v1273
    %v1304 = vadd.f32 %v323, %v1286
    %v1305 = vadd.f32 %v352, %v1299
    %v1306 = vxor.u32 %v1302, 2147483648
    %v1307 = vmul.f32 %v1306, 1.442695
    %v1308 = vpow.pop %v1307
    %v1309 = vadd.f32 %v1308, 1.0
    %v1310 = vrcp.pop %v1309
    %v1311 = vmul.f32 %v1309, %v1310
    %v1312 = vsub.f32 1.0, %v1311
    %v1313 = vmul.f32 %v1310, %v1312
    %v1314 = vadd.f32 %v1310, %v1313
    %vm1315 = vweird.f32 %v1309
    %vm1316 = vweird.f32 %v1310
    %vm1317 = vmor %vm1315, %vm1316
    %v1318 = vsel %vm1317, %v1310, %v1314
    %v1319 = vand.u32 2147483647, %v1309
    %vm1320 = vcmp.eq.f32.partialorder %v1319, 8.507059e+37
    %v1321 = vand.u32 %v1309, 2147483648
    %v1322 = vor.u32 1.1754944e-38, %v1321
    %v1323 = vsel %vm1320, %v1322, %v1318
    %v1324 = vmul.f32 1.0, %v1323
    %v1325 = vxor.u32 %v1303, 2147483648
    %v1326 = vmul.f32 %v1325, 1.442695
    %v1327 = vpow.pop %v1326
    %v1328 = vadd.f32 %v1327, 1.0
    %v1329 = vrcp.pop %v1328
    %v1330 = vmul.f32 %v1328, %v1329
    %v1331 = vsub.f32 1.0, %v1330
    %v1332 = vmul.f32 %v1329, %v1331
    %v1333 = vadd.f32 %v1329, %v1332
    %vm1334 = vweird.f32 %v1328
    %vm1335 = vweird.f32 %v1329
    %vm1336 = vmor %vm1334, %vm1335
    %v1337 = vsel %vm1336, %v1329, %v1333
    %v1338 = vand.u32 2147483647, %v1328
    %vm1339 = vcmp.eq.f32.partialorder %v1338, 8.507059e+37
    %v1340 = vand.u32 %v1328, 2147483648
    %v1341 = vor.u32 1.1754944e-38, %v1340
    %v1342 = vsel %vm1339, %v1341, %v1337
    %v1343 = vmul.f32 1.0, %v1342
    %v1344 = vtanh.pop %v1304
    %v1345 = vxor.u32 %v1305, 2147483648
    %v1346 = vmul.f32 %v1345, 1.442695
    %v1347 = vpow.pop %v1346
    %v1348 = vadd.f32 %v1347, 1.0
    %v1349 = vrcp.pop %v1348
    %v1350 = vmul.f32 %v1348, %v1349
    %v1351 = vsub.f32 1.0, %v1350
    %v1352 = vmul.f32 %v1349, %v1351
    %v1353 = vadd.f32 %v1349, %v1352
    %vm1354 = vweird.f32 %v1348
    %vm1355 = vweird.f32 %v1349
    %vm1356 = vmor %vm1354, %vm1355
    %v1357 = vsel %vm1356, %v1349, %v1353
    %v1358 = vand.u32 2147483647, %v1348
    %vm1359 = vcmp.eq.f32.partialorder %v1358, 8.507059e+37
    %v1360 = vand.u32 %v1348, 2147483648
    %v1361 = vor.u32 1.1754944e-38, %v1360
    %v1362 = vsel %vm1359, %v1361, %v1357
    %v1363 = vmul.f32 1.0, %v1362
    %v1364 = vmul.f32 %v1343, %v1244
    %v1365 = vmul.f32 %v1324, %v1344
    %v1366 = vadd.f32 %v1364, %v1365
    %v1367 = vtanh.pop %v1366
    %v1368 = vmul.f32 %v1363, %v1367
    %s1369 = scalar_lea.vmem [#allocation4], 48
    %1370 = vst [vmem:[%s1369] sm:$0xff] %v1368
    %v1371 = vpack.c.bf16 %v1368, %v1368
    %1372 = vmatpush.bf16.msra.mxu0 %v483
    %1373 = vmatpush.bf16.msra.mxu0 %v479
    %1374 = vmatpush.bf16.msra.mxu0 %v475
    %1375 = vmatpush.bf16.msra.mxu0 %v471
    %1376 = vmatpush.bf16.msra.mxu0 %v467
    %1377 = vmatpush.bf16.msra.mxu0 %v463
    %1378 = vmatpush.bf16.msra.mxu0 %v459
    %1379 = vmatpush.bf16.msra.mxu0 %v455
    %1380 = vmatmul.bf16.gmra.mxu0 %v1371
    %v1381 = vpop.f32.mrf.mxu0
    %v1382 = vadd.f32 0.0, %v1381
    %v1383 = vpop.f32.mrf.mxu0
    %1384 = vdwg.mxu0
    %1385 = vmatpush.bf16.msra.mxu0 %v484
    %1386 = vmatpush.bf16.msra.mxu0 %v480
    %1387 = vmatpush.bf16.msra.mxu0 %v476
    %1388 = vmatpush.bf16.msra.mxu0 %v472
    %1389 = vmatpush.bf16.msra.mxu0 %v468
    %1390 = vmatpush.bf16.msra.mxu0 %v464
    %1391 = vmatpush.bf16.msra.mxu0 %v460
    %1392 = vmatpush.bf16.msra.mxu0 %v456
    %1393 = vmatmul.bf16.gmra.mxu0 %v1371
    %v1394 = vpop.f32.mrf.mxu0
    %v1395 = vadd.f32 0.0, %v1394
    %v1396 = vpop.f32.mrf.mxu0
    %1397 = vdwg.mxu0
    %1398 = vmatpush.bf16.msra.mxu0 %v485
    %1399 = vmatpush.bf16.msra.mxu0 %v481
    %1400 = vmatpush.bf16.msra.mxu0 %v477
    %1401 = vmatpush.bf16.msra.mxu0 %v473
    %1402 = vmatpush.bf16.msra.mxu0 %v469
    %1403 = vmatpush.bf16.msra.mxu0 %v465
    %1404 = vmatpush.bf16.msra.mxu0 %v461
    %1405 = vmatpush.bf16.msra.mxu0 %v457
    %1406 = vmatmul.bf16.gmra.mxu0 %v1371
    %v1407 = vpop.f32.mrf.mxu0
    %v1408 = vadd.f32 0.0, %v1407
    %v1409 = vpop.f32.mrf.mxu0
    %1410 = vdwg.mxu0
    %1411 = vmatpush.bf16.msra.mxu0 %v486
    %1412 = vmatpush.bf16.msra.mxu0 %v482
    %1413 = vmatpush.bf16.msra.mxu0 %v478
    %1414 = vmatpush.bf16.msra.mxu0 %v474
    %1415 = vmatpush.bf16.msra.mxu0 %v470
    %1416 = vmatpush.bf16.msra.mxu0 %v466
    %1417 = vmatpush.bf16.msra.mxu0 %v462
    %1418 = vmatpush.bf16.msra.mxu0 %v458
    %1419 = vmatmul.bf16.gmra.mxu0 %v1371
    %v1420 = vpop.f32.mrf.mxu0
    %v1421 = vadd.f32 0.0, %v1420
    %v1422 = vpop.f32.mrf.mxu0
    %1423 = vdwg.mxu0
    %v1424 = vadd.f32 %v267, %v1382
    %v1425 = vadd.f32 %v296, %v1395
    %v1426 = vadd.f32 %v325, %v1408
    %v1427 = vadd.f32 %v354, %v1421
    %v1428 = vxor.u32 %v1424, 2147483648
    %v1429 = vmul.f32 %v1428, 1.442695
    %v1430 = vpow.pop %v1429
    %v1431 = vadd.f32 %v1430, 1.0
    %v1432 = vrcp.pop %v1431
    %v1433 = vmul.f32 %v1431, %v1432
    %v1434 = vsub.f32 1.0, %v1433
    %v1435 = vmul.f32 %v1432, %v1434
    %v1436 = vadd.f32 %v1432, %v1435
    %vm1437 = vweird.f32 %v1431
    %vm1438 = vweird.f32 %v1432
    %vm1439 = vmor %vm1437, %vm1438
    %v1440 = vsel %vm1439, %v1432, %v1436
    %v1441 = vand.u32 2147483647, %v1431
    %vm1442 = vcmp.eq.f32.partialorder %v1441, 8.507059e+37
    %v1443 = vand.u32 %v1431, 2147483648
    %v1444 = vor.u32 1.1754944e-38, %v1443
    %v1445 = vsel %vm1442, %v1444, %v1440
    %v1446 = vmul.f32 1.0, %v1445
    %v1447 = vxor.u32 %v1425, 2147483648
    %v1448 = vmul.f32 %v1447, 1.442695
    %v1449 = vpow.pop %v1448
    %v1450 = vadd.f32 %v1449, 1.0
    %v1451 = vrcp.pop %v1450
    %v1452 = vmul.f32 %v1450, %v1451
    %v1453 = vsub.f32 1.0, %v1452
    %v1454 = vmul.f32 %v1451, %v1453
    %v1455 = vadd.f32 %v1451, %v1454
    %vm1456 = vweird.f32 %v1450
    %vm1457 = vweird.f32 %v1451
    %vm1458 = vmor %vm1456, %vm1457
    %v1459 = vsel %vm1458, %v1451, %v1455
    %v1460 = vand.u32 2147483647, %v1450
    %vm1461 = vcmp.eq.f32.partialorder %v1460, 8.507059e+37
    %v1462 = vand.u32 %v1450, 2147483648
    %v1463 = vor.u32 1.1754944e-38, %v1462
    %v1464 = vsel %vm1461, %v1463, %v1459
    %v1465 = vmul.f32 1.0, %v1464
    %v1466 = vtanh.pop %v1426
    %v1467 = vxor.u32 %v1427, 2147483648
    %v1468 = vmul.f32 %v1467, 1.442695
    %v1469 = vpow.pop %v1468
    %v1470 = vadd.f32 %v1469, 1.0
    %v1471 = vrcp.pop %v1470
    %v1472 = vmul.f32 %v1470, %v1471
    %v1473 = vsub.f32 1.0, %v1472
    %v1474 = vmul.f32 %v1471, %v1473
    %v1475 = vadd.f32 %v1471, %v1474
    %vm1476 = vweird.f32 %v1470
    %vm1477 = vweird.f32 %v1471
    %vm1478 = vmor %vm1476, %vm1477
    %v1479 = vsel %vm1478, %v1471, %v1475
    %v1480 = vand.u32 2147483647, %v1470
    %vm1481 = vcmp.eq.f32.partialorder %v1480, 8.507059e+37
    %v1482 = vand.u32 %v1470, 2147483648
    %v1483 = vor.u32 1.1754944e-38, %v1482
    %v1484 = vsel %vm1481, %v1483, %v1479
    %v1485 = vmul.f32 1.0, %v1484
    %v1486 = vmul.f32 %v1465, %v1366
    %v1487 = vmul.f32 %v1446, %v1466
    %v1488 = vadd.f32 %v1486, %v1487
    %v1489 = vtanh.pop %v1488
    %v1490 = vmul.f32 %v1485, %v1489
    %s1491 = scalar_lea.vmem [#allocation4], 56
    %1492 = vst [vmem:[%s1491] sm:$0xff] %v1490
    %1493 = vst [vmem:[#allocation2] sm:$0xff] %v1490
    %1494 = vst [vmem:[#allocation3] sm:$0xff] %v1488
    %v1495 = vld [vmem:[#allocation13] sm:$0xff]
    %v1496 = vld [vmem:[#allocation13 + $0x8] sm:$0xff]
    %v1497 = vld [vmem:[#allocation13 + $0x10] sm:$0xff]
    %v1498 = vld [vmem:[#allocation13 + $0x18] sm:$0xff]
    %v1499 = vld [vmem:[#allocation13 + $0x20] sm:$0xff]
    %v1500 = vld [vmem:[#allocation13 + $0x28] sm:$0xff]
    %v1501 = vld [vmem:[#allocation13 + $0x30] sm:$0xff]
    %v1502 = vld [vmem:[#allocation13 + $0x38] sm:$0xff]
    %v1503 = vld [vmem:[#allocation13 + $0x40] sm:$0xff]
    %v1504 = vld [vmem:[#allocation13 + $0x48] sm:$0xff]
    %v1505 = vld [vmem:[#allocation13 + $0x50] sm:$0xff]
    %v1506 = vld [vmem:[#allocation13 + $0x58] sm:$0xff]
    %v1507 = vld [vmem:[#allocation13 + $0x60] sm:$0xff]
    %v1508 = vld [vmem:[#allocation13 + $0x68] sm:$0xff]
    %v1509 = vld [vmem:[#allocation13 + $0x70] sm:$0xff]
    %v1510 = vld [vmem:[#allocation13 + $0x78] sm:$0xff]
    %v1511 = vld [vmem:[#allocation13 + $0x80] sm:$0xff]
    %v1512 = vld [vmem:[#allocation13 + $0x88] sm:$0xff]
    %v1513 = vld [vmem:[#allocation13 + $0x90] sm:$0xff]
    %v1514 = vld [vmem:[#allocation13 + $0x98] sm:$0xff]
    %v1515 = vld [vmem:[#allocation13 + $0xa0] sm:$0xff]
    %v1516 = vld [vmem:[#allocation13 + $0xa8] sm:$0xff]
    %v1517 = vld [vmem:[#allocation13 + $0xb0] sm:$0xff]
    %v1518 = vld [vmem:[#allocation13 + $0xb8] sm:$0xff]
    %v1519 = vld [vmem:[#allocation13 + $0xc0] sm:$0xff]
    %v1520 = vld [vmem:[#allocation13 + $0xc8] sm:$0xff]
    %v1521 = vld [vmem:[#allocation13 + $0xd0] sm:$0xff]
    %v1522 = vld [vmem:[#allocation13 + $0xd8] sm:$0xff]
    %v1523 = vld [vmem:[#allocation13 + $0xe0] sm:$0xff]
    %v1524 = vld [vmem:[#allocation13 + $0xe8] sm:$0xff]
    %v1525 = vld [vmem:[#allocation13 + $0xf0] sm:$0xff]
    %v1526 = vld [vmem:[#allocation13 + $0xf8] sm:$0xff]
    %v1527 = vld [vmem:[#allocation14] sm:$0xff]
    %v1528 = vld [vmem:[#allocation14 + $0x8] sm:$0xff]
    %v1529 = vld [vmem:[#allocation14 + $0x10] sm:$0xff]
    %v1530 = vld [vmem:[#allocation14 + $0x18] sm:$0xff]
    %v1531 = vld [vmem:[#allocation14 + $0x20] sm:$0xff]
    %v1532 = vld [vmem:[#allocation14 + $0x28] sm:$0xff]
    %v1533 = vld [vmem:[#allocation14 + $0x30] sm:$0xff]
    %v1534 = vld [vmem:[#allocation14 + $0x38] sm:$0xff]
    %v1535 = vld [vmem:[#allocation14 + $0x40] sm:$0xff]
    %v1536 = vld [vmem:[#allocation14 + $0x48] sm:$0xff]
    %v1537 = vld [vmem:[#allocation14 + $0x50] sm:$0xff]
    %v1538 = vld [vmem:[#allocation14 + $0x58] sm:$0xff]
    %v1539 = vld [vmem:[#allocation14 + $0x60] sm:$0xff]
    %v1540 = vld [vmem:[#allocation14 + $0x68] sm:$0xff]
    %v1541 = vld [vmem:[#allocation14 + $0x70] sm:$0xff]
    %v1542 = vld [vmem:[#allocation14 + $0x78] sm:$0xff]
    %v1543 = vld [vmem:[#allocation14 + $0x80] sm:$0xff]
    %v1544 = vld [vmem:[#allocation14 + $0x88] sm:$0xff]
    %v1545 = vld [vmem:[#allocation14 + $0x90] sm:$0xff]
    %v1546 = vld [vmem:[#allocation14 + $0x98] sm:$0xff]
    %v1547 = vld [vmem:[#allocation14 + $0xa0] sm:$0xff]
    %v1548 = vld [vmem:[#allocation14 + $0xa8] sm:$0xff]
    %v1549 = vld [vmem:[#allocation14 + $0xb0] sm:$0xff]
    %v1550 = vld [vmem:[#allocation14 + $0xb8] sm:$0xff]
    %v1551 = vld [vmem:[#allocation14 + $0xc0] sm:$0xff]
    %v1552 = vld [vmem:[#allocation14 + $0xc8] sm:$0xff]
    %v1553 = vld [vmem:[#allocation14 + $0xd0] sm:$0xff]
    %v1554 = vld [vmem:[#allocation14 + $0xd8] sm:$0xff]
    %v1555 = vld [vmem:[#allocation14 + $0xe0] sm:$0xff]
    %v1556 = vld [vmem:[#allocation14 + $0xe8] sm:$0xff]
    %v1557 = vld [vmem:[#allocation14 + $0xf0] sm:$0xff]
    %v1558 = vld [vmem:[#allocation14 + $0xf8] sm:$0xff]
    %v1559 = vld [vmem:[%s6] sm:$0xf]
    %v1560 = vld [vmem:[#allocation4] sm:$0xff]
    %v1561 = vld [vmem:[#allocation4 + $0x8] sm:$0xff]
    %v1562 = vld [vmem:[#allocation4 + $0x10] sm:$0xff]
    %v1563 = vld [vmem:[#allocation4 + $0x18] sm:$0xff]
    %v1564 = vld [vmem:[#allocation4 + $0x20] sm:$0xff]
    %v1565 = vld [vmem:[#allocation4 + $0x28] sm:$0xff]
    %v1566 = vld [vmem:[#allocation4 + $0x30] sm:$0xff]
    %v1567 = vld [vmem:[#allocation4 + $0x38] sm:$0xff]
    %v1568 = vpack.c.bf16 %v1561, %v1560
    %v1569 = vpack.c.bf16 %v1563, %v1562
    %v1570 = vpack.c.bf16 %v1565, %v1564
    %v1571 = vpack.c.bf16 %v1567, %v1566
    %v1573 = vperm.slane %v1559, 0
    %v1574 = vperm.slane %v1559, 1
    %v1575 = vperm.slane %v1559, 2
    %v1576 = vperm.slane %v1559, 3
    %v1613 = vunpack.c.l.b16 %v1495
    %v1614 = vunpack.c.h.b16 %v1495
    %v1615 = vunpack.c.l.b16 %v1496
    %v1616 = vunpack.c.h.b16 %v1496
    %v1617 = vunpack.c.l.b16 %v1497
    %v1618 = vunpack.c.h.b16 %v1497
    %v1619 = vunpack.c.l.b16 %v1498
    %v1620 = vunpack.c.h.b16 %v1498
    %v1621 = vunpack.c.l.b16 %v1499
    %v1622 = vunpack.c.h.b16 %v1499
    %v1623 = vunpack.c.l.b16 %v1500
    %v1624 = vunpack.c.h.b16 %v1500
    %v1625 = vunpack.c.l.b16 %v1501
    %v1626 = vunpack.c.h.b16 %v1501
    %v1627 = vunpack.c.l.b16 %v1502
    %v1628 = vunpack.c.h.b16 %v1502
    %v1629 = vunpack.c.l.b16 %v1503
    %v1630 = vunpack.c.h.b16 %v1503
    %v1631 = vunpack.c.l.b16 %v1504
    %v1632 = vunpack.c.h.b16 %v1504
    %v1633 = vunpack.c.l.b16 %v1505
    %v1634 = vunpack.c.h.b16 %v1505
    %v1635 = vunpack.c.l.b16 %v1506
    %v1636 = vunpack.c.h.b16 %v1506
    %v1637 = vunpack.c.l.b16 %v1507
    %v1638 = vunpack.c.h.b16 %v1507
    %v1639 = vunpack.c.l.b16 %v1508
    %v1640 = vunpack.c.h.b16 %v1508
    %v1641 = vunpack.c.l.b16 %v1509
    %v1642 = vunpack.c.h.b16 %v1509
    %v1643 = vunpack.c.l.b16 %v1510
    %v1644 = vunpack.c.h.b16 %v1510
    %v1645 = vunpack.c.l.b16 %v1511
    %v1646 = vunpack.c.h.b16 %v1511
    %v1647 = vunpack.c.l.b16 %v1512
    %v1648 = vunpack.c.h.b16 %v1512
    %v1649 = vunpack.c.l.b16 %v1513
    %v1650 = vunpack.c.h.b16 %v1513
    %v1651 = vunpack.c.l.b16 %v1514
    %v1652 = vunpack.c.h.b16 %v1514
    %v1653 = vunpack.c.l.b16 %v1515
    %v1654 = vunpack.c.h.b16 %v1515
    %v1655 = vunpack.c.l.b16 %v1516
    %v1656 = vunpack.c.h.b16 %v1516
    %v1657 = vunpack.c.l.b16 %v1517
    %v1658 = vunpack.c.h.b16 %v1517
    %v1659 = vunpack.c.l.b16 %v1518
    %v1660 = vunpack.c.h.b16 %v1518
    %v1661 = vunpack.c.l.b16 %v1519
    %v1662 = vunpack.c.h.b16 %v1519
    %v1663 = vunpack.c.l.b16 %v1520
    %v1664 = vunpack.c.h.b16 %v1520
    %v1665 = vunpack.c.l.b16 %v1521
    %v1666 = vunpack.c.h.b16 %v1521
    %v1667 = vunpack.c.l.b16 %v1522
    %v1668 = vunpack.c.h.b16 %v1522
    %v1669 = vunpack.c.l.b16 %v1523
    %v1670 = vunpack.c.h.b16 %v1523
    %v1671 = vunpack.c.l.b16 %v1524
    %v1672 = vunpack.c.h.b16 %v1524
    %v1673 = vunpack.c.l.b16 %v1525
    %v1674 = vunpack.c.h.b16 %v1525
    %v1675 = vunpack.c.l.b16 %v1526
    %v1676 = vunpack.c.h.b16 %v1526
    %v1677 = vpack.c.b16 %v1617, %v1613
    %v1678 = vpack.c.b16 %v1618, %v1614
    %v1679 = vpack.c.b16 %v1619, %v1615
    %v1680 = vpack.c.b16 %v1620, %v1616
    %v1681 = vpack.c.b16 %v1625, %v1621
    %v1682 = vpack.c.b16 %v1626, %v1622
    %v1683 = vpack.c.b16 %v1627, %v1623
    %v1684 = vpack.c.b16 %v1628, %v1624
    %v1685 = vpack.c.b16 %v1633, %v1629
    %v1686 = vpack.c.b16 %v1634, %v1630
    %v1687 = vpack.c.b16 %v1635, %v1631
    %v1688 = vpack.c.b16 %v1636, %v1632
    %v1689 = vpack.c.b16 %v1641, %v1637
    %v1690 = vpack.c.b16 %v1642, %v1638
    %v1691 = vpack.c.b16 %v1643, %v1639
    %v1692 = vpack.c.b16 %v1644, %v1640
    %v1693 = vpack.c.b16 %v1649, %v1645
    %v1694 = vpack.c.b16 %v1650, %v1646
    %v1695 = vpack.c.b16 %v1651, %v1647
    %v1696 = vpack.c.b16 %v1652, %v1648
    %v1697 = vpack.c.b16 %v1657, %v1653
    %v1698 = vpack.c.b16 %v1658, %v1654
    %v1699 = vpack.c.b16 %v1659, %v1655
    %v1700 = vpack.c.b16 %v1660, %v1656
    %v1701 = vpack.c.b16 %v1665, %v1661
    %v1702 = vpack.c.b16 %v1666, %v1662
    %v1703 = vpack.c.b16 %v1667, %v1663
    %v1704 = vpack.c.b16 %v1668, %v1664
    %v1705 = vpack.c.b16 %v1673, %v1669
    %v1706 = vpack.c.b16 %v1674, %v1670
    %v1707 = vpack.c.b16 %v1675, %v1671
    %v1708 = vpack.c.b16 %v1676, %v1672
    %1741 = vmatpush.bf16.msra.mxu0 %v1705
    %1742 = vmatpush.bf16.msra.mxu0 %v1701
    %1743 = vmatpush.bf16.msra.mxu0 %v1697
    %1744 = vmatpush.bf16.msra.mxu0 %v1693
    %1745 = vmatpush.bf16.msra.mxu0 %v1689
    %1746 = vmatpush.bf16.msra.mxu0 %v1685
    %1747 = vmatpush.bf16.msra.mxu0 %v1681
    %1748 = vmatpush.bf16.msra.mxu0 %v1677
    %1749 = vmatmul.bf16.gmra.mxu0 %v1568
    %v1750 = vpop.f32.mrf.mxu0
    %v1751 = vadd.f32 %v1573, %v1750
    %v1752 = vpop.f32.mrf.mxu0
    %v1753 = vadd.f32 %v1573, %v1752
    %1754 = vmatmul.bf16.gmra.mxu0 %v1569
    %v1755 = vpop.f32.mrf.mxu0
    %v1756 = vadd.f32 %v1573, %v1755
    %v1757 = vpop.f32.mrf.mxu0
    %v1758 = vadd.f32 %v1573, %v1757
    %1759 = vmatmul.bf16.gmra.mxu0 %v1570
    %v1760 = vpop.f32.mrf.mxu0
    %v1761 = vadd.f32 %v1573, %v1760
    %v1762 = vpop.f32.mrf.mxu0
    %v1763 = vadd.f32 %v1573, %v1762
    %1764 = vmatmul.bf16.gmra.mxu0 %v1571
    %v1765 = vpop.f32.mrf.mxu0
    %v1766 = vadd.f32 %v1573, %v1765
    %v1767 = vpop.f32.mrf.mxu0
    %v1768 = vadd.f32 %v1573, %v1767
    %1769 = vdwg.mxu0
    %1770 = vmatpush.bf16.msra.mxu0 %v1706
    %1771 = vmatpush.bf16.msra.mxu0 %v1702
    %1772 = vmatpush.bf16.msra.mxu0 %v1698
    %1773 = vmatpush.bf16.msra.mxu0 %v1694
    %1774 = vmatpush.bf16.msra.mxu0 %v1690
    %1775 = vmatpush.bf16.msra.mxu0 %v1686
    %1776 = vmatpush.bf16.msra.mxu0 %v1682
    %1777 = vmatpush.bf16.msra.mxu0 %v1678
    %1778 = vmatmul.bf16.gmra.mxu0 %v1568
    %v1779 = vpop.f32.mrf.mxu0
    %v1780 = vadd.f32 %v1574, %v1779
    %v1781 = vpop.f32.mrf.mxu0
    %v1782 = vadd.f32 %v1574, %v1781
    %1783 = vmatmul.bf16.gmra.mxu0 %v1569
    %v1784 = vpop.f32.mrf.mxu0
    %v1785 = vadd.f32 %v1574, %v1784
    %v1786 = vpop.f32.mrf.mxu0
    %v1787 = vadd.f32 %v1574, %v1786
    %1788 = vmatmul.bf16.gmra.mxu0 %v1570
    %v1789 = vpop.f32.mrf.mxu0
    %v1790 = vadd.f32 %v1574, %v1789
    %v1791 = vpop.f32.mrf.mxu0
    %v1792 = vadd.f32 %v1574, %v1791
    %1793 = vmatmul.bf16.gmra.mxu0 %v1571
    %v1794 = vpop.f32.mrf.mxu0
    %v1795 = vadd.f32 %v1574, %v1794
    %v1796 = vpop.f32.mrf.mxu0
    %v1797 = vadd.f32 %v1574, %v1796
    %1798 = vdwg.mxu0
    %1799 = vmatpush.bf16.msra.mxu0 %v1707
    %1800 = vmatpush.bf16.msra.mxu0 %v1703
    %1801 = vmatpush.bf16.msra.mxu0 %v1699
    %1802 = vmatpush.bf16.msra.mxu0 %v1695
    %1803 = vmatpush.bf16.msra.mxu0 %v1691
    %1804 = vmatpush.bf16.msra.mxu0 %v1687
    %1805 = vmatpush.bf16.msra.mxu0 %v1683
    %1806 = vmatpush.bf16.msra.mxu0 %v1679
    %1807 = vmatmul.bf16.gmra.mxu0 %v1568
    %v1808 = vpop.f32.mrf.mxu0
    %v1809 = vadd.f32 %v1575, %v1808
    %v1810 = vpop.f32.mrf.mxu0
    %v1811 = vadd.f32 %v1575, %v1810
    %1812 = vmatmul.bf16.gmra.mxu0 %v1569
    %v1813 = vpop.f32.mrf.mxu0
    %v1814 = vadd.f32 %v1575, %v1813
    %v1815 = vpop.f32.mrf.mxu0
    %v1816 = vadd.f32 %v1575, %v1815
    %1817 = vmatmul.bf16.gmra.mxu0 %v1570
    %v1818 = vpop.f32.mrf.mxu0
    %v1819 = vadd.f32 %v1575, %v1818
    %v1820 = vpop.f32.mrf.mxu0
    %v1821 = vadd.f32 %v1575, %v1820
    %1822 = vmatmul.bf16.gmra.mxu0 %v1571
    %v1823 = vpop.f32.mrf.mxu0
    %v1824 = vadd.f32 %v1575, %v1823
    %v1825 = vpop.f32.mrf.mxu0
    %v1826 = vadd.f32 %v1575, %v1825
    %1827 = vdwg.mxu0
    %1828 = vmatpush.bf16.msra.mxu0 %v1708
    %1829 = vmatpush.bf16.msra.mxu0 %v1704
    %1830 = vmatpush.bf16.msra.mxu0 %v1700
    %1831 = vmatpush.bf16.msra.mxu0 %v1696
    %1832 = vmatpush.bf16.msra.mxu0 %v1692
    %1833 = vmatpush.bf16.msra.mxu0 %v1688
    %1834 = vmatpush.bf16.msra.mxu0 %v1684
    %1835 = vmatpush.bf16.msra.mxu0 %v1680
    %1836 = vmatmul.bf16.gmra.mxu0 %v1568
    %v1837 = vpop.f32.mrf.mxu0
    %v1838 = vadd.f32 %v1576, %v1837
    %v1839 = vpop.f32.mrf.mxu0
    %v1840 = vadd.f32 %v1576, %v1839
    %1841 = vmatmul.bf16.gmra.mxu0 %v1569
    %v1842 = vpop.f32.mrf.mxu0
    %v1843 = vadd.f32 %v1576, %v1842
    %v1844 = vpop.f32.mrf.mxu0
    %v1845 = vadd.f32 %v1576, %v1844
    %1846 = vmatmul.bf16.gmra.mxu0 %v1570
    %v1847 = vpop.f32.mrf.mxu0
    %v1848 = vadd.f32 %v1576, %v1847
    %v1849 = vpop.f32.mrf.mxu0
    %v1850 = vadd.f32 %v1576, %v1849
    %1851 = vmatmul.bf16.gmra.mxu0 %v1571
    %v1852 = vpop.f32.mrf.mxu0
    %v1853 = vadd.f32 %v1576, %v1852
    %v1854 = vpop.f32.mrf.mxu0
    %v1855 = vadd.f32 %v1576, %v1854
    %1856 = vdwg.mxu0
    %s1857 = scalar_lea.vmem [#allocation2], 8
    %v1858 = vld [vmem:[%s1857] sm:$0xff]
    %s1859 = scalar_lea.vmem [#allocation3], 8
    %v1860 = vld [vmem:[%s1859] sm:$0xff]
    %v1861 = vpack.c.bf16 %v1858, %v1858
    %v1894 = vunpack.c.l.b16 %v1527
    %v1895 = vunpack.c.h.b16 %v1527
    %v1896 = vunpack.c.l.b16 %v1528
    %v1897 = vunpack.c.h.b16 %v1528
    %v1898 = vunpack.c.l.b16 %v1529
    %v1899 = vunpack.c.h.b16 %v1529
    %v1900 = vunpack.c.l.b16 %v1530
    %v1901 = vunpack.c.h.b16 %v1530
    %v1902 = vunpack.c.l.b16 %v1531
    %v1903 = vunpack.c.h.b16 %v1531
    %v1904 = vunpack.c.l.b16 %v1532
    %v1905 = vunpack.c.h.b16 %v1532
    %v1906 = vunpack.c.l.b16 %v1533
    %v1907 = vunpack.c.h.b16 %v1533
    %v1908 = vunpack.c.l.b16 %v1534
    %v1909 = vunpack.c.h.b16 %v1534
    %v1910 = vunpack.c.l.b16 %v1535
    %v1911 = vunpack.c.h.b16 %v1535
    %v1912 = vunpack.c.l.b16 %v1536
    %v1913 = vunpack.c.h.b16 %v1536
    %v1914 = vunpack.c.l.b16 %v1537
    %v1915 = vunpack.c.h.b16 %v1537
    %v1916 = vunpack.c.l.b16 %v1538
    %v1917 = vunpack.c.h.b16 %v1538
    %v1918 = vunpack.c.l.b16 %v1539
    %v1919 = vunpack.c.h.b16 %v1539
    %v1920 = vunpack.c.l.b16 %v1540
    %v1921 = vunpack.c.h.b16 %v1540
    %v1922 = vunpack.c.l.b16 %v1541
    %v1923 = vunpack.c.h.b16 %v1541
    %v1924 = vunpack.c.l.b16 %v1542
    %v1925 = vunpack.c.h.b16 %v1542
    %v1926 = vunpack.c.l.b16 %v1543
    %v1927 = vunpack.c.h.b16 %v1543
    %v1928 = vunpack.c.l.b16 %v1544
    %v1929 = vunpack.c.h.b16 %v1544
    %v1930 = vunpack.c.l.b16 %v1545
    %v1931 = vunpack.c.h.b16 %v1545
    %v1932 = vunpack.c.l.b16 %v1546
    %v1933 = vunpack.c.h.b16 %v1546
    %v1934 = vunpack.c.l.b16 %v1547
    %v1935 = vunpack.c.h.b16 %v1547
    %v1936 = vunpack.c.l.b16 %v1548
    %v1937 = vunpack.c.h.b16 %v1548
    %v1938 = vunpack.c.l.b16 %v1549
    %v1939 = vunpack.c.h.b16 %v1549
    %v1940 = vunpack.c.l.b16 %v1550
    %v1941 = vunpack.c.h.b16 %v1550
    %v1942 = vunpack.c.l.b16 %v1551
    %v1943 = vunpack.c.h.b16 %v1551
    %v1944 = vunpack.c.l.b16 %v1552
    %v1945 = vunpack.c.h.b16 %v1552
    %v1946 = vunpack.c.l.b16 %v1553
    %v1947 = vunpack.c.h.b16 %v1553
    %v1948 = vunpack.c.l.b16 %v1554
    %v1949 = vunpack.c.h.b16 %v1554
    %v1950 = vunpack.c.l.b16 %v1555
    %v1951 = vunpack.c.h.b16 %v1555
    %v1952 = vunpack.c.l.b16 %v1556
    %v1953 = vunpack.c.h.b16 %v1556
    %v1954 = vunpack.c.l.b16 %v1557
    %v1955 = vunpack.c.h.b16 %v1557
    %v1956 = vunpack.c.l.b16 %v1558
    %v1957 = vunpack.c.h.b16 %v1558
    %v1958 = vpack.c.b16 %v1898, %v1894
    %v1959 = vpack.c.b16 %v1899, %v1895
    %v1960 = vpack.c.b16 %v1900, %v1896
    %v1961 = vpack.c.b16 %v1901, %v1897
    %v1962 = vpack.c.b16 %v1906, %v1902
    %v1963 = vpack.c.b16 %v1907, %v1903
    %v1964 = vpack.c.b16 %v1908, %v1904
    %v1965 = vpack.c.b16 %v1909, %v1905
    %v1966 = vpack.c.b16 %v1914, %v1910
    %v1967 = vpack.c.b16 %v1915, %v1911
    %v1968 = vpack.c.b16 %v1916, %v1912
    %v1969 = vpack.c.b16 %v1917, %v1913
    %v1970 = vpack.c.b16 %v1922, %v1918
    %v1971 = vpack.c.b16 %v1923, %v1919
    %v1972 = vpack.c.b16 %v1924, %v1920
    %v1973 = vpack.c.b16 %v1925, %v1921
    %v1974 = vpack.c.b16 %v1930, %v1926
    %v1975 = vpack.c.b16 %v1931, %v1927
    %v1976 = vpack.c.b16 %v1932, %v1928
    %v1977 = vpack.c.b16 %v1933, %v1929
    %v1978 = vpack.c.b16 %v1938, %v1934
    %v1979 = vpack.c.b16 %v1939, %v1935
    %v1980 = vpack.c.b16 %v1940, %v1936
    %v1981 = vpack.c.b16 %v1941, %v1937
    %v1982 = vpack.c.b16 %v1946, %v1942
    %v1983 = vpack.c.b16 %v1947, %v1943
    %v1984 = vpack.c.b16 %v1948, %v1944
    %v1985 = vpack.c.b16 %v1949, %v1945
    %v1986 = vpack.c.b16 %v1954, %v1950
    %v1987 = vpack.c.b16 %v1955, %v1951
    %v1988 = vpack.c.b16 %v1956, %v1952
    %v1989 = vpack.c.b16 %v1957, %v1953
    %2022 = vmatpush.bf16.msra.mxu0 %v1986
    %2023 = vmatpush.bf16.msra.mxu0 %v1982
    %2024 = vmatpush.bf16.msra.mxu0 %v1978
    %2025 = vmatpush.bf16.msra.mxu0 %v1974
    %2026 = vmatpush.bf16.msra.mxu0 %v1970
    %2027 = vmatpush.bf16.msra.mxu0 %v1966
    %2028 = vmatpush.bf16.msra.mxu0 %v1962
    %2029 = vmatpush.bf16.msra.mxu0 %v1958
    %2030 = vmatmul.bf16.gmra.mxu0 %v1861
    %v2031 = vpop.f32.mrf.mxu0
    %v2032 = vadd.f32 0.0, %v2031
    %v2033 = vpop.f32.mrf.mxu0
    %2034 = vdwg.mxu0
    %2035 = vmatpush.bf16.msra.mxu0 %v1987
    %2036 = vmatpush.bf16.msra.mxu0 %v1983
    %2037 = vmatpush.bf16.msra.mxu0 %v1979
    %2038 = vmatpush.bf16.msra.mxu0 %v1975
    %2039 = vmatpush.bf16.msra.mxu0 %v1971
    %2040 = vmatpush.bf16.msra.mxu0 %v1967
    %2041 = vmatpush.bf16.msra.mxu0 %v1963
    %2042 = vmatpush.bf16.msra.mxu0 %v1959
    %2043 = vmatmul.bf16.gmra.mxu0 %v1861
    %v2044 = vpop.f32.mrf.mxu0
    %v2045 = vadd.f32 0.0, %v2044
    %v2046 = vpop.f32.mrf.mxu0
    %2047 = vdwg.mxu0
    %2048 = vmatpush.bf16.msra.mxu0 %v1988
    %2049 = vmatpush.bf16.msra.mxu0 %v1984
    %2050 = vmatpush.bf16.msra.mxu0 %v1980
    %2051 = vmatpush.bf16.msra.mxu0 %v1976
    %2052 = vmatpush.bf16.msra.mxu0 %v1972
    %2053 = vmatpush.bf16.msra.mxu0 %v1968
    %2054 = vmatpush.bf16.msra.mxu0 %v1964
    %2055 = vmatpush.bf16.msra.mxu0 %v1960
    %2056 = vmatmul.bf16.gmra.mxu0 %v1861
    %v2057 = vpop.f32.mrf.mxu0
    %v2058 = vadd.f32 0.0, %v2057
    %v2059 = vpop.f32.mrf.mxu0
    %2060 = vdwg.mxu0
    %2061 = vmatpush.bf16.msra.mxu0 %v1989
    %2062 = vmatpush.bf16.msra.mxu0 %v1985
    %2063 = vmatpush.bf16.msra.mxu0 %v1981
    %2064 = vmatpush.bf16.msra.mxu0 %v1977
    %2065 = vmatpush.bf16.msra.mxu0 %v1973
    %2066 = vmatpush.bf16.msra.mxu0 %v1969
    %2067 = vmatpush.bf16.msra.mxu0 %v1965
    %2068 = vmatpush.bf16.msra.mxu0 %v1961
    %2069 = vmatmul.bf16.gmra.mxu0 %v1861
    %v2070 = vpop.f32.mrf.mxu0
    %v2071 = vadd.f32 0.0, %v2070
    %v2072 = vpop.f32.mrf.mxu0
    %2073 = vdwg.mxu0
    %v2074 = vadd.f32 %v1751, %v2032
    %v2075 = vadd.f32 %v1780, %v2045
    %v2076 = vadd.f32 %v1809, %v2058
    %v2077 = vadd.f32 %v1838, %v2071
    %v2078 = vxor.u32 %v2074, 2147483648
    %v2079 = vmul.f32 %v2078, 1.442695
    %v2080 = vpow.pop %v2079
    %v2081 = vadd.f32 %v2080, 1.0
    %v2082 = vrcp.pop %v2081
    %v2083 = vmul.f32 %v2081, %v2082
    %v2084 = vsub.f32 1.0, %v2083
    %v2085 = vmul.f32 %v2082, %v2084
    %v2086 = vadd.f32 %v2082, %v2085
    %vm2087 = vweird.f32 %v2081
    %vm2088 = vweird.f32 %v2082
    %vm2089 = vmor %vm2087, %vm2088
    %v2090 = vsel %vm2089, %v2082, %v2086
    %v2091 = vand.u32 2147483647, %v2081
    %vm2092 = vcmp.eq.f32.partialorder %v2091, 8.507059e+37
    %v2093 = vand.u32 %v2081, 2147483648
    %v2094 = vor.u32 1.1754944e-38, %v2093
    %v2095 = vsel %vm2092, %v2094, %v2090
    %v2096 = vmul.f32 1.0, %v2095
    %v2097 = vxor.u32 %v2075, 2147483648
    %v2098 = vmul.f32 %v2097, 1.442695
    %v2099 = vpow.pop %v2098
    %v2100 = vadd.f32 %v2099, 1.0
    %v2101 = vrcp.pop %v2100
    %v2102 = vmul.f32 %v2100, %v2101
    %v2103 = vsub.f32 1.0, %v2102
    %v2104 = vmul.f32 %v2101, %v2103
    %v2105 = vadd.f32 %v2101, %v2104
    %vm2106 = vweird.f32 %v2100
    %vm2107 = vweird.f32 %v2101
    %vm2108 = vmor %vm2106, %vm2107
    %v2109 = vsel %vm2108, %v2101, %v2105
    %v2110 = vand.u32 2147483647, %v2100
    %vm2111 = vcmp.eq.f32.partialorder %v2110, 8.507059e+37
    %v2112 = vand.u32 %v2100, 2147483648
    %v2113 = vor.u32 1.1754944e-38, %v2112
    %v2114 = vsel %vm2111, %v2113, %v2109
    %v2115 = vmul.f32 1.0, %v2114
    %v2116 = vtanh.pop %v2076
    %v2117 = vxor.u32 %v2077, 2147483648
    %v2118 = vmul.f32 %v2117, 1.442695
    %v2119 = vpow.pop %v2118
    %v2120 = vadd.f32 %v2119, 1.0
    %v2121 = vrcp.pop %v2120
    %v2122 = vmul.f32 %v2120, %v2121
    %v2123 = vsub.f32 1.0, %v2122
    %v2124 = vmul.f32 %v2121, %v2123
    %v2125 = vadd.f32 %v2121, %v2124
    %vm2126 = vweird.f32 %v2120
    %vm2127 = vweird.f32 %v2121
    %vm2128 = vmor %vm2126, %vm2127
    %v2129 = vsel %vm2128, %v2121, %v2125
    %v2130 = vand.u32 2147483647, %v2120
    %vm2131 = vcmp.eq.f32.partialorder %v2130, 8.507059e+37
    %v2132 = vand.u32 %v2120, 2147483648
    %v2133 = vor.u32 1.1754944e-38, %v2132
    %v2134 = vsel %vm2131, %v2133, %v2129
    %v2135 = vmul.f32 1.0, %v2134
    %v2136 = vmul.f32 %v2115, %v1860
    %v2137 = vmul.f32 %v2096, %v2116
    %v2138 = vadd.f32 %v2136, %v2137
    %v2139 = vtanh.pop %v2138
    %v2140 = vmul.f32 %v2135, %v2139
    %v2141 = vpack.c.bf16 %v2140, %v2140
    %2142 = vmatpush.bf16.msra.mxu0 %v1986
    %2143 = vmatpush.bf16.msra.mxu0 %v1982
    %2144 = vmatpush.bf16.msra.mxu0 %v1978
    %2145 = vmatpush.bf16.msra.mxu0 %v1974
    %2146 = vmatpush.bf16.msra.mxu0 %v1970
    %2147 = vmatpush.bf16.msra.mxu0 %v1966
    %2148 = vmatpush.bf16.msra.mxu0 %v1962
    %2149 = vmatpush.bf16.msra.mxu0 %v1958
    %2150 = vmatmul.bf16.gmra.mxu0 %v2141
    %v2151 = vpop.f32.mrf.mxu0
    %v2152 = vadd.f32 0.0, %v2151
    %v2153 = vpop.f32.mrf.mxu0
    %2154 = vdwg.mxu0
    %2155 = vmatpush.bf16.msra.mxu0 %v1987
    %2156 = vmatpush.bf16.msra.mxu0 %v1983
    %2157 = vmatpush.bf16.msra.mxu0 %v1979
    %2158 = vmatpush.bf16.msra.mxu0 %v1975
    %2159 = vmatpush.bf16.msra.mxu0 %v1971
    %2160 = vmatpush.bf16.msra.mxu0 %v1967
    %2161 = vmatpush.bf16.msra.mxu0 %v1963
    %2162 = vmatpush.bf16.msra.mxu0 %v1959
    %2163 = vmatmul.bf16.gmra.mxu0 %v2141
    %v2164 = vpop.f32.mrf.mxu0
    %v2165 = vadd.f32 0.0, %v2164
    %v2166 = vpop.f32.mrf.mxu0
    %2167 = vdwg.mxu0
    %2168 = vmatpush.bf16.msra.mxu0 %v1988
    %2169 = vmatpush.bf16.msra.mxu0 %v1984
    %2170 = vmatpush.bf16.msra.mxu0 %v1980
    %2171 = vmatpush.bf16.msra.mxu0 %v1976
    %2172 = vmatpush.bf16.msra.mxu0 %v1972
    %2173 = vmatpush.bf16.msra.mxu0 %v1968
    %2174 = vmatpush.bf16.msra.mxu0 %v1964
    %2175 = vmatpush.bf16.msra.mxu0 %v1960
    %2176 = vmatmul.bf16.gmra.mxu0 %v2141
    %v2177 = vpop.f32.mrf.mxu0
    %v2178 = vadd.f32 0.0, %v2177
    %v2179 = vpop.f32.mrf.mxu0
    %2180 = vdwg.mxu0
    %2181 = vmatpush.bf16.msra.mxu0 %v1989
    %2182 = vmatpush.bf16.msra.mxu0 %v1985
    %2183 = vmatpush.bf16.msra.mxu0 %v1981
    %2184 = vmatpush.bf16.msra.mxu0 %v1977
    %2185 = vmatpush.bf16.msra.mxu0 %v1973
    %2186 = vmatpush.bf16.msra.mxu0 %v1969
    %2187 = vmatpush.bf16.msra.mxu0 %v1965
    %2188 = vmatpush.bf16.msra.mxu0 %v1961
    %2189 = vmatmul.bf16.gmra.mxu0 %v2141
    %v2190 = vpop.f32.mrf.mxu0
    %v2191 = vadd.f32 0.0, %v2190
    %v2192 = vpop.f32.mrf.mxu0
    %2193 = vdwg.mxu0
    %v2194 = vadd.f32 %v1753, %v2152
    %v2195 = vadd.f32 %v1782, %v2165
    %v2196 = vadd.f32 %v1811, %v2178
    %v2197 = vadd.f32 %v1840, %v2191
    %v2198 = vxor.u32 %v2194, 2147483648
    %v2199 = vmul.f32 %v2198, 1.442695
    %v2200 = vpow.pop %v2199
    %v2201 = vadd.f32 %v2200, 1.0
    %v2202 = vrcp.pop %v2201
    %v2203 = vmul.f32 %v2201, %v2202
    %v2204 = vsub.f32 1.0, %v2203
    %v2205 = vmul.f32 %v2202, %v2204
    %v2206 = vadd.f32 %v2202, %v2205
    %vm2207 = vweird.f32 %v2201
    %vm2208 = vweird.f32 %v2202
    %vm2209 = vmor %vm2207, %vm2208
    %v2210 = vsel %vm2209, %v2202, %v2206
    %v2211 = vand.u32 2147483647, %v2201
    %vm2212 = vcmp.eq.f32.partialorder %v2211, 8.507059e+37
    %v2213 = vand.u32 %v2201, 2147483648
    %v2214 = vor.u32 1.1754944e-38, %v2213
    %v2215 = vsel %vm2212, %v2214, %v2210
    %v2216 = vmul.f32 1.0, %v2215
    %v2217 = vxor.u32 %v2195, 2147483648
    %v2218 = vmul.f32 %v2217, 1.442695
    %v2219 = vpow.pop %v2218
    %v2220 = vadd.f32 %v2219, 1.0
    %v2221 = vrcp.pop %v2220
    %v2222 = vmul.f32 %v2220, %v2221
    %v2223 = vsub.f32 1.0, %v2222
    %v2224 = vmul.f32 %v2221, %v2223
    %v2225 = vadd.f32 %v2221, %v2224
    %vm2226 = vweird.f32 %v2220
    %vm2227 = vweird.f32 %v2221
    %vm2228 = vmor %vm2226, %vm2227
    %v2229 = vsel %vm2228, %v2221, %v2225
    %v2230 = vand.u32 2147483647, %v2220
    %vm2231 = vcmp.eq.f32.partialorder %v2230, 8.507059e+37
    %v2232 = vand.u32 %v2220, 2147483648
    %v2233 = vor.u32 1.1754944e-38, %v2232
    %v2234 = vsel %vm2231, %v2233, %v2229
    %v2235 = vmul.f32 1.0, %v2234
    %v2236 = vtanh.pop %v2196
    %v2237 = vxor.u32 %v2197, 2147483648
    %v2238 = vmul.f32 %v2237, 1.442695
    %v2239 = vpow.pop %v2238
    %v2240 = vadd.f32 %v2239, 1.0
    %v2241 = vrcp.pop %v2240
    %v2242 = vmul.f32 %v2240, %v2241
    %v2243 = vsub.f32 1.0, %v2242
    %v2244 = vmul.f32 %v2241, %v2243
    %v2245 = vadd.f32 %v2241, %v2244
    %vm2246 = vweird.f32 %v2240
    %vm2247 = vweird.f32 %v2241
    %vm2248 = vmor %vm2246, %vm2247
    %v2249 = vsel %vm2248, %v2241, %v2245
    %v2250 = vand.u32 2147483647, %v2240
    %vm2251 = vcmp.eq.f32.partialorder %v2250, 8.507059e+37
    %v2252 = vand.u32 %v2240, 2147483648
    %v2253 = vor.u32 1.1754944e-38, %v2252
    %v2254 = vsel %vm2251, %v2253, %v2249
    %v2255 = vmul.f32 1.0, %v2254
    %v2256 = vmul.f32 %v2235, %v2138
    %v2257 = vmul.f32 %v2216, %v2236
    %v2258 = vadd.f32 %v2256, %v2257
    %v2259 = vtanh.pop %v2258
    %v2260 = vmul.f32 %v2255, %v2259
    %v2261 = vpack.c.bf16 %v2260, %v2260
    %2262 = vmatpush.bf16.msra.mxu0 %v1986
    %2263 = vmatpush.bf16.msra.mxu0 %v1982
    %2264 = vmatpush.bf16.msra.mxu0 %v1978
    %2265 = vmatpush.bf16.msra.mxu0 %v1974
    %2266 = vmatpush.bf16.msra.mxu0 %v1970
    %2267 = vmatpush.bf16.msra.mxu0 %v1966
    %2268 = vmatpush.bf16.msra.mxu0 %v1962
    %2269 = vmatpush.bf16.msra.mxu0 %v1958
    %2270 = vmatmul.bf16.gmra.mxu0 %v2261
    %v2271 = vpop.f32.mrf.mxu0
    %v2272 = vadd.f32 0.0, %v2271
    %v2273 = vpop.f32.mrf.mxu0
    %2274 = vdwg.mxu0
    %2275 = vmatpush.bf16.msra.mxu0 %v1987
    %2276 = vmatpush.bf16.msra.mxu0 %v1983
    %2277 = vmatpush.bf16.msra.mxu0 %v1979
    %2278 = vmatpush.bf16.msra.mxu0 %v1975
    %2279 = vmatpush.bf16.msra.mxu0 %v1971
    %2280 = vmatpush.bf16.msra.mxu0 %v1967
    %2281 = vmatpush.bf16.msra.mxu0 %v1963
    %2282 = vmatpush.bf16.msra.mxu0 %v1959
    %2283 = vmatmul.bf16.gmra.mxu0 %v2261
    %v2284 = vpop.f32.mrf.mxu0
    %v2285 = vadd.f32 0.0, %v2284
    %v2286 = vpop.f32.mrf.mxu0
    %2287 = vdwg.mxu0
    %2288 = vmatpush.bf16.msra.mxu0 %v1988
    %2289 = vmatpush.bf16.msra.mxu0 %v1984
    %2290 = vmatpush.bf16.msra.mxu0 %v1980
    %2291 = vmatpush.bf16.msra.mxu0 %v1976
    %2292 = vmatpush.bf16.msra.mxu0 %v1972
    %2293 = vmatpush.bf16.msra.mxu0 %v1968
    %2294 = vmatpush.bf16.msra.mxu0 %v1964
    %2295 = vmatpush.bf16.msra.mxu0 %v1960
    %2296 = vmatmul.bf16.gmra.mxu0 %v2261
    %v2297 = vpop.f32.mrf.mxu0
    %v2298 = vadd.f32 0.0, %v2297
    %v2299 = vpop.f32.mrf.mxu0
    %2300 = vdwg.mxu0
    %2301 = vmatpush.bf16.msra.mxu0 %v1989
    %2302 = vmatpush.bf16.msra.mxu0 %v1985
    %2303 = vmatpush.bf16.msra.mxu0 %v1981
    %2304 = vmatpush.bf16.msra.mxu0 %v1977
    %2305 = vmatpush.bf16.msra.mxu0 %v1973
    %2306 = vmatpush.bf16.msra.mxu0 %v1969
    %2307 = vmatpush.bf16.msra.mxu0 %v1965
    %2308 = vmatpush.bf16.msra.mxu0 %v1961
    %2309 = vmatmul.bf16.gmra.mxu0 %v2261
    %v2310 = vpop.f32.mrf.mxu0
    %v2311 = vadd.f32 0.0, %v2310
    %v2312 = vpop.f32.mrf.mxu0
    %2313 = vdwg.mxu0
    %v2314 = vadd.f32 %v1756, %v2272
    %v2315 = vadd.f32 %v1785, %v2285
    %v2316 = vadd.f32 %v1814, %v2298
    %v2317 = vadd.f32 %v1843, %v2311
    %v2318 = vxor.u32 %v2314, 2147483648
    %v2319 = vmul.f32 %v2318, 1.442695
    %v2320 = vpow.pop %v2319
    %v2321 = vadd.f32 %v2320, 1.0
    %v2322 = vrcp.pop %v2321
    %v2323 = vmul.f32 %v2321, %v2322
    %v2324 = vsub.f32 1.0, %v2323
    %v2325 = vmul.f32 %v2322, %v2324
    %v2326 = vadd.f32 %v2322, %v2325
    %vm2327 = vweird.f32 %v2321
    %vm2328 = vweird.f32 %v2322
    %vm2329 = vmor %vm2327, %vm2328
    %v2330 = vsel %vm2329, %v2322, %v2326
    %v2331 = vand.u32 2147483647, %v2321
    %vm2332 = vcmp.eq.f32.partialorder %v2331, 8.507059e+37
    %v2333 = vand.u32 %v2321, 2147483648
    %v2334 = vor.u32 1.1754944e-38, %v2333
    %v2335 = vsel %vm2332, %v2334, %v2330
    %v2336 = vmul.f32 1.0, %v2335
    %v2337 = vxor.u32 %v2315, 2147483648
    %v2338 = vmul.f32 %v2337, 1.442695
    %v2339 = vpow.pop %v2338
    %v2340 = vadd.f32 %v2339, 1.0
    %v2341 = vrcp.pop %v2340
    %v2342 = vmul.f32 %v2340, %v2341
    %v2343 = vsub.f32 1.0, %v2342
    %v2344 = vmul.f32 %v2341, %v2343
    %v2345 = vadd.f32 %v2341, %v2344
    %vm2346 = vweird.f32 %v2340
    %vm2347 = vweird.f32 %v2341
    %vm2348 = vmor %vm2346, %vm2347
    %v2349 = vsel %vm2348, %v2341, %v2345
    %v2350 = vand.u32 2147483647, %v2340
    %vm2351 = vcmp.eq.f32.partialorder %v2350, 8.507059e+37
    %v2352 = vand.u32 %v2340, 2147483648
    %v2353 = vor.u32 1.1754944e-38, %v2352
    %v2354 = vsel %vm2351, %v2353, %v2349
    %v2355 = vmul.f32 1.0, %v2354
    %v2356 = vtanh.pop %v2316
    %v2357 = vxor.u32 %v2317, 2147483648
    %v2358 = vmul.f32 %v2357, 1.442695
    %v2359 = vpow.pop %v2358
    %v2360 = vadd.f32 %v2359, 1.0
    %v2361 = vrcp.pop %v2360
    %v2362 = vmul.f32 %v2360, %v2361
    %v2363 = vsub.f32 1.0, %v2362
    %v2364 = vmul.f32 %v2361, %v2363
    %v2365 = vadd.f32 %v2361, %v2364
    %vm2366 = vweird.f32 %v2360
    %vm2367 = vweird.f32 %v2361
    %vm2368 = vmor %vm2366, %vm2367
    %v2369 = vsel %vm2368, %v2361, %v2365
    %v2370 = vand.u32 2147483647, %v2360
    %vm2371 = vcmp.eq.f32.partialorder %v2370, 8.507059e+37
    %v2372 = vand.u32 %v2360, 2147483648
    %v2373 = vor.u32 1.1754944e-38, %v2372
    %v2374 = vsel %vm2371, %v2373, %v2369
    %v2375 = vmul.f32 1.0, %v2374
    %v2376 = vmul.f32 %v2355, %v2258
    %v2377 = vmul.f32 %v2336, %v2356
    %v2378 = vadd.f32 %v2376, %v2377
    %v2379 = vtanh.pop %v2378
    %v2380 = vmul.f32 %v2375, %v2379
    %v2381 = vpack.c.bf16 %v2380, %v2380
    %2382 = vmatpush.bf16.msra.mxu0 %v1986
    %2383 = vmatpush.bf16.msra.mxu0 %v1982
    %2384 = vmatpush.bf16.msra.mxu0 %v1978
    %2385 = vmatpush.bf16.msra.mxu0 %v1974
    %2386 = vmatpush.bf16.msra.mxu0 %v1970
    %2387 = vmatpush.bf16.msra.mxu0 %v1966
    %2388 = vmatpush.bf16.msra.mxu0 %v1962
    %2389 = vmatpush.bf16.msra.mxu0 %v1958
    %2390 = vmatmul.bf16.gmra.mxu0 %v2381
    %v2391 = vpop.f32.mrf.mxu0
    %v2392 = vadd.f32 0.0, %v2391
    %v2393 = vpop.f32.mrf.mxu0
    %2394 = vdwg.mxu0
    %2395 = vmatpush.bf16.msra.mxu0 %v1987
    %2396 = vmatpush.bf16.msra.mxu0 %v1983
    %2397 = vmatpush.bf16.msra.mxu0 %v1979
    %2398 = vmatpush.bf16.msra.mxu0 %v1975
    %2399 = vmatpush.bf16.msra.mxu0 %v1971
    %2400 = vmatpush.bf16.msra.mxu0 %v1967
    %2401 = vmatpush.bf16.msra.mxu0 %v1963
    %2402 = vmatpush.bf16.msra.mxu0 %v1959
    %2403 = vmatmul.bf16.gmra.mxu0 %v2381
    %v2404 = vpop.f32.mrf.mxu0
    %v2405 = vadd.f32 0.0, %v2404
    %v2406 = vpop.f32.mrf.mxu0
    %2407 = vdwg.mxu0
    %2408 = vmatpush.bf16.msra.mxu0 %v1988
    %2409 = vmatpush.bf16.msra.mxu0 %v1984
    %2410 = vmatpush.bf16.msra.mxu0 %v1980
    %2411 = vmatpush.bf16.msra.mxu0 %v1976
    %2412 = vmatpush.bf16.msra.mxu0 %v1972
    %2413 = vmatpush.bf16.msra.mxu0 %v1968
    %2414 = vmatpush.bf16.msra.mxu0 %v1964
    %2415 = vmatpush.bf16.msra.mxu0 %v1960
    %2416 = vmatmul.bf16.gmra.mxu0 %v2381
    %v2417 = vpop.f32.mrf.mxu0
    %v2418 = vadd.f32 0.0, %v2417
    %v2419 = vpop.f32.mrf.mxu0
    %2420 = vdwg.mxu0
    %2421 = vmatpush.bf16.msra.mxu0 %v1989
    %2422 = vmatpush.bf16.msra.mxu0 %v1985
    %2423 = vmatpush.bf16.msra.mxu0 %v1981
    %2424 = vmatpush.bf16.msra.mxu0 %v1977
    %2425 = vmatpush.bf16.msra.mxu0 %v1973
    %2426 = vmatpush.bf16.msra.mxu0 %v1969
    %2427 = vmatpush.bf16.msra.mxu0 %v1965
    %2428 = vmatpush.bf16.msra.mxu0 %v1961
    %2429 = vmatmul.bf16.gmra.mxu0 %v2381
    %v2430 = vpop.f32.mrf.mxu0
    %v2431 = vadd.f32 0.0, %v2430
    %v2432 = vpop.f32.mrf.mxu0
    %2433 = vdwg.mxu0
    %v2434 = vadd.f32 %v1758, %v2392
    %v2435 = vadd.f32 %v1787, %v2405
    %v2436 = vadd.f32 %v1816, %v2418
    %v2437 = vadd.f32 %v1845, %v2431
    %v2438 = vxor.u32 %v2434, 2147483648
    %v2439 = vmul.f32 %v2438, 1.442695
    %v2440 = vpow.pop %v2439
    %v2441 = vadd.f32 %v2440, 1.0
    %v2442 = vrcp.pop %v2441
    %v2443 = vmul.f32 %v2441, %v2442
    %v2444 = vsub.f32 1.0, %v2443
    %v2445 = vmul.f32 %v2442, %v2444
    %v2446 = vadd.f32 %v2442, %v2445
    %vm2447 = vweird.f32 %v2441
    %vm2448 = vweird.f32 %v2442
    %vm2449 = vmor %vm2447, %vm2448
    %v2450 = vsel %vm2449, %v2442, %v2446
    %v2451 = vand.u32 2147483647, %v2441
    %vm2452 = vcmp.eq.f32.partialorder %v2451, 8.507059e+37
    %v2453 = vand.u32 %v2441, 2147483648
    %v2454 = vor.u32 1.1754944e-38, %v2453
    %v2455 = vsel %vm2452, %v2454, %v2450
    %v2456 = vmul.f32 1.0, %v2455
    %v2457 = vxor.u32 %v2435, 2147483648
    %v2458 = vmul.f32 %v2457, 1.442695
    %v2459 = vpow.pop %v2458
    %v2460 = vadd.f32 %v2459, 1.0
    %v2461 = vrcp.pop %v2460
    %v2462 = vmul.f32 %v2460, %v2461
    %v2463 = vsub.f32 1.0, %v2462
    %v2464 = vmul.f32 %v2461, %v2463
    %v2465 = vadd.f32 %v2461, %v2464
    %vm2466 = vweird.f32 %v2460
    %vm2467 = vweird.f32 %v2461
    %vm2468 = vmor %vm2466, %vm2467
    %v2469 = vsel %vm2468, %v2461, %v2465
    %v2470 = vand.u32 2147483647, %v2460
    %vm2471 = vcmp.eq.f32.partialorder %v2470, 8.507059e+37
    %v2472 = vand.u32 %v2460, 2147483648
    %v2473 = vor.u32 1.1754944e-38, %v2472
    %v2474 = vsel %vm2471, %v2473, %v2469
    %v2475 = vmul.f32 1.0, %v2474
    %v2476 = vtanh.pop %v2436
    %v2477 = vxor.u32 %v2437, 2147483648
    %v2478 = vmul.f32 %v2477, 1.442695
    %v2479 = vpow.pop %v2478
    %v2480 = vadd.f32 %v2479, 1.0
    %v2481 = vrcp.pop %v2480
    %v2482 = vmul.f32 %v2480, %v2481
    %v2483 = vsub.f32 1.0, %v2482
    %v2484 = vmul.f32 %v2481, %v2483
    %v2485 = vadd.f32 %v2481, %v2484
    %vm2486 = vweird.f32 %v2480
    %vm2487 = vweird.f32 %v2481
    %vm2488 = vmor %vm2486, %vm2487
    %v2489 = vsel %vm2488, %v2481, %v2485
    %v2490 = vand.u32 2147483647, %v2480
    %vm2491 = vcmp.eq.f32.partialorder %v2490, 8.507059e+37
    %v2492 = vand.u32 %v2480, 2147483648
    %v2493 = vor.u32 1.1754944e-38, %v2492
    %v2494 = vsel %vm2491, %v2493, %v2489
    %v2495 = vmul.f32 1.0, %v2494
    %v2496 = vmul.f32 %v2475, %v2378
    %v2497 = vmul.f32 %v2456, %v2476
    %v2498 = vadd.f32 %v2496, %v2497
    %v2499 = vtanh.pop %v2498
    %v2500 = vmul.f32 %v2495, %v2499
    %v2501 = vpack.c.bf16 %v2500, %v2500
    %2502 = vmatpush.bf16.msra.mxu0 %v1986
    %2503 = vmatpush.bf16.msra.mxu0 %v1982
    %2504 = vmatpush.bf16.msra.mxu0 %v1978
    %2505 = vmatpush.bf16.msra.mxu0 %v1974
    %2506 = vmatpush.bf16.msra.mxu0 %v1970
    %2507 = vmatpush.bf16.msra.mxu0 %v1966
    %2508 = vmatpush.bf16.msra.mxu0 %v1962
    %2509 = vmatpush.bf16.msra.mxu0 %v1958
    %2510 = vmatmul.bf16.gmra.mxu0 %v2501
    %v2511 = vpop.f32.mrf.mxu0
    %v2512 = vadd.f32 0.0, %v2511
    %v2513 = vpop.f32.mrf.mxu0
    %2514 = vdwg.mxu0
    %2515 = vmatpush.bf16.msra.mxu0 %v1987
    %2516 = vmatpush.bf16.msra.mxu0 %v1983
    %2517 = vmatpush.bf16.msra.mxu0 %v1979
    %2518 = vmatpush.bf16.msra.mxu0 %v1975
    %2519 = vmatpush.bf16.msra.mxu0 %v1971
    %2520 = vmatpush.bf16.msra.mxu0 %v1967
    %2521 = vmatpush.bf16.msra.mxu0 %v1963
    %2522 = vmatpush.bf16.msra.mxu0 %v1959
    %2523 = vmatmul.bf16.gmra.mxu0 %v2501
    %v2524 = vpop.f32.mrf.mxu0
    %v2525 = vadd.f32 0.0, %v2524
    %v2526 = vpop.f32.mrf.mxu0
    %2527 = vdwg.mxu0
    %2528 = vmatpush.bf16.msra.mxu0 %v1988
    %2529 = vmatpush.bf16.msra.mxu0 %v1984
    %2530 = vmatpush.bf16.msra.mxu0 %v1980
    %2531 = vmatpush.bf16.msra.mxu0 %v1976
    %2532 = vmatpush.bf16.msra.mxu0 %v1972
    %2533 = vmatpush.bf16.msra.mxu0 %v1968
    %2534 = vmatpush.bf16.msra.mxu0 %v1964
    %2535 = vmatpush.bf16.msra.mxu0 %v1960
    %2536 = vmatmul.bf16.gmra.mxu0 %v2501
    %v2537 = vpop.f32.mrf.mxu0
    %v2538 = vadd.f32 0.0, %v2537
    %v2539 = vpop.f32.mrf.mxu0
    %2540 = vdwg.mxu0
    %2541 = vmatpush.bf16.msra.mxu0 %v1989
    %2542 = vmatpush.bf16.msra.mxu0 %v1985
    %2543 = vmatpush.bf16.msra.mxu0 %v1981
    %2544 = vmatpush.bf16.msra.mxu0 %v1977
    %2545 = vmatpush.bf16.msra.mxu0 %v1973
    %2546 = vmatpush.bf16.msra.mxu0 %v1969
    %2547 = vmatpush.bf16.msra.mxu0 %v1965
    %2548 = vmatpush.bf16.msra.mxu0 %v1961
    %2549 = vmatmul.bf16.gmra.mxu0 %v2501
    %v2550 = vpop.f32.mrf.mxu0
    %v2551 = vadd.f32 0.0, %v2550
    %v2552 = vpop.f32.mrf.mxu0
    %2553 = vdwg.mxu0
    %v2554 = vadd.f32 %v1761, %v2512
    %v2555 = vadd.f32 %v1790, %v2525
    %v2556 = vadd.f32 %v1819, %v2538
    %v2557 = vadd.f32 %v1848, %v2551
    %v2558 = vxor.u32 %v2554, 2147483648
    %v2559 = vmul.f32 %v2558, 1.442695
    %v2560 = vpow.pop %v2559
    %v2561 = vadd.f32 %v2560, 1.0
    %v2562 = vrcp.pop %v2561
    %v2563 = vmul.f32 %v2561, %v2562
    %v2564 = vsub.f32 1.0, %v2563
    %v2565 = vmul.f32 %v2562, %v2564
    %v2566 = vadd.f32 %v2562, %v2565
    %vm2567 = vweird.f32 %v2561
    %vm2568 = vweird.f32 %v2562
    %vm2569 = vmor %vm2567, %vm2568
    %v2570 = vsel %vm2569, %v2562, %v2566
    %v2571 = vand.u32 2147483647, %v2561
    %vm2572 = vcmp.eq.f32.partialorder %v2571, 8.507059e+37
    %v2573 = vand.u32 %v2561, 2147483648
    %v2574 = vor.u32 1.1754944e-38, %v2573
    %v2575 = vsel %vm2572, %v2574, %v2570
    %v2576 = vmul.f32 1.0, %v2575
    %v2577 = vxor.u32 %v2555, 2147483648
    %v2578 = vmul.f32 %v2577, 1.442695
    %v2579 = vpow.pop %v2578
    %v2580 = vadd.f32 %v2579, 1.0
    %v2581 = vrcp.pop %v2580
    %v2582 = vmul.f32 %v2580, %v2581
    %v2583 = vsub.f32 1.0, %v2582
    %v2584 = vmul.f32 %v2581, %v2583
    %v2585 = vadd.f32 %v2581, %v2584
    %vm2586 = vweird.f32 %v2580
    %vm2587 = vweird.f32 %v2581
    %vm2588 = vmor %vm2586, %vm2587
    %v2589 = vsel %vm2588, %v2581, %v2585
    %v2590 = vand.u32 2147483647, %v2580
    %vm2591 = vcmp.eq.f32.partialorder %v2590, 8.507059e+37
    %v2592 = vand.u32 %v2580, 2147483648
    %v2593 = vor.u32 1.1754944e-38, %v2592
    %v2594 = vsel %vm2591, %v2593, %v2589
    %v2595 = vmul.f32 1.0, %v2594
    %v2596 = vtanh.pop %v2556
    %v2597 = vxor.u32 %v2557, 2147483648
    %v2598 = vmul.f32 %v2597, 1.442695
    %v2599 = vpow.pop %v2598
    %v2600 = vadd.f32 %v2599, 1.0
    %v2601 = vrcp.pop %v2600
    %v2602 = vmul.f32 %v2600, %v2601
    %v2603 = vsub.f32 1.0, %v2602
    %v2604 = vmul.f32 %v2601, %v2603
    %v2605 = vadd.f32 %v2601, %v2604
    %vm2606 = vweird.f32 %v2600
    %vm2607 = vweird.f32 %v2601
    %vm2608 = vmor %vm2606, %vm2607
    %v2609 = vsel %vm2608, %v2601, %v2605
    %v2610 = vand.u32 2147483647, %v2600
    %vm2611 = vcmp.eq.f32.partialorder %v2610, 8.507059e+37
    %v2612 = vand.u32 %v2600, 2147483648
    %v2613 = vor.u32 1.1754944e-38, %v2612
    %v2614 = vsel %vm2611, %v2613, %v2609
    %v2615 = vmul.f32 1.0, %v2614
    %v2616 = vmul.f32 %v2595, %v2498
    %v2617 = vmul.f32 %v2576, %v2596
    %v2618 = vadd.f32 %v2616, %v2617
    %v2619 = vtanh.pop %v2618
    %v2620 = vmul.f32 %v2615, %v2619
    %v2621 = vpack.c.bf16 %v2620, %v2620
    %2622 = vmatpush.bf16.msra.mxu0 %v1986
    %2623 = vmatpush.bf16.msra.mxu0 %v1982
    %2624 = vmatpush.bf16.msra.mxu0 %v1978
    %2625 = vmatpush.bf16.msra.mxu0 %v1974
    %2626 = vmatpush.bf16.msra.mxu0 %v1970
    %2627 = vmatpush.bf16.msra.mxu0 %v1966
    %2628 = vmatpush.bf16.msra.mxu0 %v1962
    %2629 = vmatpush.bf16.msra.mxu0 %v1958
    %2630 = vmatmul.bf16.gmra.mxu0 %v2621
    %v2631 = vpop.f32.mrf.mxu0
    %v2632 = vadd.f32 0.0, %v2631
    %v2633 = vpop.f32.mrf.mxu0
    %2634 = vdwg.mxu0
    %2635 = vmatpush.bf16.msra.mxu0 %v1987
    %2636 = vmatpush.bf16.msra.mxu0 %v1983
    %2637 = vmatpush.bf16.msra.mxu0 %v1979
    %2638 = vmatpush.bf16.msra.mxu0 %v1975
    %2639 = vmatpush.bf16.msra.mxu0 %v1971
    %2640 = vmatpush.bf16.msra.mxu0 %v1967
    %2641 = vmatpush.bf16.msra.mxu0 %v1963
    %2642 = vmatpush.bf16.msra.mxu0 %v1959
    %2643 = vmatmul.bf16.gmra.mxu0 %v2621
    %v2644 = vpop.f32.mrf.mxu0
    %v2645 = vadd.f32 0.0, %v2644
    %v2646 = vpop.f32.mrf.mxu0
    %2647 = vdwg.mxu0
    %2648 = vmatpush.bf16.msra.mxu0 %v1988
    %2649 = vmatpush.bf16.msra.mxu0 %v1984
    %2650 = vmatpush.bf16.msra.mxu0 %v1980
    %2651 = vmatpush.bf16.msra.mxu0 %v1976
    %2652 = vmatpush.bf16.msra.mxu0 %v1972
    %2653 = vmatpush.bf16.msra.mxu0 %v1968
    %2654 = vmatpush.bf16.msra.mxu0 %v1964
    %2655 = vmatpush.bf16.msra.mxu0 %v1960
    %2656 = vmatmul.bf16.gmra.mxu0 %v2621
    %v2657 = vpop.f32.mrf.mxu0
    %v2658 = vadd.f32 0.0, %v2657
    %v2659 = vpop.f32.mrf.mxu0
    %2660 = vdwg.mxu0
    %2661 = vmatpush.bf16.msra.mxu0 %v1989
    %2662 = vmatpush.bf16.msra.mxu0 %v1985
    %2663 = vmatpush.bf16.msra.mxu0 %v1981
    %2664 = vmatpush.bf16.msra.mxu0 %v1977
    %2665 = vmatpush.bf16.msra.mxu0 %v1973
    %2666 = vmatpush.bf16.msra.mxu0 %v1969
    %2667 = vmatpush.bf16.msra.mxu0 %v1965
    %2668 = vmatpush.bf16.msra.mxu0 %v1961
    %2669 = vmatmul.bf16.gmra.mxu0 %v2621
    %v2670 = vpop.f32.mrf.mxu0
    %v2671 = vadd.f32 0.0, %v2670
    %v2672 = vpop.f32.mrf.mxu0
    %2673 = vdwg.mxu0
    %v2674 = vadd.f32 %v1763, %v2632
    %v2675 = vadd.f32 %v1792, %v2645
    %v2676 = vadd.f32 %v1821, %v2658
    %v2677 = vadd.f32 %v1850, %v2671
    %v2678 = vxor.u32 %v2674, 2147483648
    %v2679 = vmul.f32 %v2678, 1.442695
    %v2680 = vpow.pop %v2679
    %v2681 = vadd.f32 %v2680, 1.0
    %v2682 = vrcp.pop %v2681
    %v2683 = vmul.f32 %v2681, %v2682
    %v2684 = vsub.f32 1.0, %v2683
    %v2685 = vmul.f32 %v2682, %v2684
    %v2686 = vadd.f32 %v2682, %v2685
    %vm2687 = vweird.f32 %v2681
    %vm2688 = vweird.f32 %v2682
    %vm2689 = vmor %vm2687, %vm2688
    %v2690 = vsel %vm2689, %v2682, %v2686
    %v2691 = vand.u32 2147483647, %v2681
    %vm2692 = vcmp.eq.f32.partialorder %v2691, 8.507059e+37
    %v2693 = vand.u32 %v2681, 2147483648
    %v2694 = vor.u32 1.1754944e-38, %v2693
    %v2695 = vsel %vm2692, %v2694, %v2690
    %v2696 = vmul.f32 1.0, %v2695
    %v2697 = vxor.u32 %v2675, 2147483648
    %v2698 = vmul.f32 %v2697, 1.442695
    %v2699 = vpow.pop %v2698
    %v2700 = vadd.f32 %v2699, 1.0
    %v2701 = vrcp.pop %v2700
    %v2702 = vmul.f32 %v2700, %v2701
    %v2703 = vsub.f32 1.0, %v2702
    %v2704 = vmul.f32 %v2701, %v2703
    %v2705 = vadd.f32 %v2701, %v2704
    %vm2706 = vweird.f32 %v2700
    %vm2707 = vweird.f32 %v2701
    %vm2708 = vmor %vm2706, %vm2707
    %v2709 = vsel %vm2708, %v2701, %v2705
    %v2710 = vand.u32 2147483647, %v2700
    %vm2711 = vcmp.eq.f32.partialorder %v2710, 8.507059e+37
    %v2712 = vand.u32 %v2700, 2147483648
    %v2713 = vor.u32 1.1754944e-38, %v2712
    %v2714 = vsel %vm2711, %v2713, %v2709
    %v2715 = vmul.f32 1.0, %v2714
    %v2716 = vtanh.pop %v2676
    %v2717 = vxor.u32 %v2677, 2147483648
    %v2718 = vmul.f32 %v2717, 1.442695
    %v2719 = vpow.pop %v2718
    %v2720 = vadd.f32 %v2719, 1.0
    %v2721 = vrcp.pop %v2720
    %v2722 = vmul.f32 %v2720, %v2721
    %v2723 = vsub.f32 1.0, %v2722
    %v2724 = vmul.f32 %v2721, %v2723
    %v2725 = vadd.f32 %v2721, %v2724
    %vm2726 = vweird.f32 %v2720
    %vm2727 = vweird.f32 %v2721
    %vm2728 = vmor %vm2726, %vm2727
    %v2729 = vsel %vm2728, %v2721, %v2725
    %v2730 = vand.u32 2147483647, %v2720
    %vm2731 = vcmp.eq.f32.partialorder %v2730, 8.507059e+37
    %v2732 = vand.u32 %v2720, 2147483648
    %v2733 = vor.u32 1.1754944e-38, %v2732
    %v2734 = vsel %vm2731, %v2733, %v2729
    %v2735 = vmul.f32 1.0, %v2734
    %v2736 = vmul.f32 %v2715, %v2618
    %v2737 = vmul.f32 %v2696, %v2716
    %v2738 = vadd.f32 %v2736, %v2737
    %v2739 = vtanh.pop %v2738
    %v2740 = vmul.f32 %v2735, %v2739
    %v2741 = vpack.c.bf16 %v2740, %v2740
    %2742 = vmatpush.bf16.msra.mxu0 %v1986
    %2743 = vmatpush.bf16.msra.mxu0 %v1982
    %2744 = vmatpush.bf16.msra.mxu0 %v1978
    %2745 = vmatpush.bf16.msra.mxu0 %v1974
    %2746 = vmatpush.bf16.msra.mxu0 %v1970
    %2747 = vmatpush.bf16.msra.mxu0 %v1966
    %2748 = vmatpush.bf16.msra.mxu0 %v1962
    %2749 = vmatpush.bf16.msra.mxu0 %v1958
    %2750 = vmatmul.bf16.gmra.mxu0 %v2741
    %v2751 = vpop.f32.mrf.mxu0
    %v2752 = vadd.f32 0.0, %v2751
    %v2753 = vpop.f32.mrf.mxu0
    %2754 = vdwg.mxu0
    %2755 = vmatpush.bf16.msra.mxu0 %v1987
    %2756 = vmatpush.bf16.msra.mxu0 %v1983
    %2757 = vmatpush.bf16.msra.mxu0 %v1979
    %2758 = vmatpush.bf16.msra.mxu0 %v1975
    %2759 = vmatpush.bf16.msra.mxu0 %v1971
    %2760 = vmatpush.bf16.msra.mxu0 %v1967
    %2761 = vmatpush.bf16.msra.mxu0 %v1963
    %2762 = vmatpush.bf16.msra.mxu0 %v1959
    %2763 = vmatmul.bf16.gmra.mxu0 %v2741
    %v2764 = vpop.f32.mrf.mxu0
    %v2765 = vadd.f32 0.0, %v2764
    %v2766 = vpop.f32.mrf.mxu0
    %2767 = vdwg.mxu0
    %2768 = vmatpush.bf16.msra.mxu0 %v1988
    %2769 = vmatpush.bf16.msra.mxu0 %v1984
    %2770 = vmatpush.bf16.msra.mxu0 %v1980
    %2771 = vmatpush.bf16.msra.mxu0 %v1976
    %2772 = vmatpush.bf16.msra.mxu0 %v1972
    %2773 = vmatpush.bf16.msra.mxu0 %v1968
    %2774 = vmatpush.bf16.msra.mxu0 %v1964
    %2775 = vmatpush.bf16.msra.mxu0 %v1960
    %2776 = vmatmul.bf16.gmra.mxu0 %v2741
    %v2777 = vpop.f32.mrf.mxu0
    %v2778 = vadd.f32 0.0, %v2777
    %v2779 = vpop.f32.mrf.mxu0
    %2780 = vdwg.mxu0
    %2781 = vmatpush.bf16.msra.mxu0 %v1989
    %2782 = vmatpush.bf16.msra.mxu0 %v1985
    %2783 = vmatpush.bf16.msra.mxu0 %v1981
    %2784 = vmatpush.bf16.msra.mxu0 %v1977
    %2785 = vmatpush.bf16.msra.mxu0 %v1973
    %2786 = vmatpush.bf16.msra.mxu0 %v1969
    %2787 = vmatpush.bf16.msra.mxu0 %v1965
    %2788 = vmatpush.bf16.msra.mxu0 %v1961
    %2789 = vmatmul.bf16.gmra.mxu0 %v2741
    %v2790 = vpop.f32.mrf.mxu0
    %v2791 = vadd.f32 0.0, %v2790
    %v2792 = vpop.f32.mrf.mxu0
    %2793 = vdwg.mxu0
    %v2794 = vadd.f32 %v1766, %v2752
    %v2795 = vadd.f32 %v1795, %v2765
    %v2796 = vadd.f32 %v1824, %v2778
    %v2797 = vadd.f32 %v1853, %v2791
    %v2798 = vxor.u32 %v2794, 2147483648
    %v2799 = vmul.f32 %v2798, 1.442695
    %v2800 = vpow.pop %v2799
    %v2801 = vadd.f32 %v2800, 1.0
    %v2802 = vrcp.pop %v2801
    %v2803 = vmul.f32 %v2801, %v2802
    %v2804 = vsub.f32 1.0, %v2803
    %v2805 = vmul.f32 %v2802, %v2804
    %v2806 = vadd.f32 %v2802, %v2805
    %vm2807 = vweird.f32 %v2801
    %vm2808 = vweird.f32 %v2802
    %vm2809 = vmor %vm2807, %vm2808
    %v2810 = vsel %vm2809, %v2802, %v2806
    %v2811 = vand.u32 2147483647, %v2801
    %vm2812 = vcmp.eq.f32.partialorder %v2811, 8.507059e+37
    %v2813 = vand.u32 %v2801, 2147483648
    %v2814 = vor.u32 1.1754944e-38, %v2813
    %v2815 = vsel %vm2812, %v2814, %v2810
    %v2816 = vmul.f32 1.0, %v2815
    %v2817 = vxor.u32 %v2795, 2147483648
    %v2818 = vmul.f32 %v2817, 1.442695
    %v2819 = vpow.pop %v2818
    %v2820 = vadd.f32 %v2819, 1.0
    %v2821 = vrcp.pop %v2820
    %v2822 = vmul.f32 %v2820, %v2821
    %v2823 = vsub.f32 1.0, %v2822
    %v2824 = vmul.f32 %v2821, %v2823
    %v2825 = vadd.f32 %v2821, %v2824
    %vm2826 = vweird.f32 %v2820
    %vm2827 = vweird.f32 %v2821
    %vm2828 = vmor %vm2826, %vm2827
    %v2829 = vsel %vm2828, %v2821, %v2825
    %v2830 = vand.u32 2147483647, %v2820
    %vm2831 = vcmp.eq.f32.partialorder %v2830, 8.507059e+37
    %v2832 = vand.u32 %v2820, 2147483648
    %v2833 = vor.u32 1.1754944e-38, %v2832
    %v2834 = vsel %vm2831, %v2833, %v2829
    %v2835 = vmul.f32 1.0, %v2834
    %v2836 = vtanh.pop %v2796
    %v2837 = vxor.u32 %v2797, 2147483648
    %v2838 = vmul.f32 %v2837, 1.442695
    %v2839 = vpow.pop %v2838
    %v2840 = vadd.f32 %v2839, 1.0
    %v2841 = vrcp.pop %v2840
    %v2842 = vmul.f32 %v2840, %v2841
    %v2843 = vsub.f32 1.0, %v2842
    %v2844 = vmul.f32 %v2841, %v2843
    %v2845 = vadd.f32 %v2841, %v2844
    %vm2846 = vweird.f32 %v2840
    %vm2847 = vweird.f32 %v2841
    %vm2848 = vmor %vm2846, %vm2847
    %v2849 = vsel %vm2848, %v2841, %v2845
    %v2850 = vand.u32 2147483647, %v2840
    %vm2851 = vcmp.eq.f32.partialorder %v2850, 8.507059e+37
    %v2852 = vand.u32 %v2840, 2147483648
    %v2853 = vor.u32 1.1754944e-38, %v2852
    %v2854 = vsel %vm2851, %v2853, %v2849
    %v2855 = vmul.f32 1.0, %v2854
    %v2856 = vmul.f32 %v2835, %v2738
    %v2857 = vmul.f32 %v2816, %v2836
    %v2858 = vadd.f32 %v2856, %v2857
    %v2859 = vtanh.pop %v2858
    %v2860 = vmul.f32 %v2855, %v2859
    %v2861 = vpack.c.bf16 %v2860, %v2860
    %2862 = vmatpush.bf16.msra.mxu0 %v1986
    %2863 = vmatpush.bf16.msra.mxu0 %v1982
    %2864 = vmatpush.bf16.msra.mxu0 %v1978
    %2865 = vmatpush.bf16.msra.mxu0 %v1974
    %2866 = vmatpush.bf16.msra.mxu0 %v1970
    %2867 = vmatpush.bf16.msra.mxu0 %v1966
    %2868 = vmatpush.bf16.msra.mxu0 %v1962
    %2869 = vmatpush.bf16.msra.mxu0 %v1958
    %2870 = vmatmul.bf16.gmra.mxu0 %v2861
    %v2871 = vpop.f32.mrf.mxu0
    %v2872 = vadd.f32 0.0, %v2871
    %v2873 = vpop.f32.mrf.mxu0
    %2874 = vdwg.mxu0
    %2875 = vmatpush.bf16.msra.mxu0 %v1987
    %2876 = vmatpush.bf16.msra.mxu0 %v1983
    %2877 = vmatpush.bf16.msra.mxu0 %v1979
    %2878 = vmatpush.bf16.msra.mxu0 %v1975
    %2879 = vmatpush.bf16.msra.mxu0 %v1971
    %2880 = vmatpush.bf16.msra.mxu0 %v1967
    %2881 = vmatpush.bf16.msra.mxu0 %v1963
    %2882 = vmatpush.bf16.msra.mxu0 %v1959
    %2883 = vmatmul.bf16.gmra.mxu0 %v2861
    %v2884 = vpop.f32.mrf.mxu0
    %v2885 = vadd.f32 0.0, %v2884
    %v2886 = vpop.f32.mrf.mxu0
    %2887 = vdwg.mxu0
    %2888 = vmatpush.bf16.msra.mxu0 %v1988
    %2889 = vmatpush.bf16.msra.mxu0 %v1984
    %2890 = vmatpush.bf16.msra.mxu0 %v1980
    %2891 = vmatpush.bf16.msra.mxu0 %v1976
    %2892 = vmatpush.bf16.msra.mxu0 %v1972
    %2893 = vmatpush.bf16.msra.mxu0 %v1968
    %2894 = vmatpush.bf16.msra.mxu0 %v1964
    %2895 = vmatpush.bf16.msra.mxu0 %v1960
    %2896 = vmatmul.bf16.gmra.mxu0 %v2861
    %v2897 = vpop.f32.mrf.mxu0
    %v2898 = vadd.f32 0.0, %v2897
    %v2899 = vpop.f32.mrf.mxu0
    %2900 = vdwg.mxu0
    %2901 = vmatpush.bf16.msra.mxu0 %v1989
    %2902 = vmatpush.bf16.msra.mxu0 %v1985
    %2903 = vmatpush.bf16.msra.mxu0 %v1981
    %2904 = vmatpush.bf16.msra.mxu0 %v1977
    %2905 = vmatpush.bf16.msra.mxu0 %v1973
    %2906 = vmatpush.bf16.msra.mxu0 %v1969
    %2907 = vmatpush.bf16.msra.mxu0 %v1965
    %2908 = vmatpush.bf16.msra.mxu0 %v1961
    %2909 = vmatmul.bf16.gmra.mxu0 %v2861
    %v2910 = vpop.f32.mrf.mxu0
    %v2911 = vadd.f32 0.0, %v2910
    %v2912 = vpop.f32.mrf.mxu0
    %2913 = vdwg.mxu0
    %v2914 = vadd.f32 %v1768, %v2872
    %v2915 = vadd.f32 %v1797, %v2885
    %v2916 = vadd.f32 %v1826, %v2898
    %v2917 = vadd.f32 %v1855, %v2911
    %v2918 = vxor.u32 %v2914, 2147483648
    %v2919 = vmul.f32 %v2918, 1.442695
    %v2920 = vpow.pop %v2919
    %v2921 = vadd.f32 %v2920, 1.0
    %v2922 = vrcp.pop %v2921
    %v2923 = vmul.f32 %v2921, %v2922
    %v2924 = vsub.f32 1.0, %v2923
    %v2925 = vmul.f32 %v2922, %v2924
    %v2926 = vadd.f32 %v2922, %v2925
    %vm2927 = vweird.f32 %v2921
    %vm2928 = vweird.f32 %v2922
    %vm2929 = vmor %vm2927, %vm2928
    %v2930 = vsel %vm2929, %v2922, %v2926
    %v2931 = vand.u32 2147483647, %v2921
    %vm2932 = vcmp.eq.f32.partialorder %v2931, 8.507059e+37
    %v2933 = vand.u32 %v2921, 2147483648
    %v2934 = vor.u32 1.1754944e-38, %v2933
    %v2935 = vsel %vm2932, %v2934, %v2930
    %v2936 = vmul.f32 1.0, %v2935
    %v2937 = vxor.u32 %v2915, 2147483648
    %v2938 = vmul.f32 %v2937, 1.442695
    %v2939 = vpow.pop %v2938
    %v2940 = vadd.f32 %v2939, 1.0
    %v2941 = vrcp.pop %v2940
    %v2942 = vmul.f32 %v2940, %v2941
    %v2943 = vsub.f32 1.0, %v2942
    %v2944 = vmul.f32 %v2941, %v2943
    %v2945 = vadd.f32 %v2941, %v2944
    %vm2946 = vweird.f32 %v2940
    %vm2947 = vweird.f32 %v2941
    %vm2948 = vmor %vm2946, %vm2947
    %v2949 = vsel %vm2948, %v2941, %v2945
    %v2950 = vand.u32 2147483647, %v2940
    %vm2951 = vcmp.eq.f32.partialorder %v2950, 8.507059e+37
    %v2952 = vand.u32 %v2940, 2147483648
    %v2953 = vor.u32 1.1754944e-38, %v2952
    %v2954 = vsel %vm2951, %v2953, %v2949
    %v2955 = vmul.f32 1.0, %v2954
    %v2956 = vtanh.pop %v2916
    %v2957 = vxor.u32 %v2917, 2147483648
    %v2958 = vmul.f32 %v2957, 1.442695
    %v2959 = vpow.pop %v2958
    %v2960 = vadd.f32 %v2959, 1.0
    %v2961 = vrcp.pop %v2960
    %v2962 = vmul.f32 %v2960, %v2961
    %v2963 = vsub.f32 1.0, %v2962
    %v2964 = vmul.f32 %v2961, %v2963
    %v2965 = vadd.f32 %v2961, %v2964
    %vm2966 = vweird.f32 %v2960
    %vm2967 = vweird.f32 %v2961
    %vm2968 = vmor %vm2966, %vm2967
    %v2969 = vsel %vm2968, %v2961, %v2965
    %v2970 = vand.u32 2147483647, %v2960
    %vm2971 = vcmp.eq.f32.partialorder %v2970, 8.507059e+37
    %v2972 = vand.u32 %v2960, 2147483648
    %v2973 = vor.u32 1.1754944e-38, %v2972
    %v2974 = vsel %vm2971, %v2973, %v2969
    %v2975 = vmul.f32 1.0, %v2974
    %v2976 = vmul.f32 %v2955, %v2858
    %v2977 = vmul.f32 %v2936, %v2956
    %v2978 = vadd.f32 %v2976, %v2977
    %v2979 = vtanh.pop %v2978
    %v2980 = vmul.f32 %v2975, %v2979
    %2981 = vst [vmem:[%s1857] sm:$0xff] %v2980
    %2982 = vst [vmem:[%s1859] sm:$0xff] %v2978
    // Predicated region
    $region70: #{tpu_custom_call.1} parent=1 // pred_check
      %p2983 = pneg %p141
    $region71: #{tpu_custom_call.1} parent=1 // pred_check_branch
      %2985 = sbr.rel (%p2983) target = $region73
    $region72: #{tpu_custom_call.1} parent=1 // pred_region
      %v2986 = vld [vmem:[#allocation16] sm:$0xf]
      %v2987 = vld [vmem:[#allocation16 + $0x4] sm:$0xf]
      %v2988 = vld [vmem:[#allocation16 + $0x8] sm:$0xf]
      %v2989 = vld [vmem:[#allocation16 + $0xc] sm:$0xf]
      %v2990 = vld [vmem:[#allocation16 + $0x10] sm:$0xf]
      %v2991 = vld [vmem:[#allocation16 + $0x14] sm:$0xf]
      %v2992 = vld [vmem:[#allocation16 + $0x18] sm:$0xf]
      %v2993 = vld [vmem:[#allocation16 + $0x1c] sm:$0xf]
      %v2994 = vld [vmem:[#allocation16 + $0x20] sm:$0xf]
      %v2995 = vld [vmem:[#allocation16 + $0x24] sm:$0xf]
      %v2996 = vld [vmem:[#allocation16 + $0x28] sm:$0xf]
      %v2997 = vld [vmem:[#allocation16 + $0x2c] sm:$0xf]
      %v2998 = vld [vmem:[#allocation16 + $0x30] sm:$0xf]
      %v2999 = vld [vmem:[#allocation16 + $0x34] sm:$0xf]
      %v3000 = vld [vmem:[#allocation16 + $0x38] sm:$0xf]
      %v3001 = vld [vmem:[#allocation16 + $0x3c] sm:$0xf]
      %v3002 = vld [vmem:[%s8] sm:$0x1]
      %v3003 = vld [vmem:[%s1857] sm:$0xff]
      %v3004 = vpack.c.bf16 %v3003, %v3003
      %v3006 = vperm.slane %v3002, 0
      %v3024 = vunpack.c.l.b16 %v2986
      %v3025 = vunpack.c.l.b16 %v2987
      %v3026 = vunpack.c.l.b16 %v2988
      %v3027 = vunpack.c.l.b16 %v2989
      %v3028 = vunpack.c.l.b16 %v2990
      %v3029 = vunpack.c.l.b16 %v2991
      %v3030 = vunpack.c.l.b16 %v2992
      %v3031 = vunpack.c.l.b16 %v2993
      %v3032 = vunpack.c.l.b16 %v2994
      %v3033 = vunpack.c.l.b16 %v2995
      %v3034 = vunpack.c.l.b16 %v2996
      %v3035 = vunpack.c.l.b16 %v2997
      %v3036 = vunpack.c.l.b16 %v2998
      %v3037 = vunpack.c.l.b16 %v2999
      %v3038 = vunpack.c.l.b16 %v3000
      %v3039 = vunpack.c.l.b16 %v3001
      %v3040 = vpack.c.b16 %v3025, %v3024
      %v3041 = vpack.c.b16 %v3027, %v3026
      %v3042 = vpack.c.b16 %v3029, %v3028
      %v3043 = vpack.c.b16 %v3031, %v3030
      %v3044 = vpack.c.b16 %v3033, %v3032
      %v3045 = vpack.c.b16 %v3035, %v3034
      %v3046 = vpack.c.b16 %v3037, %v3036
      %v3047 = vpack.c.b16 %v3039, %v3038
      %3056 = vmatpush.bf16.msra.mxu0 %v3047
      %3057 = vmatpush.bf16.msra.mxu0 %v3046
      %3058 = vmatpush.bf16.msra.mxu0 %v3045
      %3059 = vmatpush.bf16.msra.mxu0 %v3044
      %3060 = vmatpush.bf16.msra.mxu0 %v3043
      %3061 = vmatpush.bf16.msra.mxu0 %v3042
      %3062 = vmatpush.bf16.msra.mxu0 %v3041
      %3063 = vmatpush.bf16.msra.mxu0 %v3040
      %3064 = vmatmul.bf16.gmra.mxu0 %v3004
      %v3065 = vpop.f32.mrf.mxu0
      %v3066 = vadd.f32 %v3006, %v3065
      %v3067 = vpop.f32.mrf.mxu0
      %3068 = vdwg.mxu0
      %3069 = vst [vmem:[#allocation17] sm:$0xff] %v3066
    $region73: #{tpu_custom_call.1} parent=1 // pred_fallthru
      _
    // Predicated region
    $region74: #{tpu_custom_call.1} parent=1 // pred_check
      _
    $region75: #{tpu_custom_call.1} parent=1 // pred_check_branch
      %3071 = sbr.rel (0) target = $region77
    $region76: #{tpu_custom_call.1} parent=1 // pred_region
      %3073 = vsyncadd [#allocation7], 0
      %s3075 = sshll.u32 [#allocation17], 4
      %s3076 = int_to_ptr.vmem [resolvable:$true] %s3075
      %s3077 = sshll.u32 %s9, 4
      %s3078 = int_to_ptr.hbm [resolvable:$true] %s3077
      %3080 = dma.vmem_to_hbm [thread:$0]  %s3076, 128, %s3078, [#allocation7]
    $region77: #{tpu_custom_call.1} parent=1 // pred_fallthru
      _
    // Predicated region
    $region78: #{tpu_custom_call.1} parent=1 // pred_check
      _
    $region79: #{tpu_custom_call.1} parent=1 // pred_check_branch
      %3082 = sbr.rel (0) target = $region81
    $region80: #{tpu_custom_call.1} parent=1 // pred_region
      %3084 = dma.done [#allocation7], 128
    $region81: #{tpu_custom_call.1} parent=1 // pred_fallthru
      _
    %3085 = vsyncpa [#allocation6], 1
    %3086 = vsyncpa [#allocation9], 1
    %3087 = vsyncpa [#allocation12], 1
    %3088 = vsyncpa [#allocation15], 1
    %3089 = vsyncpa [#allocation7], 1

</llo_original>
